<compile_context>
chip_gen: v7x
topology: tpu7x:2x2x1
jax: 0.10.0
libtpu: 0.0.40
codegen_flags: <defaults>
</compile_context>

<pallas_src>
import functools

import jax
import jax.numpy as jnp
import numpy as np
from jax.experimental import pallas as pl
from jax.experimental.pallas import tpu as pltpu


# ----------------------------------------------------------------------------
# Fused Bottleneck kernel (one grid step = TH output rows of one batch image)
# ----------------------------------------------------------------------------

def _bottleneck_kernel(xh_ref, w1_ref, w2_ref, w3_ref,
                       s1_ref, b1_ref, s2_ref, b2_ref, s3_ref, b3_ref,
                       o_ref, out1p_ref, *, H, TH, dilation):
    """
    xh_ref    : (1, H+2d, W, Cin)   input image, zero-padded along H by d (resident per n)
    w1_ref    : (Cin, P)            1x1 conv1 weights
    w2_ref    : (3, 3, P, P)        3x3 conv2 weights (HWIO)
    w3_ref    : (P, 4P)             1x1 conv3 weights
    s*/b*_ref : (1, C)              folded BatchNorm scale / bias (f32)
    o_ref     : (1, TH, W, 4P)      output strip
    out1p_ref : (TH+2d, W+2d, P)    VMEM scratch: conv1 output strip, W-padded
    """
    d = dilation
    THh = TH + 2 * d
    W = o_ref.shape[2]
    planes = w1_ref.shape[1]

    hi = pl.program_id(1)
    row0 = pl.multiple_of(hi * TH, TH)         # start of the halo strip in padded coords

    # ---- conv1 (1x1) + bn1 + relu over the halo strip ------------------------
    x_halo = xh_ref[0, pl.ds(row0, THh), :, :]                       # (THh, W, Cin)
    a1 = jax.lax.dot_general(x_halo, w1_ref[...],
                             dimension_numbers=(((2,), (0,)), ((), ())),
                             preferred_element_type=jnp.float32)
    y1 = jnp.maximum(a1 * s1_ref[0] + b1_ref[0], 0.0)                # (THh, W, P) f32

    # Halo rows that lie outside the image must contribute ZERO to conv2
    # (conv2's zero padding applies to the conv1 OUTPUT, and bn1 bias makes
    #  conv1(0) != 0), so mask them explicitly.
    r = jax.lax.broadcasted_iota(jnp.int32, (THh, 1, 1), 0)
    grow = hi * TH - d + r                                           # global row index
    valid = jnp.logical_and(grow >= 0, grow < H)
    y1 = jnp.where(valid, y1, 0.0)

    # Stage into a W-padded VMEM scratch so conv2's W-halo reads stay in-bounds.
    out1p_ref[...] = jnp.zeros_like(out1p_ref)
    out1p_ref[:, d:d + W, :] = y1.astype(out1p_ref.dtype)

    # ---- conv2 (3x3, stride 1, dilation d, padding d) + bn2 + relu -----------
    acc2 = jnp.zeros((TH, W, planes), jnp.float32)
    for kw in range(3):
        # one sublane-shifted copy per kw (3 relayout copies total, not 9)
        xw = out1p_ref[:, kw * d:kw * d + W, :]                      # (THh, W, P)
        for kh in range(3):
            xs = xw[kh * d:kh * d + TH]                              # row slice: cheap
            acc2 = acc2 + jax.lax.dot_general(
                xs, w2_ref[kh, kw],
                dimension_numbers=(((2,), (0,)), ((), ())),
                preferred_element_type=jnp.float32)
    y2 = jnp.maximum(acc2 * s2_ref[0] + b2_ref[0], 0.0)              # (TH, W, P) f32

    # ---- conv3 (1x1) + bn3 + residual + relu ---------------------------------
    a3 = jax.lax.dot_general(y2.astype(w3_ref.dtype), w3_ref[...],
                             dimension_numbers=(((2,), (0,)), ((), ())),
                             preferred_element_type=jnp.float32)     # (TH, W, 4P)
    res = xh_ref[0, pl.ds(row0 + d, TH), :, :].astype(jnp.float32)   # unpadded rows
    y3 = a3 * s3_ref[0] + b3_ref[0] + res
    o_ref[0] = jnp.maximum(y3, 0.0).astype(o_ref.dtype)


# ----------------------------------------------------------------------------
# Wrapper
# ----------------------------------------------------------------------------

def bottleneck_forward(x_nchw, params, *, block_h=8, compute_dtype=None):
    """Equivalent of Bottleneck.forward with downsample=None, stride=1."""
    N, C, H, W = x_nchw.shape
    planes = params["w1"].shape[1]
    d = int(params["dilation"])
    assert C == 4 * planes, "downsample=None Bottleneck requires inplanes == 4*planes"

    dt = jnp.dtype(compute_dtype) if compute_dtype is not None else jnp.dtype(x_nchw.dtype)

    # pick an H-strip size that divides H exactly (keeps the grid even)
    TH = H
    for cand in (block_h, 32, 16, 8, 4):
        if cand <= H and H % cand == 0:
            TH = cand
            break
    THh = TH + 2 * d
    Hp = H + 2 * d

    # NCHW -> NHWC (channels on the lane axis); fuse the tiny H-only halo pad
    # (2*d rows) into the same layout pass.  W padding happens inside the kernel.
    x = jnp.transpose(x_nchw, (0, 2, 3, 1)).astype(dt)
    xh = jnp.pad(x, ((0, 0), (d, d), (0, 0), (0, 0)))

    w1 = params["w1"].astype(dt)
    w2 = params["w2"].astype(dt)
    w3 = params["w3"].astype(dt)
    s1 = params["s1"].reshape(1, planes).astype(jnp.float32)
    b1 = params["b1"].reshape(1, planes).astype(jnp.float32)
    s2 = params["s2"].reshape(1, planes).astype(jnp.float32)
    b2 = params["b2"].reshape(1, planes).astype(jnp.float32)
    s3 = params["s3"].reshape(1, 4 * planes).astype(jnp.float32)
    b3 = params["b3"].reshape(1, 4 * planes).astype(jnp.float32)

    kernel = functools.partial(_bottleneck_kernel, H=H, TH=TH, dilation=d)

    itemsize = dt.itemsize
    flops = 2 * N * H * W * (C * planes + 9 * planes * planes + planes * 4 * planes)
    bytes_accessed = int(itemsize * (N * H * W * C + N * H * W * 4 * planes
                                     + w1.size + w2.size + w3.size))
    cost = pl.CostEstimate(flops=int(flops), transcendentals=0,
                           bytes_accessed=bytes_accessed)

    vmem_need = itemsize * (
        2 * Hp * W * C                      # double-buffered resident input image
        + 2 * TH * W * 4 * planes           # double-buffered output strip
        + THh * (W + 2 * d) * planes        # conv1 -> conv2 scratch
        + w1.size + w2.size + w3.size)
    # sized against the v7x 64 MiB / TC physical limit
    vmem_limit = int(min(64 * 2**20, max(32 * 2**20, 2 * vmem_need)))

    out = pl.pallas_call(
        kernel,
        out_shape=jax.ShapeDtypeStruct((N, H, W, 4 * planes), x_nchw.dtype),
        grid=(N, H // TH),
        in_specs=[
            # full padded image, resident in VMEM across all H-strips of batch n
            pl.BlockSpec((1, Hp, W, C), lambda n, h: (n, 0, 0, 0)),
            pl.BlockSpec((C, planes), lambda n, h: (0, 0)),
            pl.BlockSpec((3, 3, planes, planes), lambda n, h: (0, 0, 0, 0)),
            pl.BlockSpec((planes, 4 * planes), lambda n, h: (0, 0)),
            pl.BlockSpec((1, planes), lambda n, h: (0, 0)),
            pl.BlockSpec((1, planes), lambda n, h: (0, 0)),
            pl.BlockSpec((1, planes), lambda n, h: (0, 0)),
            pl.BlockSpec((1, planes), lambda n, h: (0, 0)),
            pl.BlockSpec((1, 4 * planes), lambda n, h: (0, 0)),
            pl.BlockSpec((1, 4 * planes), lambda n, h: (0, 0)),
        ],
        out_specs=pl.BlockSpec((1, TH, W, 4 * planes), lambda n, h: (n, h, 0, 0)),
        scratch_shapes=[pltpu.VMEM((THh, W + 2 * d, planes), dt)],
        compiler_params=pltpu.CompilerParams(
            dimension_semantics=("parallel", "parallel"),
            vmem_limit_bytes=vmem_limit),
        cost_estimate=cost,
    )(xh, w1, w2, w3, s1, b1, s2, b2, s3, b3)

    return jnp.transpose(out, (0, 3, 1, 2))          # NHWC -> NCHW


# ----------------------------------------------------------------------------
# Deterministic parameter construction + plain-JAX reference
# ----------------------------------------------------------------------------

def make_params(key, inplanes, planes, dilation=1, eps=1e-5):
    ks = jax.random.split(key, 12)

    def bn_fold(kg, kb, km, kv, c):
        gamma = 1.0 + 0.1 * jax.random.normal(kg, (c,), jnp.float32)
        beta = 0.1 * jax.random.normal(kb, (c,), jnp.float32)
        mean = 0.05 * jax.random.normal(km, (c,), jnp.float32)
        var = 1.0 + 0.1 * jax.random.uniform(kv, (c,), jnp.float32)
        scale = gamma / jnp.sqrt(var + eps)
        bias = beta - mean * scale
        return scale, bias

    w1 = 0.1 * jax.random.normal(ks[0], (inplanes, planes), jnp.float32)      # (Cin, Cout)
    w2 = 0.1 * jax.random.normal(ks[1], (3, 3, planes, planes), jnp.float32)  # HWIO
    w3 = 0.1 * jax.random.normal(ks[2], (planes, planes * 4), jnp.float32)
    s1, b1 = bn_fold(ks[3], ks[4], ks[5], ks[6], planes)
    s2, b2 = bn_fold(ks[7], ks[8], ks[9], ks[10], planes)
    s3, b3 = bn_fold(ks[11], ks[3], ks[7], ks[0], planes * 4)
    return dict(w1=w1, w2=w2, w3=w3, s1=s1, b1=b1, s2=s2, b2=b2,
                s3=s3, b3=b3, dilation=dilation)


def reference_forward(x_nchw, p):
    """Plain-JAX reference (mirrors the PyTorch forward, eval-mode BN)."""
    def conv1x1(x, w_cin_cout):
        w = jnp.transpose(w_cin_cout, (1, 0))[:, :, None, None]     # OIHW
        return jax.lax.conv_general_dilated(
            x, w, (1, 1), [(0, 0), (0, 0)],
            dimension_numbers=("NCHW", "OIHW", "NCHW"))

    def conv3x3(x, w_hwio, dd):
        w = jnp.transpose(w_hwio, (3, 2, 0, 1))                      # OIHW
        return jax.lax.conv_general_dilated(
            x, w, (1, 1), [(dd, dd), (dd, dd)], rhs_dilation=(dd, dd),
            dimension_numbers=("NCHW", "OIHW", "NCHW"))

    def bn(x, s, b):
        return x * s[None, :, None, None] + b[None, :, None, None]

    out = jax.nn.relu(bn(conv1x1(x_nchw, p["w1"]), p["s1"], p["b1"]))
    out = jax.nn.relu(bn(conv3x3(out, p["w2"], p["dilation"]), p["s2"], p["b2"]))
    out = bn(conv1x1(out, p["w3"]), p["s3"], p["b3"])
    return jax.nn.relu(out + x_nchw)


# ----------------------------------------------------------------------------

if __name__ == "__main__":
    planes = 4
    inplanes = planes * 4          # 16, so residual add works with downsample=None
    N, H, W = 2, 16, 16

    key = jax.random.PRNGKey(0)
    kx, kp = jax.random.split(key)
    x = jax.random.normal(kx, (N, inplanes, H, W), jnp.float32)      # NCHW like PyTorch

    for dilation in (1, 2):
        params = make_params(kp, inplanes, planes, dilation=dilation)
        out = jax.block_until_ready(bottleneck_forward(x, params))
        ref = jax.block_until_ready(reference_forward(x, params))
        assert out.shape == (N, inplanes, H, W)
        np.testing.assert_allclose(np.asarray(out), np.asarray(ref),
                                   rtol=1e-4, atol=1e-4)

    print("KERNEL_OK")
</pallas_src>

<mosaic_0001>
module attributes {stable_mosaic.version = 11 : i64} {
  func.func @_bottleneck_kernel(%arg0: i32, %arg1: i32, %arg2: memref<1x18x16x16xf32, #tpu.memory_space<vmem>>, %arg3: memref<16x4xf32, #tpu.memory_space<vmem>>, %arg4: memref<3x3x4x4xf32, #tpu.memory_space<vmem>>, %arg5: memref<4x16xf32, #tpu.memory_space<vmem>>, %arg6: memref<1x4xf32, #tpu.memory_space<vmem>>, %arg7: memref<1x4xf32, #tpu.memory_space<vmem>>, %arg8: memref<1x4xf32, #tpu.memory_space<vmem>>, %arg9: memref<1x4xf32, #tpu.memory_space<vmem>>, %arg10: memref<1x16xf32, #tpu.memory_space<vmem>>, %arg11: memref<1x16xf32, #tpu.memory_space<vmem>>, %arg12: memref<1x8x16x16xf32, #tpu.memory_space<vmem>>, %arg13: memref<10x18x4xf32, #tpu.memory_space<vmem>>) attributes {dimension_semantics = [#tpu.dimension_semantics<parallel>, #tpu.dimension_semantics<parallel>], iteration_bounds = array<i64: 2, 2>, scalar_prefetch = 0 : i64, scratch_operands = 1 : i64, tpu.core_type = #tpu.core_type<tc>, window_params = [{transform_indices = @transform_0, window_bounds = array<i64: 1, 18, 16, 16>}, {pipeline_mode = #tpu.pipeline_mode<synchronous>, transform_indices = @transform_1, window_bounds = array<i64: 16, 4>}, {pipeline_mode = #tpu.pipeline_mode<synchronous>, transform_indices = @transform_2, window_bounds = array<i64: 3, 3, 4, 4>}, {pipeline_mode = #tpu.pipeline_mode<synchronous>, transform_indices = @transform_3, window_bounds = array<i64: 4, 16>}, {pipeline_mode = #tpu.pipeline_mode<synchronous>, transform_indices = @transform_4, window_bounds = array<i64: 1, 4>}, {pipeline_mode = #tpu.pipeline_mode<synchronous>, transform_indices = @transform_5, window_bounds = array<i64: 1, 4>}, {pipeline_mode = #tpu.pipeline_mode<synchronous>, transform_indices = @transform_6, window_bounds = array<i64: 1, 4>}, {pipeline_mode = #tpu.pipeline_mode<synchronous>, transform_indices = @transform_7, window_bounds = array<i64: 1, 4>}, {pipeline_mode = #tpu.pipeline_mode<synchronous>, transform_indices = @transform_8, window_bounds = array<i64: 1, 16>}, {pipeline_mode = #tpu.pipeline_mode<synchronous>, transform_indices = @transform_9, window_bounds = array<i64: 1, 16>}, {transform_indices = @transform_10, window_bounds = array<i64: 1, 8, 16, 16>}]} {
    %c8_i32 = arith.constant 8 : i32
    %0 = arith.muli %arg1, %c8_i32 : i32
    %1 = tpu.assume_multiple %0, 8 : i32
    %c0 = arith.constant 0 : index
    %2 = arith.index_cast %1 : i32 to index
    %c0_0 = arith.constant 0 : index
    %c0_1 = arith.constant 0 : index
    %3 = vector.load %arg2[%c0, %2, %c0_0, %c0_1] : memref<1x18x16x16xf32, #tpu.memory_space<vmem>>, vector<1x10x16x16xf32>
    %4 = vector.shape_cast %3 : vector<1x10x16x16xf32> to vector<10x16x16xf32>
    %c0_2 = arith.constant 0 : index
    %c0_3 = arith.constant 0 : index
    %5 = vector.load %arg3[%c0_2, %c0_3] : memref<16x4xf32, #tpu.memory_space<vmem>>, vector<16x4xf32>
    %cst = arith.constant dense<0.000000e+00> : vector<10x16x4xf32>
    %6 = tpu.matmul %4, %5, %cst {dimension_numbers = #tpu.dot_dimension_numbers<[2], [0], [0, 1], [1], [0, 0, 0, 1, 1, 1], [], []>} : vector<10x16x16xf32>, vector<16x4xf32>, vector<10x16x4xf32> -> vector<10x16x4xf32>
    %c0_4 = arith.constant 0 : index
    %c0_5 = arith.constant 0 : index
    %7 = vector.load %arg6[%c0_4, %c0_5] : memref<1x4xf32, #tpu.memory_space<vmem>>, vector<1x4xf32>
    %8 = vector.shape_cast %7 : vector<1x4xf32> to vector<4xf32>
    %9 = vector.shape_cast %8 : vector<4xf32> to vector<1x1x4xf32>
    %10 = vector.broadcast %9 : vector<1x1x4xf32> to vector<10x16x4xf32>
    %11 = arith.mulf %6, %10 : vector<10x16x4xf32>
    %c0_6 = arith.constant 0 : index
    %c0_7 = arith.constant 0 : index
    %12 = vector.load %arg7[%c0_6, %c0_7] : memref<1x4xf32, #tpu.memory_space<vmem>>, vector<1x4xf32>
    %13 = vector.shape_cast %12 : vector<1x4xf32> to vector<4xf32>
    %14 = vector.shape_cast %13 : vector<4xf32> to vector<1x1x4xf32>
    %15 = vector.broadcast %14 : vector<1x1x4xf32> to vector<10x16x4xf32>
    %16 = arith.addf %11, %15 : vector<10x16x4xf32>
    %cst_8 = arith.constant 0.000000e+00 : f32
    %17 = vector.broadcast %cst_8 : f32 to vector<10x16x4xf32>
    %18 = arith.maximumf %16, %17 : vector<10x16x4xf32>
    %19 = tpu.iota {dimensions = array<i32: 0>} : vector<10x1x1xi32>
    %c8_i32_9 = arith.constant 8 : i32
    %20 = arith.muli %arg1, %c8_i32_9 : i32
    %c1_i32 = arith.constant 1 : i32
    %21 = arith.subi %20, %c1_i32 : i32
    %22 = vector.broadcast %21 : i32 to vector<10x1x1xi32>
    %23 = arith.addi %22, %19 : vector<10x1x1xi32>
    %c0_i32 = arith.constant 0 : i32
    %24 = vector.broadcast %c0_i32 : i32 to vector<10x1x1xi32>
    %25 = arith.cmpi sge, %23, %24 : vector<10x1x1xi32>
    %c16_i32 = arith.constant 16 : i32
    %26 = vector.broadcast %c16_i32 : i32 to vector<10x1x1xi32>
    %27 = arith.cmpi slt, %23, %26 : vector<10x1x1xi32>
    %28 = arith.andi %25, %27 : vector<10x1x1xi1>
    %cst_10 = arith.constant 0.000000e+00 : f32
    %29 = vector.shape_cast %28 : vector<10x1x1xi1> to vector<10x1x1xi1>
    %30 = vector.broadcast %29 : vector<10x1x1xi1> to vector<10x16x4xi1>
    %31 = vector.broadcast %cst_10 : f32 to vector<10x16x4xf32>
    %32 = arith.select %30, %18, %31 : vector<10x16x4xi1>, vector<10x16x4xf32>
    %cst_11 = arith.constant 0.000000e+00 : f32
    %33 = vector.broadcast %cst_11 : f32 to vector<10x18x4xf32>
    %c0_12 = arith.constant 0 : index
    %c0_13 = arith.constant 0 : index
    %c0_14 = arith.constant 0 : index
    %34 = vector.load %arg13[%c0_12, %c0_13, %c0_14] : memref<10x18x4xf32, #tpu.memory_space<vmem>>, vector<10x18x4xf32>
    tpu.vector_store %arg13[%c0_12, %c0_13, %c0_14], %33 {strides = array<i32>} : memref<10x18x4xf32, #tpu.memory_space<vmem>>, vector<10x18x4xf32>,
    %c0_15 = arith.constant 0 : index
    %c1 = arith.constant 1 : index
    %c0_16 = arith.constant 0 : index
    %35 = vector.load %arg13[%c0_15, %c1, %c0_16] : memref<10x18x4xf32, #tpu.memory_space<vmem>>, vector<10x16x4xf32>
    tpu.vector_store %arg13[%c0_15, %c1, %c0_16], %32 {strides = array<i32>} : memref<10x18x4xf32, #tpu.memory_space<vmem>>, vector<10x16x4xf32>,
    %cst_17 = arith.constant 0.000000e+00 : f32
    %36 = vector.broadcast %cst_17 : f32 to vector<8x16x4xf32>
    %c0_18 = arith.constant 0 : index
    %c0_19 = arith.constant 0 : index
    %c0_20 = arith.constant 0 : index
    %37 = vector.load %arg13[%c0_18, %c0_19, %c0_20] : memref<10x18x4xf32, #tpu.memory_space<vmem>>, vector<10x16x4xf32>
    %38 = vector.extract_strided_slice %37 {offsets = [0, 0, 0], sizes = [8, 16, 4], strides = [1, 1, 1]} : vector<10x16x4xf32> to vector<8x16x4xf32>
    %c0_21 = arith.constant 0 : index
    %c0_22 = arith.constant 0 : index
    %c0_23 = arith.constant 0 : index
    %c0_24 = arith.constant 0 : index
    %39 = vector.load %arg4[%c0_21, %c0_22, %c0_23, %c0_24] : memref<3x3x4x4xf32, #tpu.memory_space<vmem>>, vector<1x1x4x4xf32>
    %40 = vector.shape_cast %39 : vector<1x1x4x4xf32> to vector<4x4xf32>
    %cst_25 = arith.constant dense<0.000000e+00> : vector<8x16x4xf32>
    %41 = tpu.matmul %38, %40, %cst_25 {dimension_numbers = #tpu.dot_dimension_numbers<[2], [0], [0, 1], [1], [0, 0, 0, 1, 1, 1], [], []>} : vector<8x16x4xf32>, vector<4x4xf32>, vector<8x16x4xf32> -> vector<8x16x4xf32>
    %42 = arith.addf %36, %41 : vector<8x16x4xf32>
    %43 = vector.extract_strided_slice %37 {offsets = [1, 0, 0], sizes = [8, 16, 4], strides = [1, 1, 1]} : vector<10x16x4xf32> to vector<8x16x4xf32>
    %c1_26 = arith.constant 1 : index
    %c0_27 = arith.constant 0 : index
    %c0_28 = arith.constant 0 : index
    %c0_29 = arith.constant 0 : index
    %44 = vector.load %arg4[%c1_26, %c0_27, %c0_28, %c0_29] : memref<3x3x4x4xf32, #tpu.memory_space<vmem>>, vector<1x1x4x4xf32>
    %45 = vector.shape_cast %44 : vector<1x1x4x4xf32> to vector<4x4xf32>
    %cst_30 = arith.constant dense<0.000000e+00> : vector<8x16x4xf32>
    %46 = tpu.matmul %43, %45, %cst_30 {dimension_numbers = #tpu.dot_dimension_numbers<[2], [0], [0, 1], [1], [0, 0, 0, 1, 1, 1], [], []>} : vector<8x16x4xf32>, vector<4x4xf32>, vector<8x16x4xf32> -> vector<8x16x4xf32>
    %47 = arith.addf %42, %46 : vector<8x16x4xf32>
    %48 = vector.extract_strided_slice %37 {offsets = [2, 0, 0], sizes = [8, 16, 4], strides = [1, 1, 1]} : vector<10x16x4xf32> to vector<8x16x4xf32>
    %c2 = arith.constant 2 : index
    %c0_31 = arith.constant 0 : index
    %c0_32 = arith.constant 0 : index
    %c0_33 = arith.constant 0 : index
    %49 = vector.load %arg4[%c2, %c0_31, %c0_32, %c0_33] : memref<3x3x4x4xf32, #tpu.memory_space<vmem>>, vector<1x1x4x4xf32>
    %50 = vector.shape_cast %49 : vector<1x1x4x4xf32> to vector<4x4xf32>
    %cst_34 = arith.constant dense<0.000000e+00> : vector<8x16x4xf32>
    %51 = tpu.matmul %48, %50, %cst_34 {dimension_numbers = #tpu.dot_dimension_numbers<[2], [0], [0, 1], [1], [0, 0, 0, 1, 1, 1], [], []>} : vector<8x16x4xf32>, vector<4x4xf32>, vector<8x16x4xf32> -> vector<8x16x4xf32>
    %52 = arith.addf %47, %51 : vector<8x16x4xf32>
    %c0_35 = arith.constant 0 : index
    %c1_36 = arith.constant 1 : index
    %c0_37 = arith.constant 0 : index
    %53 = vector.load %arg13[%c0_35, %c1_36, %c0_37] : memref<10x18x4xf32, #tpu.memory_space<vmem>>, vector<10x16x4xf32>
    %54 = vector.extract_strided_slice %53 {offsets = [0, 0, 0], sizes = [8, 16, 4], strides = [1, 1, 1]} : vector<10x16x4xf32> to vector<8x16x4xf32>
    %c0_38 = arith.constant 0 : index
    %c1_39 = arith.constant 1 : index
    %c0_40 = arith.constant 0 : index
    %c0_41 = arith.constant 0 : index
    %55 = vector.load %arg4[%c0_38, %c1_39, %c0_40, %c0_41] : memref<3x3x4x4xf32, #tpu.memory_space<vmem>>, vector<1x1x4x4xf32>
    %56 = vector.shape_cast %55 : vector<1x1x4x4xf32> to vector<4x4xf32>
    %cst_42 = arith.constant dense<0.000000e+00> : vector<8x16x4xf32>
    %57 = tpu.matmul %54, %56, %cst_42 {dimension_numbers = #tpu.dot_dimension_numbers<[2], [0], [0, 1], [1], [0, 0, 0, 1, 1, 1], [], []>} : vector<8x16x4xf32>, vector<4x4xf32>, vector<8x16x4xf32> -> vector<8x16x4xf32>
    %58 = arith.addf %52, %57 : vector<8x16x4xf32>
    %59 = vector.extract_strided_slice %53 {offsets = [1, 0, 0], sizes = [8, 16, 4], strides = [1, 1, 1]} : vector<10x16x4xf32> to vector<8x16x4xf32>
    %c1_43 = arith.constant 1 : index
    %c1_44 = arith.constant 1 : index
    %c0_45 = arith.constant 0 : index
    %c0_46 = arith.constant 0 : index
    %60 = vector.load %arg4[%c1_43, %c1_44, %c0_45, %c0_46] : memref<3x3x4x4xf32, #tpu.memory_space<vmem>>, vector<1x1x4x4xf32>
    %61 = vector.shape_cast %60 : vector<1x1x4x4xf32> to vector<4x4xf32>
    %cst_47 = arith.constant dense<0.000000e+00> : vector<8x16x4xf32>
    %62 = tpu.matmul %59, %61, %cst_47 {dimension_numbers = #tpu.dot_dimension_numbers<[2], [0], [0, 1], [1], [0, 0, 0, 1, 1, 1], [], []>} : vector<8x16x4xf32>, vector<4x4xf32>, vector<8x16x4xf32> -> vector<8x16x4xf32>
    %63 = arith.addf %58, %62 : vector<8x16x4xf32>
    %64 = vector.extract_strided_slice %53 {offsets = [2, 0, 0], sizes = [8, 16, 4], strides = [1, 1, 1]} : vector<10x16x4xf32> to vector<8x16x4xf32>
    %c2_48 = arith.constant 2 : index
    %c1_49 = arith.constant 1 : index
    %c0_50 = arith.constant 0 : index
    %c0_51 = arith.constant 0 : index
    %65 = vector.load %arg4[%c2_48, %c1_49, %c0_50, %c0_51] : memref<3x3x4x4xf32, #tpu.memory_space<vmem>>, vector<1x1x4x4xf32>
    %66 = vector.shape_cast %65 : vector<1x1x4x4xf32> to vector<4x4xf32>
    %cst_52 = arith.constant dense<0.000000e+00> : vector<8x16x4xf32>
    %67 = tpu.matmul %64, %66, %cst_52 {dimension_numbers = #tpu.dot_dimension_numbers<[2], [0], [0, 1], [1], [0, 0, 0, 1, 1, 1], [], []>} : vector<8x16x4xf32>, vector<4x4xf32>, vector<8x16x4xf32> -> vector<8x16x4xf32>
    %68 = arith.addf %63, %67 : vector<8x16x4xf32>
    %c0_53 = arith.constant 0 : index
    %c2_54 = arith.constant 2 : index
    %c0_55 = arith.constant 0 : index
    %69 = vector.load %arg13[%c0_53, %c2_54, %c0_55] : memref<10x18x4xf32, #tpu.memory_space<vmem>>, vector<10x16x4xf32>
    %70 = vector.extract_strided_slice %69 {offsets = [0, 0, 0], sizes = [8, 16, 4], strides = [1, 1, 1]} : vector<10x16x4xf32> to vector<8x16x4xf32>
    %c0_56 = arith.constant 0 : index
    %c2_57 = arith.constant 2 : index
    %c0_58 = arith.constant 0 : index
    %c0_59 = arith.constant 0 : index
    %71 = vector.load %arg4[%c0_56, %c2_57, %c0_58, %c0_59] : memref<3x3x4x4xf32, #tpu.memory_space<vmem>>, vector<1x1x4x4xf32>
    %72 = vector.shape_cast %71 : vector<1x1x4x4xf32> to vector<4x4xf32>
    %cst_60 = arith.constant dense<0.000000e+00> : vector<8x16x4xf32>
    %73 = tpu.matmul %70, %72, %cst_60 {dimension_numbers = #tpu.dot_dimension_numbers<[2], [0], [0, 1], [1], [0, 0, 0, 1, 1, 1], [], []>} : vector<8x16x4xf32>, vector<4x4xf32>, vector<8x16x4xf32> -> vector<8x16x4xf32>
    %74 = arith.addf %68, %73 : vector<8x16x4xf32>
    %75 = vector.extract_strided_slice %69 {offsets = [1, 0, 0], sizes = [8, 16, 4], strides = [1, 1, 1]} : vector<10x16x4xf32> to vector<8x16x4xf32>
    %c1_61 = arith.constant 1 : index
    %c2_62 = arith.constant 2 : index
    %c0_63 = arith.constant 0 : index
    %c0_64 = arith.constant 0 : index
    %76 = vector.load %arg4[%c1_61, %c2_62, %c0_63, %c0_64] : memref<3x3x4x4xf32, #tpu.memory_space<vmem>>, vector<1x1x4x4xf32>
    %77 = vector.shape_cast %76 : vector<1x1x4x4xf32> to vector<4x4xf32>
    %cst_65 = arith.constant dense<0.000000e+00> : vector<8x16x4xf32>
    %78 = tpu.matmul %75, %77, %cst_65 {dimension_numbers = #tpu.dot_dimension_numbers<[2], [0], [0, 1], [1], [0, 0, 0, 1, 1, 1], [], []>} : vector<8x16x4xf32>, vector<4x4xf32>, vector<8x16x4xf32> -> vector<8x16x4xf32>
    %79 = arith.addf %74, %78 : vector<8x16x4xf32>
    %80 = vector.extract_strided_slice %69 {offsets = [2, 0, 0], sizes = [8, 16, 4], strides = [1, 1, 1]} : vector<10x16x4xf32> to vector<8x16x4xf32>
    %c2_66 = arith.constant 2 : index
    %c2_67 = arith.constant 2 : index
    %c0_68 = arith.constant 0 : index
    %c0_69 = arith.constant 0 : index
    %81 = vector.load %arg4[%c2_66, %c2_67, %c0_68, %c0_69] : memref<3x3x4x4xf32, #tpu.memory_space<vmem>>, vector<1x1x4x4xf32>
    %82 = vector.shape_cast %81 : vector<1x1x4x4xf32> to vector<4x4xf32>
    %cst_70 = arith.constant dense<0.000000e+00> : vector<8x16x4xf32>
    %83 = tpu.matmul %80, %82, %cst_70 {dimension_numbers = #tpu.dot_dimension_numbers<[2], [0], [0, 1], [1], [0, 0, 0, 1, 1, 1], [], []>} : vector<8x16x4xf32>, vector<4x4xf32>, vector<8x16x4xf32> -> vector<8x16x4xf32>
    %84 = arith.addf %79, %83 : vector<8x16x4xf32>
    %c0_71 = arith.constant 0 : index
    %c0_72 = arith.constant 0 : index
    %85 = vector.load %arg8[%c0_71, %c0_72] : memref<1x4xf32, #tpu.memory_space<vmem>>, vector<1x4xf32>
    %86 = vector.shape_cast %85 : vector<1x4xf32> to vector<4xf32>
    %87 = vector.shape_cast %86 : vector<4xf32> to vector<1x1x4xf32>
    %88 = vector.broadcast %87 : vector<1x1x4xf32> to vector<8x16x4xf32>
    %89 = arith.mulf %84, %88 : vector<8x16x4xf32>
    %c0_73 = arith.constant 0 : index
    %c0_74 = arith.constant 0 : index
    %90 = vector.load %arg9[%c0_73, %c0_74] : memref<1x4xf32, #tpu.memory_space<vmem>>, vector<1x4xf32>
    %91 = vector.shape_cast %90 : vector<1x4xf32> to vector<4xf32>
    %92 = vector.shape_cast %91 : vector<4xf32> to vector<1x1x4xf32>
    %93 = vector.broadcast %92 : vector<1x1x4xf32> to vector<8x16x4xf32>
    %94 = arith.addf %89, %93 : vector<8x16x4xf32>
    %cst_75 = arith.constant 0.000000e+00 : f32
    %95 = vector.broadcast %cst_75 : f32 to vector<8x16x4xf32>
    %96 = arith.maximumf %94, %95 : vector<8x16x4xf32>
    %c0_76 = arith.constant 0 : index
    %c0_77 = arith.constant 0 : index
    %97 = vector.load %arg5[%c0_76, %c0_77] : memref<4x16xf32, #tpu.memory_space<vmem>>, vector<4x16xf32>
    %cst_78 = arith.constant dense<0.000000e+00> : vector<8x16x16xf32>
    %98 = tpu.matmul %96, %97, %cst_78 {dimension_numbers = #tpu.dot_dimension_numbers<[2], [0], [0, 1], [1], [0, 0, 0, 1, 1, 1], [], []>} : vector<8x16x4xf32>, vector<4x16xf32>, vector<8x16x16xf32> -> vector<8x16x16xf32>
    %c1_i32_79 = arith.constant 1 : i32
    %99 = arith.addi %1, %c1_i32_79 : i32
    %c0_80 = arith.constant 0 : index
    %100 = arith.index_cast %99 : i32 to index
    %c0_81 = arith.constant 0 : index
    %c0_82 = arith.constant 0 : index
    %101 = vector.load %arg2[%c0_80, %100, %c0_81, %c0_82] : memref<1x18x16x16xf32, #tpu.memory_space<vmem>>, vector<1x8x16x16xf32>
    %102 = vector.shape_cast %101 : vector<1x8x16x16xf32> to vector<8x16x16xf32>
    %c0_83 = arith.constant 0 : index
    %c0_84 = arith.constant 0 : index
    %103 = vector.load %arg10[%c0_83, %c0_84] : memref<1x16xf32, #tpu.memory_space<vmem>>, vector<1x16xf32>
    %104 = vector.shape_cast %103 : vector<1x16xf32> to vector<16xf32>
    %105 = vector.shape_cast %104 : vector<16xf32> to vector<1x1x16xf32>
    %106 = vector.broadcast %105 : vector<1x1x16xf32> to vector<8x16x16xf32>
    %107 = arith.mulf %98, %106 : vector<8x16x16xf32>
    %c0_85 = arith.constant 0 : index
    %c0_86 = arith.constant 0 : index
    %108 = vector.load %arg11[%c0_85, %c0_86] : memref<1x16xf32, #tpu.memory_space<vmem>>, vector<1x16xf32>
    %109 = vector.shape_cast %108 : vector<1x16xf32> to vector<16xf32>
    %110 = vector.shape_cast %109 : vector<16xf32> to vector<1x1x16xf32>
    %111 = vector.broadcast %110 : vector<1x1x16xf32> to vector<8x16x16xf32>
    %112 = arith.addf %107, %111 : vector<8x16x16xf32>
    %113 = arith.addf %112, %102 : vector<8x16x16xf32>
    %cst_87 = arith.constant 0.000000e+00 : f32
    %114 = vector.broadcast %cst_87 : f32 to vector<8x16x16xf32>
    %115 = arith.maximumf %113, %114 : vector<8x16x16xf32>
    %c0_88 = arith.constant 0 : index
    %c0_89 = arith.constant 0 : index
    %c0_90 = arith.constant 0 : index
    %c0_91 = arith.constant 0 : index
    %116 = vector.load %arg12[%c0_88, %c0_89, %c0_90, %c0_91] : memref<1x8x16x16xf32, #tpu.memory_space<vmem>>, vector<1x8x16x16xf32>
    %117 = vector.shape_cast %116 : vector<1x8x16x16xf32> to vector<8x16x16xf32>
    %118 = vector.shape_cast %115 : vector<8x16x16xf32> to vector<1x8x16x16xf32>
    tpu.vector_store %arg12[%c0_88, %c0_89, %c0_90, %c0_91], %118 {strides = array<i32>} : memref<1x8x16x16xf32, #tpu.memory_space<vmem>>, vector<1x8x16x16xf32>,
    return
  }
  func.func @transform_0(%arg0: i32, %arg1: i32) -> (i32, i32, i32, i32) {
    %c0_i32 = arith.constant 0 : i32
    %c0_i32_0 = arith.constant 0 : i32
    %c0_i32_1 = arith.constant 0 : i32
    %c0_i32_2 = arith.constant 0 : i32
    return %arg0, %c0_i32, %c0_i32_0, %c0_i32_1 : i32, i32, i32, i32
  }
  func.func @transform_1(%arg0: i32, %arg1: i32) -> (i32, i32) {
    %c0_i32 = arith.constant 0 : i32
    %c0_i32_0 = arith.constant 0 : i32
    %c0_i32_1 = arith.constant 0 : i32
    return %c0_i32, %c0_i32_0 : i32, i32
  }
  func.func @transform_2(%arg0: i32, %arg1: i32) -> (i32, i32, i32, i32) {
    %c0_i32 = arith.constant 0 : i32
    %c0_i32_0 = arith.constant 0 : i32
    %c0_i32_1 = arith.constant 0 : i32
    %c0_i32_2 = arith.constant 0 : i32
    %c0_i32_3 = arith.constant 0 : i32
    return %c0_i32, %c0_i32_0, %c0_i32_1, %c0_i32_2 : i32, i32, i32, i32
  }
  func.func @transform_3(%arg0: i32, %arg1: i32) -> (i32, i32) {
    %c0_i32 = arith.constant 0 : i32
    %c0_i32_0 = arith.constant 0 : i32
    %c0_i32_1 = arith.constant 0 : i32
    return %c0_i32, %c0_i32_0 : i32, i32
  }
  func.func @transform_4(%arg0: i32, %arg1: i32) -> (i32, i32) {
    %c0_i32 = arith.constant 0 : i32
    %c0_i32_0 = arith.constant 0 : i32
    %c0_i32_1 = arith.constant 0 : i32
    return %c0_i32, %c0_i32_0 : i32, i32
  }
  func.func @transform_5(%arg0: i32, %arg1: i32) -> (i32, i32) {
    %c0_i32 = arith.constant 0 : i32
    %c0_i32_0 = arith.constant 0 : i32
    %c0_i32_1 = arith.constant 0 : i32
    return %c0_i32, %c0_i32_0 : i32, i32
  }
  func.func @transform_6(%arg0: i32, %arg1: i32) -> (i32, i32) {
    %c0_i32 = arith.constant 0 : i32
    %c0_i32_0 = arith.constant 0 : i32
    %c0_i32_1 = arith.constant 0 : i32
    return %c0_i32, %c0_i32_0 : i32, i32
  }
  func.func @transform_7(%arg0: i32, %arg1: i32) -> (i32, i32) {
    %c0_i32 = arith.constant 0 : i32
    %c0_i32_0 = arith.constant 0 : i32
    %c0_i32_1 = arith.constant 0 : i32
    return %c0_i32, %c0_i32_0 : i32, i32
  }
  func.func @transform_8(%arg0: i32, %arg1: i32) -> (i32, i32) {
    %c0_i32 = arith.constant 0 : i32
    %c0_i32_0 = arith.constant 0 : i32
    %c0_i32_1 = arith.constant 0 : i32
    return %c0_i32, %c0_i32_0 : i32, i32
  }
  func.func @transform_9(%arg0: i32, %arg1: i32) -> (i32, i32) {
    %c0_i32 = arith.constant 0 : i32
    %c0_i32_0 = arith.constant 0 : i32
    %c0_i32_1 = arith.constant 0 : i32
    return %c0_i32, %c0_i32_0 : i32, i32
  }
  func.func @transform_10(%arg0: i32, %arg1: i32) -> (i32, i32, i32, i32) {
    %c0_i32 = arith.constant 0 : i32
    %c0_i32_0 = arith.constant 0 : i32
    %c0_i32_1 = arith.constant 0 : i32
    return %arg0, %arg1, %c0_i32, %c0_i32_0 : i32, i32, i32, i32
  }
}

</mosaic_0001>

<llo_original>
// kernel: tpu_custom_call.1
$region0: #{tpu_custom_call.1}
  #allocation0 [shape = 'u32[]', space=smem, size = 0x4, offset = 0x4, fixed_abs, tag = 'smem constant byte address 0x4 - core index']
  #allocation1 [shape = 'u32[144,128]{1,0:T(1,128)}', space=vmem, size = 0x12000, scoped, tag = 'internal scratch']
  #allocation2 [shape = 'f32[10,18,4]{2,1,0:T(8,128)}', space=vmem, size = 0x1e000, scoped, tag = 'scratch operand']
  %s0 = inlined_call_operand.vmem [shape: f32[2,18,16,16], index: 0, kind: input, shape index: {}]
  %s1 = inlined_call_operand.vmem [shape: f32[16,4], index: 1, kind: input, shape index: {}]
  %s2 = inlined_call_operand.vmem [shape: f32[3,3,4,4], index: 2, kind: input, shape index: {}]
  %s3 = inlined_call_operand.vmem [shape: f32[4,16], index: 3, kind: input, shape index: {}]
  %s4 = inlined_call_operand.vmem [shape: f32[1,4], index: 4, kind: input, shape index: {}]
  %s5 = inlined_call_operand.vmem [shape: f32[1,4], index: 5, kind: input, shape index: {}]
  %s6 = inlined_call_operand.vmem [shape: f32[1,4], index: 6, kind: input, shape index: {}]
  %s7 = inlined_call_operand.vmem [shape: f32[1,4], index: 7, kind: input, shape index: {}]
  %s8 = inlined_call_operand.vmem [shape: f32[1,16], index: 8, kind: input, shape index: {}]
  %s9 = inlined_call_operand.vmem [shape: f32[1,16], index: 9, kind: input, shape index: {}]
  %s10 = inlined_call_operand.hbm [shape: f32[2,16,16,16], index: 10, kind: output, shape index: {}]
  %s11 = sld [smem:[#allocation0]]
  $region73: #{tpu_custom_call.1} parent=0
    _
  %s13 = ssub.s32 1, %s11
  %s14 = scalar_select 0, %s13, %s11
  $region1: #{tpu_custom_call.1} parent=0
    #allocation3 [shape = 'u8[131072]{0}', space=vmem, size = 0x20000, scoped, tag = 'output window, operand 0']
    #allocation4 [shape = 's32[2]{0}', space=sflag, size = 0x8, scoped, tag = 'scoped memory for tpu_custom_call.1']
    %15 = vsyncpa [#allocation4], 0
    %s16 = scalar_lea.sflag [#allocation4], 1
    %17 = vsyncpa %s16, 0
    loop: start=0, step=1, limit=6
    $region2: #{tpu_custom_call.1} parent=1 // loop_pre_header
      _
    $region3: #{tpu_custom_call.1} parent=1 // loop_header
      %s19 = sphi 0, %s23
      %p20 = scmp.ge.s32.totalorder %s19, 6
      %s26 = sphi 0, %s38
      %s27 = sphi 0, %s34
      %s28 = sphi 0, %s26
      %s29 = sphi 0, %s27
      %s30 = sphi 0, %s28
      %s31 = sphi 0, %s29
      %s41 = sphi 0, %s43
      %s44 = sphi 0, %s41
      %s45 = sphi 0, %s44
      %s61 = sphi 0, %s45
      %s65 = sphi 0, %s65
      %s67 = sphi 0, %s65
      %s68 = sphi 0, %s67
      %s82 = sphi 0, %s68
      %s86 = sphi 0, %s86
      %s88 = sphi 0, %s86
      %s89 = sphi 0, %s88
      %s103 = sphi 0, %s89
      %s107 = sphi 0, %s107
      %s109 = sphi 0, %s107
      %s110 = sphi 0, %s109
      %s124 = sphi 0, %s110
      %s128 = sphi 0, %s128
      %s130 = sphi 0, %s128
      %s131 = sphi 0, %s130
      %s145 = sphi 0, %s131
      %s149 = sphi 0, %s149
      %s151 = sphi 0, %s149
      %s152 = sphi 0, %s151
      %s166 = sphi 0, %s152
      %s170 = sphi 0, %s170
      %s172 = sphi 0, %s170
      %s173 = sphi 0, %s172
      %s187 = sphi 0, %s173
      %s191 = sphi 0, %s191
      %s193 = sphi 0, %s191
      %s194 = sphi 0, %s193
      %s208 = sphi 0, %s194
      %s212 = sphi 0, %s212
      %s214 = sphi 0, %s212
      %s215 = sphi 0, %s214
      %s229 = sphi 0, %s215
      %s233 = sphi 0, %s233
      %s235 = sphi 0, %s233
      %s236 = sphi 0, %s235
      %s250 = sphi 0, %s236
      %s258 = sphi 0, %s260
      %s261 = sphi 0, %s258
      %s262 = sphi 0, %s261
      %s278 = sphi 0, %s262
    $region4: #{tpu_custom_call.1} parent=1 // loop_header_branch
      %22 = sbr.rel (%p20) target = $region8
    $region5: #{tpu_custom_call.1} parent=1 // loop_body
      %s24 = ssub.s32 %s19, 1
      %s25 = ssub.s32 %s19, 2
      %s32 = sadd.s32 1, %s27
      %p33 = scmp.ge.s32.totalorder %s32, 2
      %s34 = scalar_select %p33, 0, %s32
      %s35 = sadd.s32 1, %s26
      %s36 = scalar_select %p33, %s35, %s26
      %p37 = scmp.ge.s32.totalorder %s36, 2
      %s38 = scalar_select %p37, 0, %s36
      %s39 = ssub.s32 %s26, %s38
      %p40 = scmp.eq.s32.totalorder %s39, 0
      %s42 = sadd.s32 %s41, 1
      %s43 = scalar_select %p40, %s41, %s42
      %p46 = pneg %p40
      %p47 = scmp.eq.s32.totalorder %s19, 3
      %p48 = por %p46, %p47
      %p49 = scmp.ne.s32.totalorder %s41, %s44
      %p50 = scmp.eq.s32.totalorder %s19, 0
      %p51 = por %p49, %p50
      %p52 = scmp.ne.s32.totalorder %s41, %s44
      %p53 = scmp.eq.s32.totalorder %s24, 3
      %p54 = por %p52, %p53
      %p55 = scmp.ne.s32.totalorder %s44, %s45
      %p56 = scmp.eq.s32.totalorder %s24, 0
      %p57 = por %p55, %p56
      %p58 = scmp.ne.s32.totalorder %s44, %s45
      %p59 = scmp.eq.s32.totalorder %s25, 3
      %p60 = por %p58, %p59
      %p62 = scmp.ne.s32.totalorder %s45, %s61
      %p63 = scmp.eq.s32.totalorder %s25, 0
      %p64 = por %p62, %p63
      %s66 = sadd.s32 %s65, 1
      %p69 = scmp.eq.s32.totalorder %s19, 3
      %p70 = scmp.ne.s32.totalorder %s65, %s67
      %p71 = scmp.eq.s32.totalorder %s19, 0
      %p72 = por %p70, %p71
      %p73 = scmp.ne.s32.totalorder %s65, %s67
      %p74 = scmp.eq.s32.totalorder %s24, 3
      %p75 = por %p73, %p74
      %p76 = scmp.ne.s32.totalorder %s67, %s68
      %p77 = scmp.eq.s32.totalorder %s24, 0
      %p78 = por %p76, %p77
      %p79 = scmp.ne.s32.totalorder %s67, %s68
      %p80 = scmp.eq.s32.totalorder %s25, 3
      %p81 = por %p79, %p80
      %p83 = scmp.ne.s32.totalorder %s68, %s82
      %p84 = scmp.eq.s32.totalorder %s25, 0
      %p85 = por %p83, %p84
      %s87 = sadd.s32 %s86, 1
      %p90 = scmp.eq.s32.totalorder %s19, 3
      %p91 = scmp.ne.s32.totalorder %s86, %s88
      %p92 = scmp.eq.s32.totalorder %s19, 0
      %p93 = por %p91, %p92
      %p94 = scmp.ne.s32.totalorder %s86, %s88
      %p95 = scmp.eq.s32.totalorder %s24, 3
      %p96 = por %p94, %p95
      %p97 = scmp.ne.s32.totalorder %s88, %s89
      %p98 = scmp.eq.s32.totalorder %s24, 0
      %p99 = por %p97, %p98
      %p100 = scmp.ne.s32.totalorder %s88, %s89
      %p101 = scmp.eq.s32.totalorder %s25, 3
      %p102 = por %p100, %p101
      %p104 = scmp.ne.s32.totalorder %s89, %s103
      %p105 = scmp.eq.s32.totalorder %s25, 0
      %p106 = por %p104, %p105
      %s108 = sadd.s32 %s107, 1
      %p111 = scmp.eq.s32.totalorder %s19, 3
      %p112 = scmp.ne.s32.totalorder %s107, %s109
      %p113 = scmp.eq.s32.totalorder %s19, 0
      %p114 = por %p112, %p113
      %p115 = scmp.ne.s32.totalorder %s107, %s109
      %p116 = scmp.eq.s32.totalorder %s24, 3
      %p117 = por %p115, %p116
      %p118 = scmp.ne.s32.totalorder %s109, %s110
      %p119 = scmp.eq.s32.totalorder %s24, 0
      %p120 = por %p118, %p119
      %p121 = scmp.ne.s32.totalorder %s109, %s110
      %p122 = scmp.eq.s32.totalorder %s25, 3
      %p123 = por %p121, %p122
      %p125 = scmp.ne.s32.totalorder %s110, %s124
      %p126 = scmp.eq.s32.totalorder %s25, 0
      %p127 = por %p125, %p126
      %s129 = sadd.s32 %s128, 1
      %p132 = scmp.eq.s32.totalorder %s19, 3
      %p133 = scmp.ne.s32.totalorder %s128, %s130
      %p134 = scmp.eq.s32.totalorder %s19, 0
      %p135 = por %p133, %p134
      %p136 = scmp.ne.s32.totalorder %s128, %s130
      %p137 = scmp.eq.s32.totalorder %s24, 3
      %p138 = por %p136, %p137
      %p139 = scmp.ne.s32.totalorder %s130, %s131
      %p140 = scmp.eq.s32.totalorder %s24, 0
      %p141 = por %p139, %p140
      %p142 = scmp.ne.s32.totalorder %s130, %s131
      %p143 = scmp.eq.s32.totalorder %s25, 3
      %p144 = por %p142, %p143
      %p146 = scmp.ne.s32.totalorder %s131, %s145
      %p147 = scmp.eq.s32.totalorder %s25, 0
      %p148 = por %p146, %p147
      %s150 = sadd.s32 %s149, 1
      %p153 = scmp.eq.s32.totalorder %s19, 3
      %p154 = scmp.ne.s32.totalorder %s149, %s151
      %p155 = scmp.eq.s32.totalorder %s19, 0
      %p156 = por %p154, %p155
      %p157 = scmp.ne.s32.totalorder %s149, %s151
      %p158 = scmp.eq.s32.totalorder %s24, 3
      %p159 = por %p157, %p158
      %p160 = scmp.ne.s32.totalorder %s151, %s152
      %p161 = scmp.eq.s32.totalorder %s24, 0
      %p162 = por %p160, %p161
      %p163 = scmp.ne.s32.totalorder %s151, %s152
      %p164 = scmp.eq.s32.totalorder %s25, 3
      %p165 = por %p163, %p164
      %p167 = scmp.ne.s32.totalorder %s152, %s166
      %p168 = scmp.eq.s32.totalorder %s25, 0
      %p169 = por %p167, %p168
      %s171 = sadd.s32 %s170, 1
      %p174 = scmp.eq.s32.totalorder %s19, 3
      %p175 = scmp.ne.s32.totalorder %s170, %s172
      %p176 = scmp.eq.s32.totalorder %s19, 0
      %p177 = por %p175, %p176
      %p178 = scmp.ne.s32.totalorder %s170, %s172
      %p179 = scmp.eq.s32.totalorder %s24, 3
      %p180 = por %p178, %p179
      %p181 = scmp.ne.s32.totalorder %s172, %s173
      %p182 = scmp.eq.s32.totalorder %s24, 0
      %p183 = por %p181, %p182
      %p184 = scmp.ne.s32.totalorder %s172, %s173
      %p185 = scmp.eq.s32.totalorder %s25, 3
      %p186 = por %p184, %p185
      %p188 = scmp.ne.s32.totalorder %s173, %s187
      %p189 = scmp.eq.s32.totalorder %s25, 0
      %p190 = por %p188, %p189
      %s192 = sadd.s32 %s191, 1
      %p195 = scmp.eq.s32.totalorder %s19, 3
      %p196 = scmp.ne.s32.totalorder %s191, %s193
      %p197 = scmp.eq.s32.totalorder %s19, 0
      %p198 = por %p196, %p197
      %p199 = scmp.ne.s32.totalorder %s191, %s193
      %p200 = scmp.eq.s32.totalorder %s24, 3
      %p201 = por %p199, %p200
      %p202 = scmp.ne.s32.totalorder %s193, %s194
      %p203 = scmp.eq.s32.totalorder %s24, 0
      %p204 = por %p202, %p203
      %p205 = scmp.ne.s32.totalorder %s193, %s194
      %p206 = scmp.eq.s32.totalorder %s25, 3
      %p207 = por %p205, %p206
      %p209 = scmp.ne.s32.totalorder %s194, %s208
      %p210 = scmp.eq.s32.totalorder %s25, 0
      %p211 = por %p209, %p210
      %s213 = sadd.s32 %s212, 1
      %p216 = scmp.eq.s32.totalorder %s19, 3
      %p217 = scmp.ne.s32.totalorder %s212, %s214
      %p218 = scmp.eq.s32.totalorder %s19, 0
      %p219 = por %p217, %p218
      %p220 = scmp.ne.s32.totalorder %s212, %s214
      %p221 = scmp.eq.s32.totalorder %s24, 3
      %p222 = por %p220, %p221
      %p223 = scmp.ne.s32.totalorder %s214, %s215
      %p224 = scmp.eq.s32.totalorder %s24, 0
      %p225 = por %p223, %p224
      %p226 = scmp.ne.s32.totalorder %s214, %s215
      %p227 = scmp.eq.s32.totalorder %s25, 3
      %p228 = por %p226, %p227
      %p230 = scmp.ne.s32.totalorder %s215, %s229
      %p231 = scmp.eq.s32.totalorder %s25, 0
      %p232 = por %p230, %p231
      %s234 = sadd.s32 %s233, 1
      %p237 = scmp.eq.s32.totalorder %s19, 3
      %p238 = scmp.ne.s32.totalorder %s233, %s235
      %p239 = scmp.eq.s32.totalorder %s19, 0
      %p240 = por %p238, %p239
      %p241 = scmp.ne.s32.totalorder %s233, %s235
      %p242 = scmp.eq.s32.totalorder %s24, 3
      %p243 = por %p241, %p242
      %p244 = scmp.ne.s32.totalorder %s235, %s236
      %p245 = scmp.eq.s32.totalorder %s24, 0
      %p246 = por %p244, %p245
      %p247 = scmp.ne.s32.totalorder %s235, %s236
      %p248 = scmp.eq.s32.totalorder %s25, 3
      %p249 = por %p247, %p248
      %p251 = scmp.ne.s32.totalorder %s236, %s250
      %p252 = scmp.eq.s32.totalorder %s25, 0
      %p253 = por %p251, %p252
      %s254 = ssub.s32 %s26, %s38
      %s255 = ssub.s32 %s27, %s34
      %s256 = sor.u32 %s254, %s255
      %p257 = scmp.eq.s32.totalorder %s256, 0
      %s259 = sadd.s32 %s258, 1
      %s260 = scalar_select %p257, %s258, %s259
      %p263 = pneg %p257
      %p264 = scmp.eq.s32.totalorder %s19, 3
      %p265 = por %p263, %p264
      %p266 = scmp.ne.s32.totalorder %s258, %s261
      %p267 = scmp.eq.s32.totalorder %s19, 0
      %p268 = por %p266, %p267
      %p269 = scmp.ne.s32.totalorder %s258, %s261
      %p270 = scmp.eq.s32.totalorder %s24, 3
      %p271 = por %p269, %p270
      %p272 = scmp.ne.s32.totalorder %s261, %s262
      %p273 = scmp.eq.s32.totalorder %s24, 0
      %p274 = por %p272, %p273
      %p275 = scmp.ne.s32.totalorder %s261, %s262
      %p276 = scmp.eq.s32.totalorder %s25, 3
      %p277 = por %p275, %p276
      %p279 = scmp.ne.s32.totalorder %s262, %s278
      %p280 = scmp.eq.s32.totalorder %s25, 0
      %p281 = por %p279, %p280
      %p282 = scmp.le.s32.totalorder 1, %s19
      %p283 = scmp.lt.s32.totalorder %s19, 5
      %p284 = pnand %p282, %p283
      %p285 = pneg %p284
      // Predicated region
      $region9: #{tpu_custom_call.1} parent=5 // pred_check
        _
      $region10: #{tpu_custom_call.1} parent=5 // pred_check_branch
        %287 = sbr.rel (%p284) target = $region12
      $region11: #{tpu_custom_call.1} parent=5 // pred_region
        %s288 = ssub.s32 %s19, 1
        // Predicated region
        $region13: #{tpu_custom_call.1} parent=11 // pred_check
          %p289 = pneg %p78
        $region14: #{tpu_custom_call.1} parent=11 // pred_check_branch
          %291 = sbr.rel (%p289) target = $region16
        $region15: #{tpu_custom_call.1} parent=11 // pred_region
          _
        $region16: #{tpu_custom_call.1} parent=11 // pred_fallthru
          _
        // Predicated region
        $region17: #{tpu_custom_call.1} parent=11 // pred_check
          %p292 = pneg %p99
        $region18: #{tpu_custom_call.1} parent=11 // pred_check_branch
          %294 = sbr.rel (%p292) target = $region20
        $region19: #{tpu_custom_call.1} parent=11 // pred_region
          _
        $region20: #{tpu_custom_call.1} parent=11 // pred_fallthru
          _
        // Predicated region
        $region21: #{tpu_custom_call.1} parent=11 // pred_check
          %p295 = pneg %p120
        $region22: #{tpu_custom_call.1} parent=11 // pred_check_branch
          %297 = sbr.rel (%p295) target = $region24
        $region23: #{tpu_custom_call.1} parent=11 // pred_region
          _
        $region24: #{tpu_custom_call.1} parent=11 // pred_fallthru
          _
        // Predicated region
        $region25: #{tpu_custom_call.1} parent=11 // pred_check
          %p298 = pneg %p141
        $region26: #{tpu_custom_call.1} parent=11 // pred_check_branch
          %300 = sbr.rel (%p298) target = $region28
        $region27: #{tpu_custom_call.1} parent=11 // pred_region
          _
        $region28: #{tpu_custom_call.1} parent=11 // pred_fallthru
          _
        // Predicated region
        $region29: #{tpu_custom_call.1} parent=11 // pred_check
          %p301 = pneg %p162
        $region30: #{tpu_custom_call.1} parent=11 // pred_check_branch
          %303 = sbr.rel (%p301) target = $region32
        $region31: #{tpu_custom_call.1} parent=11 // pred_region
          _
        $region32: #{tpu_custom_call.1} parent=11 // pred_fallthru
          _
        // Predicated region
        $region33: #{tpu_custom_call.1} parent=11 // pred_check
          %p304 = pneg %p183
        $region34: #{tpu_custom_call.1} parent=11 // pred_check_branch
          %306 = sbr.rel (%p304) target = $region36
        $region35: #{tpu_custom_call.1} parent=11 // pred_region
          _
        $region36: #{tpu_custom_call.1} parent=11 // pred_fallthru
          _
        // Predicated region
        $region37: #{tpu_custom_call.1} parent=11 // pred_check
          %p307 = pneg %p204
        $region38: #{tpu_custom_call.1} parent=11 // pred_check_branch
          %309 = sbr.rel (%p307) target = $region40
        $region39: #{tpu_custom_call.1} parent=11 // pred_region
          _
        $region40: #{tpu_custom_call.1} parent=11 // pred_fallthru
          _
        // Predicated region
        $region41: #{tpu_custom_call.1} parent=11 // pred_check
          %p310 = pneg %p225
        $region42: #{tpu_custom_call.1} parent=11 // pred_check_branch
          %312 = sbr.rel (%p310) target = $region44
        $region43: #{tpu_custom_call.1} parent=11 // pred_region
          _
        $region44: #{tpu_custom_call.1} parent=11 // pred_fallthru
          _
        // Predicated region
        $region45: #{tpu_custom_call.1} parent=11 // pred_check
          %p313 = pneg %p246
        $region46: #{tpu_custom_call.1} parent=11 // pred_check_branch
          %315 = sbr.rel (%p313) target = $region48
        $region47: #{tpu_custom_call.1} parent=11 // pred_region
          _
        $region48: #{tpu_custom_call.1} parent=11 // pred_fallthru
          _
      $region12: #{tpu_custom_call.1} parent=5 // pred_fallthru
        _
      %p316 = scmp.lt.s32.totalorder %s19, 4
      // Predicated region
      $region49: #{tpu_custom_call.1} parent=5 // pred_check
        %p317 = pneg %p316
      $region50: #{tpu_custom_call.1} parent=5 // pred_check_branch
        %319 = sbr.rel (%p317) target = $region52
      $region51: #{tpu_custom_call.1} parent=5 // pred_region
        // Predicated region
        $region53: #{tpu_custom_call.1} parent=51 // pred_check
          %p320 = pneg %p51
        $region54: #{tpu_custom_call.1} parent=51 // pred_check_branch
          %322 = sbr.rel (%p320) target = $region56
        $region55: #{tpu_custom_call.1} parent=51 // pred_region
          %p323 = scmp.lt.s32.totalorder %s26, 1
          %s324 = scalar_select %p323, %s26, 1
          %s325 = smul.addr %s324, 36
          %s326 = smul.addr %s325, 8
          %s327 = scalar_lea.vmem %s0, %s326
        $region56: #{tpu_custom_call.1} parent=51 // pred_fallthru
          _
      $region52: #{tpu_custom_call.1} parent=5 // pred_fallthru
        _
      %p328 = scmp.le.s32.totalorder 1, %s19
      %p329 = scmp.lt.s32.totalorder %s19, 5
      %p330 = pnand %p328, %p329
      %p331 = pneg %p330
      // Predicated region
      $region57: #{tpu_custom_call.1} parent=5 // pred_check
        _
      $region58: #{tpu_custom_call.1} parent=5 // pred_check_branch
        %333 = sbr.rel (%p330) target = $region60
      $region59: #{tpu_custom_call.1} parent=5 // pred_region
        %s334 = ssub.s32 %s19, 1
        %p335 = scmp.lt.s32.totalorder %s28, 1
        %s336 = scalar_select %p335, %s28, 1
        %s337 = smul.addr %s336, 36
        %s338 = smul.addr %s337, 8
        %s339 = scalar_lea.vmem %s0, %s338
        %p340 = pneg %p57
        %p341 = pneg %p54
        %p342 = pneg %p78
        %p343 = pneg %p75
        %p344 = pneg %p99
        %p345 = pneg %p96
        %p346 = pneg %p120
        %p347 = pneg %p117
        %p348 = pneg %p141
        %p349 = pneg %p138
        %p350 = pneg %p162
        %p351 = pneg %p159
        %p352 = pneg %p183
        %p353 = pneg %p180
        %p354 = pneg %p204
        %p355 = pneg %p201
        %p356 = pneg %p225
        %p357 = pneg %p222
        %p358 = pneg %p246
        %p359 = pneg %p243
        %p360 = pneg %p274
        %p361 = pneg %p271
        %s362 = sand.u32 %s261, 1
        %s363 = scalar_lea.sflag [#allocation4], %s362
        %s364 = sand.u32 %s261, 1
        %s365 = smul.addr %s364, 128
        %s366 = scalar_lea.vmem [#allocation3], %s365
        %p367 = scmp.lt.s32.totalorder %s28, 1
        %s368 = scalar_select %p367, %s28, 1
        %s369 = smul.addr %s368, 36
        %s370 = smul.addr %s369, 8
        %s371 = scalar_lea.vmem %s0, %s370
        %s372 = smul.u32 8, %s29
        %s373 = smul.u32 %s29, 8
        %s374 = smul.u32 %s373, 16
        %s375 = scalar_lea.vmem %s371, %s374
        %v376 = vld [vmem:[%s375] sm:$0xff]
        %v377 = vld [vmem:[%s375 + $0x8] sm:$0xff]
        %v378 = vld [vmem:[%s375 + $0x10] sm:$0xff]
        %v379 = vld [vmem:[%s375 + $0x18] sm:$0xff]
        %v380 = vld [vmem:[%s375 + $0x20] sm:$0xff]
        %v381 = vld [vmem:[%s375 + $0x28] sm:$0xff]
        %v382 = vld [vmem:[%s375 + $0x30] sm:$0xff]
        %v383 = vld [vmem:[%s375 + $0x38] sm:$0xff]
        %v384 = vld [vmem:[%s375 + $0x40] sm:$0xff]
        %v385 = vld [vmem:[%s375 + $0x48] sm:$0xff]
        %v386 = vld [vmem:[%s375 + $0x50] sm:$0xff]
        %v387 = vld [vmem:[%s375 + $0x58] sm:$0xff]
        %v388 = vld [vmem:[%s375 + $0x60] sm:$0xff]
        %v389 = vld [vmem:[%s375 + $0x68] sm:$0xff]
        %v390 = vld [vmem:[%s375 + $0x70] sm:$0xff]
        %v391 = vld [vmem:[%s375 + $0x78] sm:$0xff]
        %v392 = vld [vmem:[%s375 + $0x80] sm:$0xff]
        %v393 = vld [vmem:[%s375 + $0x88] sm:$0xff]
        %v394 = vld [vmem:[%s375 + $0x90] sm:$0xff]
        %v395 = vld [vmem:[%s375 + $0x98] sm:$0xff]
        %v396 = vld [vmem:[%s1] sm:$0xff]
        %v397 = vld [vmem:[%s1 + $0x8] sm:$0xff]
        %vm398 = vcmask 130048
        %v400 = vsel %vm398, %v376, 0
        %v403 = vsel %vm398, %v377, 0
        %v406 = vsel %vm398, %v378, 0
        %v409 = vsel %vm398, %v379, 0
        %v412 = vsel %vm398, %v380, 0
        %v415 = vsel %vm398, %v381, 0
        %v418 = vsel %vm398, %v382, 0
        %v421 = vsel %vm398, %v383, 0
        %v424 = vsel %vm398, %v384, 0
        %v427 = vsel %vm398, %v385, 0
        %v430 = vsel %vm398, %v386, 0
        %v433 = vsel %vm398, %v387, 0
        %v436 = vsel %vm398, %v388, 0
        %v439 = vsel %vm398, %v389, 0
        %v442 = vsel %vm398, %v390, 0
        %v445 = vsel %vm398, %v391, 0
        %v448 = vsel %vm398, %v392, 0
        %v451 = vsel %vm398, %v393, 0
        %v454 = vsel %vm398, %v394, 0
        %v457 = vsel %vm398, %v395, 0
        %459 = vmatprep.subr.mxu0 0.0
        %460 = vmatpush1.msra.mxu0 %v396
        %461 = vmatprep.subr.mxu0 0.0
        %462 = vmatpush1.msra.mxu0 %v397
        %463 = vmatprep.subr.mxu0 0.0
        %464 = vmatpush1.msra.mxu0 0.0
        %465 = vmatprep.subr.mxu0 0.0
        %466 = vmatpush1.msra.mxu0 0.0
        %467 = vmatprep.subr.mxu0 0.0
        %468 = vmatpush1.msra.mxu0 0.0
        %469 = vmatprep.subr.mxu0 0.0
        %470 = vmatpush1.msra.mxu0 0.0
        %471 = vmatprep.subr.mxu0 0.0
        %472 = vmatpush1.msra.mxu0 0.0
        %473 = vmatprep.subr.mxu0 0.0
        %474 = vmatpush1.msra.mxu0 0.0
        %475 = vmatprep.subr.mxu0 0.0
        %476 = vmatpush1.msra.mxu0 0.0
        %477 = vmatprep.subr.mxu0 0.0
        %478 = vmatpush1.msra.mxu0 0.0
        %479 = vmatprep.subr.mxu0 0.0
        %480 = vmatpush1.msra.mxu0 0.0
        %481 = vmatprep.subr.mxu0 0.0
        %482 = vmatpush1.msra.mxu0 0.0
        %483 = vmatprep.subr.mxu0 0.0
        %484 = vmatpush1.msra.mxu0 0.0
        %485 = vmatprep.subr.mxu0 0.0
        %486 = vmatpush1.msra.mxu0 0.0
        %487 = vmatprep.subr.mxu0 0.0
        %488 = vmatpush1.msra.mxu0 0.0
        %489 = vmatprep.subr.mxu0 0.0
        %490 = vmatpush1.msra.mxu0 0.0
        %491 = vmatprep.subr.mxu0 0.0
        %492 = vmatpush1.msra.mxu0 0.0
        %493 = vmatprep.subr.mxu0 0.0
        %494 = vmatpush1.msra.mxu0 0.0
        %495 = vmatprep.subr.mxu0 0.0
        %496 = vmatpush1.msra.mxu0 0.0
        %497 = vmatprep.subr.mxu0 0.0
        %498 = vmatpush1.msra.mxu0 0.0
        %499 = vmatprep.subr.mxu0 0.0
        %500 = vmatpush1.msra.mxu0 0.0
        %501 = vmatprep.subr.mxu0 0.0
        %502 = vmatpush1.msra.mxu0 0.0
        %503 = vmatprep.subr.mxu0 0.0
        %504 = vmatpush1.msra.mxu0 0.0
        %505 = vmatprep.subr.mxu0 0.0
        %506 = vmatpush1.msra.mxu0 0.0
        %507 = vmatprep.subr.mxu0 0.0
        %508 = vmatpush1.msra.mxu0 0.0
        %509 = vmatprep.subr.mxu0 0.0
        %510 = vmatpush1.msra.mxu0 0.0
        %511 = vmatprep.subr.mxu0 0.0
        %512 = vmatpush1.msra.mxu0 0.0
        %513 = vmatprep.subr.mxu0 0.0
        %514 = vmatpush1.msra.mxu0 0.0
        %515 = vmatprep.subr.mxu0 0.0
        %516 = vmatpush1.msra.mxu0 0.0
        %517 = vmatprep.subr.mxu0 0.0
        %518 = vmatpush1.msra.mxu0 0.0
        %519 = vmatprep.subr.mxu0 0.0
        %520 = vmatpush1.msra.mxu0 0.0
        %521 = vmatprep.subr.mxu0 0.0
        %522 = vmatpush1.msra.mxu0 0.0
        %523 = vmatprep.mubr.f32.mxu0 0.0
        %524 = vmatmul.mubr.f32.gmra.mrb[0].mxu0 %v400
        %v525 = vpop.f32.mrb[0].mxu0
        %v526 = vadd.f32 0.0, %v525
        %v527 = vpop.f32.mrb[0].mxu0
        %528 = vmatprep.mubr.f32.mxu0 0.0
        %529 = vmatmul.mubr.f32.gmra.mrb[0].mxu0 %v403
        %v530 = vpop.f32.mrb[0].mxu0
        %v531 = vadd.f32 0.0, %v530
        %v532 = vpop.f32.mrb[0].mxu0
        %533 = vmatprep.mubr.f32.mxu0 0.0
        %534 = vmatmul.mubr.f32.gmra.mrb[0].mxu0 %v406
        %v535 = vpop.f32.mrb[0].mxu0
        %v536 = vadd.f32 0.0, %v535
        %v537 = vpop.f32.mrb[0].mxu0
        %538 = vmatprep.mubr.f32.mxu0 0.0
        %539 = vmatmul.mubr.f32.gmra.mrb[0].mxu0 %v409
        %v540 = vpop.f32.mrb[0].mxu0
        %v541 = vadd.f32 0.0, %v540
        %v542 = vpop.f32.mrb[0].mxu0
        %543 = vmatprep.mubr.f32.mxu0 0.0
        %544 = vmatmul.mubr.f32.gmra.mrb[0].mxu0 %v412
        %v545 = vpop.f32.mrb[0].mxu0
        %v546 = vadd.f32 0.0, %v545
        %v547 = vpop.f32.mrb[0].mxu0
        %548 = vmatprep.mubr.f32.mxu0 0.0
        %549 = vmatmul.mubr.f32.gmra.mrb[0].mxu0 %v415
        %v550 = vpop.f32.mrb[0].mxu0
        %v551 = vadd.f32 0.0, %v550
        %v552 = vpop.f32.mrb[0].mxu0
        %553 = vmatprep.mubr.f32.mxu0 0.0
        %554 = vmatmul.mubr.f32.gmra.mrb[0].mxu0 %v418
        %v555 = vpop.f32.mrb[0].mxu0
        %v556 = vadd.f32 0.0, %v555
        %v557 = vpop.f32.mrb[0].mxu0
        %558 = vmatprep.mubr.f32.mxu0 0.0
        %559 = vmatmul.mubr.f32.gmra.mrb[0].mxu0 %v421
        %v560 = vpop.f32.mrb[0].mxu0
        %v561 = vadd.f32 0.0, %v560
        %v562 = vpop.f32.mrb[0].mxu0
        %563 = vmatprep.mubr.f32.mxu0 0.0
        %564 = vmatmul.mubr.f32.gmra.mrb[0].mxu0 %v424
        %v565 = vpop.f32.mrb[0].mxu0
        %v566 = vadd.f32 0.0, %v565
        %v567 = vpop.f32.mrb[0].mxu0
        %568 = vmatprep.mubr.f32.mxu0 0.0
        %569 = vmatmul.mubr.f32.gmra.mrb[0].mxu0 %v427
        %v570 = vpop.f32.mrb[0].mxu0
        %v571 = vadd.f32 0.0, %v570
        %v572 = vpop.f32.mrb[0].mxu0
        %573 = vmatprep.mubr.f32.mxu0 0.0
        %574 = vmatmul.mubr.f32.gmra.mrb[0].mxu0 %v430
        %v575 = vpop.f32.mrb[0].mxu0
        %v576 = vadd.f32 0.0, %v575
        %v577 = vpop.f32.mrb[0].mxu0
        %578 = vmatprep.mubr.f32.mxu0 0.0
        %579 = vmatmul.mubr.f32.gmra.mrb[0].mxu0 %v433
        %v580 = vpop.f32.mrb[0].mxu0
        %v581 = vadd.f32 0.0, %v580
        %v582 = vpop.f32.mrb[0].mxu0
        %583 = vmatprep.mubr.f32.mxu0 0.0
        %584 = vmatmul.mubr.f32.gmra.mrb[0].mxu0 %v436
        %v585 = vpop.f32.mrb[0].mxu0
        %v586 = vadd.f32 0.0, %v585
        %v587 = vpop.f32.mrb[0].mxu0
        %588 = vmatprep.mubr.f32.mxu0 0.0
        %589 = vmatmul.mubr.f32.gmra.mrb[0].mxu0 %v439
        %v590 = vpop.f32.mrb[0].mxu0
        %v591 = vadd.f32 0.0, %v590
        %v592 = vpop.f32.mrb[0].mxu0
        %593 = vmatprep.mubr.f32.mxu0 0.0
        %594 = vmatmul.mubr.f32.gmra.mrb[0].mxu0 %v442
        %v595 = vpop.f32.mrb[0].mxu0
        %v596 = vadd.f32 0.0, %v595
        %v597 = vpop.f32.mrb[0].mxu0
        %598 = vmatprep.mubr.f32.mxu0 0.0
        %599 = vmatmul.mubr.f32.gmra.mrb[0].mxu0 %v445
        %v600 = vpop.f32.mrb[0].mxu0
        %v601 = vadd.f32 0.0, %v600
        %v602 = vpop.f32.mrb[0].mxu0
        %603 = vmatprep.mubr.f32.mxu0 0.0
        %604 = vmatmul.mubr.f32.gmra.mrb[0].mxu0 %v448
        %v605 = vpop.f32.mrb[0].mxu0
        %v606 = vadd.f32 0.0, %v605
        %v607 = vpop.f32.mrb[0].mxu0
        %608 = vmatprep.mubr.f32.mxu0 0.0
        %609 = vmatmul.mubr.f32.gmra.mrb[0].mxu0 %v451
        %v610 = vpop.f32.mrb[0].mxu0
        %v611 = vadd.f32 0.0, %v610
        %v612 = vpop.f32.mrb[0].mxu0
        %613 = vmatprep.mubr.f32.mxu0 0.0
        %614 = vmatmul.mubr.f32.gmra.mrb[0].mxu0 %v454
        %v615 = vpop.f32.mrb[0].mxu0
        %v616 = vadd.f32 0.0, %v615
        %v617 = vpop.f32.mrb[0].mxu0
        %618 = vmatprep.mubr.f32.mxu0 0.0
        %619 = vmatmul.mubr.f32.gmra.mrb[0].mxu0 %v457
        %v620 = vpop.f32.mrb[0].mxu0
        %v621 = vadd.f32 0.0, %v620
        %v622 = vpop.f32.mrb[0].mxu0
        %623 = vdwg.mxu0
        %v624 = vld [vmem:[%s4] sm:$0x1]
        %v626 = vlaneseq
        %v627 = vshrl.u32 %v626, 7
        %v628 = vsub.s32 0, %v627
        %v629 = vrot.slane %v624, %v628
        %v631 = vmul.f32 %v526, %v629
        %v632 = vmul.f32 %v531, %v629
        %v633 = vmul.f32 %v536, %v629
        %v634 = vmul.f32 %v541, %v629
        %v635 = vmul.f32 %v546, %v629
        %v636 = vmul.f32 %v551, %v629
        %v637 = vmul.f32 %v556, %v629
        %v638 = vmul.f32 %v561, %v629
        %v639 = vmul.f32 %v566, %v629
        %v640 = vmul.f32 %v571, %v629
        %v641 = vmul.f32 %v576, %v629
        %v642 = vmul.f32 %v581, %v629
        %v643 = vmul.f32 %v586, %v629
        %v644 = vmul.f32 %v591, %v629
        %v645 = vmul.f32 %v596, %v629
        %v646 = vmul.f32 %v601, %v629
        %v647 = vmul.f32 %v606, %v629
        %v648 = vmul.f32 %v611, %v629
        %v649 = vmul.f32 %v616, %v629
        %v650 = vmul.f32 %v621, %v629
        %v651 = vld [vmem:[%s5] sm:$0x1]
        %v653 = vlaneseq
        %v654 = vshrl.u32 %v653, 7
        %v655 = vsub.s32 0, %v654
        %v656 = vrot.slane %v651, %v655
        %v658 = vadd.f32 %v631, %v656
        %v659 = vadd.f32 %v632, %v656
        %v660 = vadd.f32 %v633, %v656
        %v661 = vadd.f32 %v634, %v656
        %v662 = vadd.f32 %v635, %v656
        %v663 = vadd.f32 %v636, %v656
        %v664 = vadd.f32 %v637, %v656
        %v665 = vadd.f32 %v638, %v656
        %v666 = vadd.f32 %v639, %v656
        %v667 = vadd.f32 %v640, %v656
        %v668 = vadd.f32 %v641, %v656
        %v669 = vadd.f32 %v642, %v656
        %v670 = vadd.f32 %v643, %v656
        %v671 = vadd.f32 %v644, %v656
        %v672 = vadd.f32 %v645, %v656
        %v673 = vadd.f32 %v646, %v656
        %v674 = vadd.f32 %v647, %v656
        %v675 = vadd.f32 %v648, %v656
        %v676 = vadd.f32 %v649, %v656
        %v677 = vadd.f32 %v650, %v656
        %v678 = vmax.f32 %v658, 0.0
        %v679 = vmax.f32 %v659, 0.0
        %v680 = vmax.f32 %v660, 0.0
        %v681 = vmax.f32 %v661, 0.0
        %v682 = vmax.f32 %v662, 0.0
        %v683 = vmax.f32 %v663, 0.0
        %v684 = vmax.f32 %v664, 0.0
        %v685 = vmax.f32 %v665, 0.0
        %v686 = vmax.f32 %v666, 0.0
        %v687 = vmax.f32 %v667, 0.0
        %v688 = vmax.f32 %v668, 0.0
        %v689 = vmax.f32 %v669, 0.0
        %v690 = vmax.f32 %v670, 0.0
        %v691 = vmax.f32 %v671, 0.0
        %v692 = vmax.f32 %v672, 0.0
        %v693 = vmax.f32 %v673, 0.0
        %v694 = vmax.f32 %v674, 0.0
        %v695 = vmax.f32 %v675, 0.0
        %v696 = vmax.f32 %v676, 0.0
        %v697 = vmax.f32 %v677, 0.0
        %s698 = ssub.s32 %s373, 1
        %v699 = vstv %s698
        %v700 = vadd.s32 %v699, 1
        %v701 = vadd.s32 %v699, 2
        %v702 = vadd.s32 %v699, 3
        %v703 = vadd.s32 %v699, 4
        %v704 = vadd.s32 %v699, 5
        %v705 = vadd.s32 %v699, 6
        %v706 = vadd.s32 %v699, 7
        %v707 = vadd.s32 %v699, 8
        %v708 = vadd.s32 %v699, 9
        %vm709 = vcmp.ge.s32.totalorder %v699, 0
        %vm710 = vcmp.ge.s32.totalorder %v700, 0
        %vm711 = vcmp.ge.s32.totalorder %v701, 0
        %vm712 = vcmp.ge.s32.totalorder %v702, 0
        %vm713 = vcmp.ge.s32.totalorder %v703, 0
        %vm714 = vcmp.ge.s32.totalorder %v704, 0
        %vm715 = vcmp.ge.s32.totalorder %v705, 0
        %vm716 = vcmp.ge.s32.totalorder %v706, 0
        %vm717 = vcmp.ge.s32.totalorder %v707, 0
        %vm718 = vcmp.ge.s32.totalorder %v708, 0
        %vm719 = vcmp.lt.s32.totalorder %v699, 16
        %vm720 = vcmp.lt.s32.totalorder %v700, 16
        %vm721 = vcmp.lt.s32.totalorder %v701, 16
        %vm722 = vcmp.lt.s32.totalorder %v702, 16
        %vm723 = vcmp.lt.s32.totalorder %v703, 16
        %vm724 = vcmp.lt.s32.totalorder %v704, 16
        %vm725 = vcmp.lt.s32.totalorder %v705, 16
        %vm726 = vcmp.lt.s32.totalorder %v706, 16
        %vm727 = vcmp.lt.s32.totalorder %v707, 16
        %vm728 = vcmp.lt.s32.totalorder %v708, 16
        %vm729 = vmand %vm709, %vm719
        %vm730 = vmand %vm710, %vm720
        %vm731 = vmand %vm711, %vm721
        %vm732 = vmand %vm712, %vm722
        %vm733 = vmand %vm713, %vm723
        %vm734 = vmand %vm714, %vm724
        %vm735 = vmand %vm715, %vm725
        %vm736 = vmand %vm716, %vm726
        %vm737 = vmand %vm717, %vm727
        %vm738 = vmand %vm718, %vm728
        %v739 = vsel %vm729, 1, 0
        %v740 = vsel %vm730, 1, 0
        %v741 = vsel %vm731, 1, 0
        %v742 = vsel %vm732, 1, 0
        %v743 = vsel %vm733, 1, 0
        %v744 = vsel %vm734, 1, 0
        %v745 = vsel %vm735, 1, 0
        %v746 = vsel %vm736, 1, 0
        %v747 = vsel %vm737, 1, 0
        %v748 = vsel %vm738, 1, 0
        %vm749 = vcmp.eq.s32.totalorder %v739, 1
        %vm750 = vcmp.eq.s32.totalorder %v740, 1
        %vm751 = vcmp.eq.s32.totalorder %v741, 1
        %vm752 = vcmp.eq.s32.totalorder %v742, 1
        %vm753 = vcmp.eq.s32.totalorder %v743, 1
        %vm754 = vcmp.eq.s32.totalorder %v744, 1
        %vm755 = vcmp.eq.s32.totalorder %v745, 1
        %vm756 = vcmp.eq.s32.totalorder %v746, 1
        %vm757 = vcmp.eq.s32.totalorder %v747, 1
        %vm758 = vcmp.eq.s32.totalorder %v748, 1
        %v759 = vsel %vm749, %v678, 0.0
        %v760 = vsel %vm749, %v679, 0.0
        %v761 = vsel %vm750, %v680, 0.0
        %v762 = vsel %vm750, %v681, 0.0
        %v763 = vsel %vm751, %v682, 0.0
        %v764 = vsel %vm751, %v683, 0.0
        %v765 = vsel %vm752, %v684, 0.0
        %v766 = vsel %vm752, %v685, 0.0
        %v767 = vsel %vm753, %v686, 0.0
        %v768 = vsel %vm753, %v687, 0.0
        %v769 = vsel %vm754, %v688, 0.0
        %v770 = vsel %vm754, %v689, 0.0
        %v771 = vsel %vm755, %v690, 0.0
        %v772 = vsel %vm755, %v691, 0.0
        %v773 = vsel %vm756, %v692, 0.0
        %v774 = vsel %vm756, %v693, 0.0
        %v775 = vsel %vm757, %v694, 0.0
        %v776 = vsel %vm757, %v695, 0.0
        %v777 = vsel %vm758, %v696, 0.0
        %v778 = vsel %vm758, %v697, 0.0
        %vm779 = vcmask 31744
        %780 = vst.msk [vmem:[#allocation2] sm:$0xff] %vm779, 0.0
        %781 = vst.msk [vmem:[#allocation2 + $0x8] sm:$0xff] %vm779, 0.0
        %vm782 = vcmask 25600
        %783 = vst.msk [vmem:[#allocation2 + $0x10] sm:$0x3] %vm782, 0.0
        %784 = vst.msk [vmem:[#allocation2 + $0x18] sm:$0xff] %vm779, 0.0
        %785 = vst.msk [vmem:[#allocation2 + $0x20] sm:$0xff] %vm779, 0.0
        %786 = vst.msk [vmem:[#allocation2 + $0x28] sm:$0x3] %vm782, 0.0
        %787 = vst.msk [vmem:[#allocation2 + $0x30] sm:$0xff] %vm779, 0.0
        %788 = vst.msk [vmem:[#allocation2 + $0x38] sm:$0xff] %vm779, 0.0
        %789 = vst.msk [vmem:[#allocation2 + $0x40] sm:$0x3] %vm782, 0.0
        %790 = vst.msk [vmem:[#allocation2 + $0x48] sm:$0xff] %vm779, 0.0
        %791 = vst.msk [vmem:[#allocation2 + $0x50] sm:$0xff] %vm779, 0.0
        %792 = vst.msk [vmem:[#allocation2 + $0x58] sm:$0x3] %vm782, 0.0
        %793 = vst.msk [vmem:[#allocation2 + $0x60] sm:$0xff] %vm779, 0.0
        %794 = vst.msk [vmem:[#allocation2 + $0x68] sm:$0xff] %vm779, 0.0
        %795 = vst.msk [vmem:[#allocation2 + $0x70] sm:$0x3] %vm782, 0.0
        %796 = vst.msk [vmem:[#allocation2 + $0x78] sm:$0xff] %vm779, 0.0
        %797 = vst.msk [vmem:[#allocation2 + $0x80] sm:$0xff] %vm779, 0.0
        %798 = vst.msk [vmem:[#allocation2 + $0x88] sm:$0x3] %vm782, 0.0
        %799 = vst.msk [vmem:[#allocation2 + $0x90] sm:$0xff] %vm779, 0.0
        %800 = vst.msk [vmem:[#allocation2 + $0x98] sm:$0xff] %vm779, 0.0
        %801 = vst.msk [vmem:[#allocation2 + $0xa0] sm:$0x3] %vm782, 0.0
        %802 = vst.msk [vmem:[#allocation2 + $0xa8] sm:$0xff] %vm779, 0.0
        %803 = vst.msk [vmem:[#allocation2 + $0xb0] sm:$0xff] %vm779, 0.0
        %804 = vst.msk [vmem:[#allocation2 + $0xb8] sm:$0x3] %vm782, 0.0
        %805 = vst.msk [vmem:[#allocation2 + $0xc0] sm:$0xff] %vm779, 0.0
        %806 = vst.msk [vmem:[#allocation2 + $0xc8] sm:$0xff] %vm779, 0.0
        %807 = vst.msk [vmem:[#allocation2 + $0xd0] sm:$0x3] %vm782, 0.0
        %808 = vst.msk [vmem:[#allocation2 + $0xd8] sm:$0xff] %vm779, 0.0
        %809 = vst.msk [vmem:[#allocation2 + $0xe0] sm:$0xff] %vm779, 0.0
        %810 = vst.msk [vmem:[#allocation2 + $0xe8] sm:$0x3] %vm782, 0.0
        %811 = vst.msk [vmem:[#allocation2 + $0x1] sm:$0xff] %vm779, %v759
        %812 = vst.msk [vmem:[#allocation2 + $0x9] sm:$0xff] %vm779, %v760
        %813 = vst.msk [vmem:[#allocation2 + $0x19] sm:$0xff] %vm779, %v761
        %814 = vst.msk [vmem:[#allocation2 + $0x21] sm:$0xff] %vm779, %v762
        %815 = vst.msk [vmem:[#allocation2 + $0x31] sm:$0xff] %vm779, %v763
        %816 = vst.msk [vmem:[#allocation2 + $0x39] sm:$0xff] %vm779, %v764
        %817 = vst.msk [vmem:[#allocation2 + $0x49] sm:$0xff] %vm779, %v765
        %818 = vst.msk [vmem:[#allocation2 + $0x51] sm:$0xff] %vm779, %v766
        %819 = vst.msk [vmem:[#allocation2 + $0x61] sm:$0xff] %vm779, %v767
        %820 = vst.msk [vmem:[#allocation2 + $0x69] sm:$0xff] %vm779, %v768
        %821 = vst.msk [vmem:[#allocation2 + $0x79] sm:$0xff] %vm779, %v769
        %822 = vst.msk [vmem:[#allocation2 + $0x81] sm:$0xff] %vm779, %v770
        %823 = vst.msk [vmem:[#allocation2 + $0x91] sm:$0xff] %vm779, %v771
        %824 = vst.msk [vmem:[#allocation2 + $0x99] sm:$0xff] %vm779, %v772
        %825 = vst.msk [vmem:[#allocation2 + $0xa9] sm:$0xff] %vm779, %v773
        %826 = vst.msk [vmem:[#allocation2 + $0xb1] sm:$0xff] %vm779, %v774
        %827 = vst.msk [vmem:[#allocation2 + $0xc1] sm:$0xff] %vm779, %v775
        %828 = vst.msk [vmem:[#allocation2 + $0xc9] sm:$0xff] %vm779, %v776
        %829 = vst.msk [vmem:[#allocation2 + $0xd9] sm:$0xff] %vm779, %v777
        %830 = vst.msk [vmem:[#allocation2 + $0xe1] sm:$0xff] %vm779, %v778
        %v831 = vld [vmem:[#allocation2] sm:$0xff]
        %v832 = vld [vmem:[#allocation2 + $0x8] sm:$0xff]
        %v833 = vld [vmem:[#allocation2 + $0x18] sm:$0xff]
        %v834 = vld [vmem:[#allocation2 + $0x20] sm:$0xff]
        %v835 = vld [vmem:[#allocation2 + $0x30] sm:$0xff]
        %v836 = vld [vmem:[#allocation2 + $0x38] sm:$0xff]
        %v837 = vld [vmem:[#allocation2 + $0x48] sm:$0xff]
        %v838 = vld [vmem:[#allocation2 + $0x50] sm:$0xff]
        %v839 = vld [vmem:[#allocation2 + $0x60] sm:$0xff]
        %v840 = vld [vmem:[#allocation2 + $0x68] sm:$0xff]
        %v841 = vld [vmem:[#allocation2 + $0x78] sm:$0xff]
        %v842 = vld [vmem:[#allocation2 + $0x80] sm:$0xff]
        %v843 = vld [vmem:[#allocation2 + $0x90] sm:$0xff]
        %v844 = vld [vmem:[#allocation2 + $0x98] sm:$0xff]
        %v845 = vld [vmem:[#allocation2 + $0xa8] sm:$0xff]
        %v846 = vld [vmem:[#allocation2 + $0xb0] sm:$0xff]
        %v847 = vld [vmem:[#allocation2 + $0xc0] sm:$0xff]
        %v848 = vld [vmem:[#allocation2 + $0xc8] sm:$0xff]
        %v849 = vld [vmem:[#allocation2 + $0xd8] sm:$0xff]
        %v850 = vld [vmem:[#allocation2 + $0xe0] sm:$0xff]
        %v851 = vld [vmem:[%s2] sm:$0xf]
        %s852 = scalar_lea.vmem %s2, 12
        %v853 = vld [vmem:[%s852] sm:$0xf]
        %v855 = vsel %vm779, %v833, 0
        %v858 = vsel %vm779, %v834, 0
        %v861 = vsel %vm779, %v835, 0
        %v864 = vsel %vm779, %v836, 0
        %v867 = vsel %vm779, %v837, 0
        %v870 = vsel %vm779, %v838, 0
        %v873 = vsel %vm779, %v839, 0
        %v876 = vsel %vm779, %v840, 0
        %v879 = vsel %vm779, %v841, 0
        %v882 = vsel %vm779, %v842, 0
        %v885 = vsel %vm779, %v843, 0
        %v888 = vsel %vm779, %v844, 0
        %v891 = vsel %vm779, %v845, 0
        %v894 = vsel %vm779, %v846, 0
        %v897 = vsel %vm779, %v847, 0
        %v900 = vsel %vm779, %v848, 0
        %vm902 = vcmask 1043456
        %v904 = vsel %vm902, %v853, 0
        %906 = vmatprep.subr.mxu0 0.0
        %907 = vmatpush1.msra.mxu0 %v904
        %908 = vmatprep.subr.mxu0 0.0
        %909 = vmatpush1.msra.mxu0 0.0
        %910 = vmatprep.subr.mxu0 0.0
        %911 = vmatpush1.msra.mxu0 0.0
        %912 = vmatprep.subr.mxu0 0.0
        %913 = vmatpush1.msra.mxu0 0.0
        %914 = vmatprep.subr.mxu0 0.0
        %915 = vmatpush1.msra.mxu0 0.0
        %916 = vmatprep.subr.mxu0 0.0
        %917 = vmatpush1.msra.mxu0 0.0
        %918 = vmatprep.subr.mxu0 0.0
        %919 = vmatpush1.msra.mxu0 0.0
        %920 = vmatprep.subr.mxu0 0.0
        %921 = vmatpush1.msra.mxu0 0.0
        %922 = vmatprep.subr.mxu0 0.0
        %923 = vmatpush1.msra.mxu0 0.0
        %924 = vmatprep.subr.mxu0 0.0
        %925 = vmatpush1.msra.mxu0 0.0
        %926 = vmatprep.subr.mxu0 0.0
        %927 = vmatpush1.msra.mxu0 0.0
        %928 = vmatprep.subr.mxu0 0.0
        %929 = vmatpush1.msra.mxu0 0.0
        %930 = vmatprep.subr.mxu0 0.0
        %931 = vmatpush1.msra.mxu0 0.0
        %932 = vmatprep.subr.mxu0 0.0
        %933 = vmatpush1.msra.mxu0 0.0
        %934 = vmatprep.subr.mxu0 0.0
        %935 = vmatpush1.msra.mxu0 0.0
        %936 = vmatprep.subr.mxu0 0.0
        %937 = vmatpush1.msra.mxu0 0.0
        %938 = vmatprep.subr.mxu0 0.0
        %939 = vmatpush1.msra.mxu0 0.0
        %940 = vmatprep.subr.mxu0 0.0
        %941 = vmatpush1.msra.mxu0 0.0
        %942 = vmatprep.subr.mxu0 0.0
        %943 = vmatpush1.msra.mxu0 0.0
        %944 = vmatprep.subr.mxu0 0.0
        %945 = vmatpush1.msra.mxu0 0.0
        %946 = vmatprep.subr.mxu0 0.0
        %947 = vmatpush1.msra.mxu0 0.0
        %948 = vmatprep.subr.mxu0 0.0
        %949 = vmatpush1.msra.mxu0 0.0
        %950 = vmatprep.subr.mxu0 0.0
        %951 = vmatpush1.msra.mxu0 0.0
        %952 = vmatprep.subr.mxu0 0.0
        %953 = vmatpush1.msra.mxu0 0.0
        %954 = vmatprep.subr.mxu0 0.0
        %955 = vmatpush1.msra.mxu0 0.0
        %956 = vmatprep.subr.mxu0 0.0
        %957 = vmatpush1.msra.mxu0 0.0
        %958 = vmatprep.subr.mxu0 0.0
        %959 = vmatpush1.msra.mxu0 0.0
        %960 = vmatprep.subr.mxu0 0.0
        %961 = vmatpush1.msra.mxu0 0.0
        %962 = vmatprep.subr.mxu0 0.0
        %963 = vmatpush1.msra.mxu0 0.0
        %964 = vmatprep.subr.mxu0 0.0
        %965 = vmatpush1.msra.mxu0 0.0
        %966 = vmatprep.subr.mxu0 0.0
        %967 = vmatpush1.msra.mxu0 0.0
        %968 = vmatprep.subr.mxu0 0.0
        %969 = vmatpush1.msra.mxu0 0.0
        %970 = vmatprep.mubr.f32.mxu0 0.0
        %971 = vmatmul.mubr.f32.gmra.mrb[0].mxu0 %v855
        %v972 = vpop.f32.mrb[0].mxu0
        %v973 = vadd.f32 0.0, %v972
        %v974 = vpop.f32.mrb[0].mxu0
        %975 = vmatprep.mubr.f32.mxu0 0.0
        %976 = vmatmul.mubr.f32.gmra.mrb[0].mxu0 %v858
        %v977 = vpop.f32.mrb[0].mxu0
        %v978 = vadd.f32 0.0, %v977
        %v979 = vpop.f32.mrb[0].mxu0
        %980 = vmatprep.mubr.f32.mxu0 0.0
        %981 = vmatmul.mubr.f32.gmra.mrb[0].mxu0 %v861
        %v982 = vpop.f32.mrb[0].mxu0
        %v983 = vadd.f32 0.0, %v982
        %v984 = vpop.f32.mrb[0].mxu0
        %985 = vmatprep.mubr.f32.mxu0 0.0
        %986 = vmatmul.mubr.f32.gmra.mrb[0].mxu0 %v864
        %v987 = vpop.f32.mrb[0].mxu0
        %v988 = vadd.f32 0.0, %v987
        %v989 = vpop.f32.mrb[0].mxu0
        %990 = vmatprep.mubr.f32.mxu0 0.0
        %991 = vmatmul.mubr.f32.gmra.mrb[0].mxu0 %v867
        %v992 = vpop.f32.mrb[0].mxu0
        %v993 = vadd.f32 0.0, %v992
        %v994 = vpop.f32.mrb[0].mxu0
        %995 = vmatprep.mubr.f32.mxu0 0.0
        %996 = vmatmul.mubr.f32.gmra.mrb[0].mxu0 %v870
        %v997 = vpop.f32.mrb[0].mxu0
        %v998 = vadd.f32 0.0, %v997
        %v999 = vpop.f32.mrb[0].mxu0
        %1000 = vmatprep.mubr.f32.mxu0 0.0
        %1001 = vmatmul.mubr.f32.gmra.mrb[0].mxu0 %v873
        %v1002 = vpop.f32.mrb[0].mxu0
        %v1003 = vadd.f32 0.0, %v1002
        %v1004 = vpop.f32.mrb[0].mxu0
        %1005 = vmatprep.mubr.f32.mxu0 0.0
        %1006 = vmatmul.mubr.f32.gmra.mrb[0].mxu0 %v876
        %v1007 = vpop.f32.mrb[0].mxu0
        %v1008 = vadd.f32 0.0, %v1007
        %v1009 = vpop.f32.mrb[0].mxu0
        %1010 = vmatprep.mubr.f32.mxu0 0.0
        %1011 = vmatmul.mubr.f32.gmra.mrb[0].mxu0 %v879
        %v1012 = vpop.f32.mrb[0].mxu0
        %v1013 = vadd.f32 0.0, %v1012
        %v1014 = vpop.f32.mrb[0].mxu0
        %1015 = vmatprep.mubr.f32.mxu0 0.0
        %1016 = vmatmul.mubr.f32.gmra.mrb[0].mxu0 %v882
        %v1017 = vpop.f32.mrb[0].mxu0
        %v1018 = vadd.f32 0.0, %v1017
        %v1019 = vpop.f32.mrb[0].mxu0
        %1020 = vmatprep.mubr.f32.mxu0 0.0
        %1021 = vmatmul.mubr.f32.gmra.mrb[0].mxu0 %v885
        %v1022 = vpop.f32.mrb[0].mxu0
        %v1023 = vadd.f32 0.0, %v1022
        %v1024 = vpop.f32.mrb[0].mxu0
        %1025 = vmatprep.mubr.f32.mxu0 0.0
        %1026 = vmatmul.mubr.f32.gmra.mrb[0].mxu0 %v888
        %v1027 = vpop.f32.mrb[0].mxu0
        %v1028 = vadd.f32 0.0, %v1027
        %v1029 = vpop.f32.mrb[0].mxu0
        %1030 = vmatprep.mubr.f32.mxu0 0.0
        %1031 = vmatmul.mubr.f32.gmra.mrb[0].mxu0 %v891
        %v1032 = vpop.f32.mrb[0].mxu0
        %v1033 = vadd.f32 0.0, %v1032
        %v1034 = vpop.f32.mrb[0].mxu0
        %1035 = vmatprep.mubr.f32.mxu0 0.0
        %1036 = vmatmul.mubr.f32.gmra.mrb[0].mxu0 %v894
        %v1037 = vpop.f32.mrb[0].mxu0
        %v1038 = vadd.f32 0.0, %v1037
        %v1039 = vpop.f32.mrb[0].mxu0
        %1040 = vmatprep.mubr.f32.mxu0 0.0
        %1041 = vmatmul.mubr.f32.gmra.mrb[0].mxu0 %v897
        %v1042 = vpop.f32.mrb[0].mxu0
        %v1043 = vadd.f32 0.0, %v1042
        %v1044 = vpop.f32.mrb[0].mxu0
        %1045 = vmatprep.mubr.f32.mxu0 0.0
        %1046 = vmatmul.mubr.f32.gmra.mrb[0].mxu0 %v900
        %v1047 = vpop.f32.mrb[0].mxu0
        %v1048 = vadd.f32 0.0, %v1047
        %v1049 = vpop.f32.mrb[0].mxu0
        %1050 = vdwg.mxu0
        %v1052 = vsel %vm779, %v831, 0
        %v1055 = vsel %vm779, %v832, 0
        %v1058 = vsel %vm902, %v851, 0
        %1060 = vmatprep.subr.mxu0 0.0
        %1061 = vmatpush1.msra.mxu0 %v1058
        %1062 = vmatprep.subr.mxu0 0.0
        %1063 = vmatpush1.msra.mxu0 0.0
        %1064 = vmatprep.subr.mxu0 0.0
        %1065 = vmatpush1.msra.mxu0 0.0
        %1066 = vmatprep.subr.mxu0 0.0
        %1067 = vmatpush1.msra.mxu0 0.0
        %1068 = vmatprep.subr.mxu0 0.0
        %1069 = vmatpush1.msra.mxu0 0.0
        %1070 = vmatprep.subr.mxu0 0.0
        %1071 = vmatpush1.msra.mxu0 0.0
        %1072 = vmatprep.subr.mxu0 0.0
        %1073 = vmatpush1.msra.mxu0 0.0
        %1074 = vmatprep.subr.mxu0 0.0
        %1075 = vmatpush1.msra.mxu0 0.0
        %1076 = vmatprep.subr.mxu0 0.0
        %1077 = vmatpush1.msra.mxu0 0.0
        %1078 = vmatprep.subr.mxu0 0.0
        %1079 = vmatpush1.msra.mxu0 0.0
        %1080 = vmatprep.subr.mxu0 0.0
        %1081 = vmatpush1.msra.mxu0 0.0
        %1082 = vmatprep.subr.mxu0 0.0
        %1083 = vmatpush1.msra.mxu0 0.0
        %1084 = vmatprep.subr.mxu0 0.0
        %1085 = vmatpush1.msra.mxu0 0.0
        %1086 = vmatprep.subr.mxu0 0.0
        %1087 = vmatpush1.msra.mxu0 0.0
        %1088 = vmatprep.subr.mxu0 0.0
        %1089 = vmatpush1.msra.mxu0 0.0
        %1090 = vmatprep.subr.mxu0 0.0
        %1091 = vmatpush1.msra.mxu0 0.0
        %1092 = vmatprep.subr.mxu0 0.0
        %1093 = vmatpush1.msra.mxu0 0.0
        %1094 = vmatprep.subr.mxu0 0.0
        %1095 = vmatpush1.msra.mxu0 0.0
        %1096 = vmatprep.subr.mxu0 0.0
        %1097 = vmatpush1.msra.mxu0 0.0
        %1098 = vmatprep.subr.mxu0 0.0
        %1099 = vmatpush1.msra.mxu0 0.0
        %1100 = vmatprep.subr.mxu0 0.0
        %1101 = vmatpush1.msra.mxu0 0.0
        %1102 = vmatprep.subr.mxu0 0.0
        %1103 = vmatpush1.msra.mxu0 0.0
        %1104 = vmatprep.subr.mxu0 0.0
        %1105 = vmatpush1.msra.mxu0 0.0
        %1106 = vmatprep.subr.mxu0 0.0
        %1107 = vmatpush1.msra.mxu0 0.0
        %1108 = vmatprep.subr.mxu0 0.0
        %1109 = vmatpush1.msra.mxu0 0.0
        %1110 = vmatprep.subr.mxu0 0.0
        %1111 = vmatpush1.msra.mxu0 0.0
        %1112 = vmatprep.subr.mxu0 0.0
        %1113 = vmatpush1.msra.mxu0 0.0
        %1114 = vmatprep.subr.mxu0 0.0
        %1115 = vmatpush1.msra.mxu0 0.0
        %1116 = vmatprep.subr.mxu0 0.0
        %1117 = vmatpush1.msra.mxu0 0.0
        %1118 = vmatprep.subr.mxu0 0.0
        %1119 = vmatpush1.msra.mxu0 0.0
        %1120 = vmatprep.subr.mxu0 0.0
        %1121 = vmatpush1.msra.mxu0 0.0
        %1122 = vmatprep.subr.mxu0 0.0
        %1123 = vmatpush1.msra.mxu0 0.0
        %1124 = vmatprep.mubr.f32.mxu0 0.0
        %1125 = vmatmul.mubr.f32.gmra.mrb[0].mxu0 %v1052
        %v1126 = vpop.f32.mrb[0].mxu0
        %v1127 = vadd.f32 %v973, %v1126
        %v1128 = vpop.f32.mrb[0].mxu0
        %1129 = vmatprep.mubr.f32.mxu0 0.0
        %1130 = vmatmul.mubr.f32.gmra.mrb[0].mxu0 %v1055
        %v1131 = vpop.f32.mrb[0].mxu0
        %v1132 = vadd.f32 %v978, %v1131
        %v1133 = vpop.f32.mrb[0].mxu0
        %1134 = vmatprep.mubr.f32.mxu0 0.0
        %1135 = vmatmul.mubr.f32.gmra.mrb[0].mxu0 %v855
        %v1136 = vpop.f32.mrb[0].mxu0
        %v1137 = vadd.f32 %v983, %v1136
        %v1138 = vpop.f32.mrb[0].mxu0
        %1139 = vmatprep.mubr.f32.mxu0 0.0
        %1140 = vmatmul.mubr.f32.gmra.mrb[0].mxu0 %v858
        %v1141 = vpop.f32.mrb[0].mxu0
        %v1142 = vadd.f32 %v988, %v1141
        %v1143 = vpop.f32.mrb[0].mxu0
        %1144 = vmatprep.mubr.f32.mxu0 0.0
        %1145 = vmatmul.mubr.f32.gmra.mrb[0].mxu0 %v861
        %v1146 = vpop.f32.mrb[0].mxu0
        %v1147 = vadd.f32 %v993, %v1146
        %v1148 = vpop.f32.mrb[0].mxu0
        %1149 = vmatprep.mubr.f32.mxu0 0.0
        %1150 = vmatmul.mubr.f32.gmra.mrb[0].mxu0 %v864
        %v1151 = vpop.f32.mrb[0].mxu0
        %v1152 = vadd.f32 %v998, %v1151
        %v1153 = vpop.f32.mrb[0].mxu0
        %1154 = vmatprep.mubr.f32.mxu0 0.0
        %1155 = vmatmul.mubr.f32.gmra.mrb[0].mxu0 %v867
        %v1156 = vpop.f32.mrb[0].mxu0
        %v1157 = vadd.f32 %v1003, %v1156
        %v1158 = vpop.f32.mrb[0].mxu0
        %1159 = vmatprep.mubr.f32.mxu0 0.0
        %1160 = vmatmul.mubr.f32.gmra.mrb[0].mxu0 %v870
        %v1161 = vpop.f32.mrb[0].mxu0
        %v1162 = vadd.f32 %v1008, %v1161
        %v1163 = vpop.f32.mrb[0].mxu0
        %1164 = vmatprep.mubr.f32.mxu0 0.0
        %1165 = vmatmul.mubr.f32.gmra.mrb[0].mxu0 %v873
        %v1166 = vpop.f32.mrb[0].mxu0
        %v1167 = vadd.f32 %v1013, %v1166
        %v1168 = vpop.f32.mrb[0].mxu0
        %1169 = vmatprep.mubr.f32.mxu0 0.0
        %1170 = vmatmul.mubr.f32.gmra.mrb[0].mxu0 %v876
        %v1171 = vpop.f32.mrb[0].mxu0
        %v1172 = vadd.f32 %v1018, %v1171
        %v1173 = vpop.f32.mrb[0].mxu0
        %1174 = vmatprep.mubr.f32.mxu0 0.0
        %1175 = vmatmul.mubr.f32.gmra.mrb[0].mxu0 %v879
        %v1176 = vpop.f32.mrb[0].mxu0
        %v1177 = vadd.f32 %v1023, %v1176
        %v1178 = vpop.f32.mrb[0].mxu0
        %1179 = vmatprep.mubr.f32.mxu0 0.0
        %1180 = vmatmul.mubr.f32.gmra.mrb[0].mxu0 %v882
        %v1181 = vpop.f32.mrb[0].mxu0
        %v1182 = vadd.f32 %v1028, %v1181
        %v1183 = vpop.f32.mrb[0].mxu0
        %1184 = vmatprep.mubr.f32.mxu0 0.0
        %1185 = vmatmul.mubr.f32.gmra.mrb[0].mxu0 %v885
        %v1186 = vpop.f32.mrb[0].mxu0
        %v1187 = vadd.f32 %v1033, %v1186
        %v1188 = vpop.f32.mrb[0].mxu0
        %1189 = vmatprep.mubr.f32.mxu0 0.0
        %1190 = vmatmul.mubr.f32.gmra.mrb[0].mxu0 %v888
        %v1191 = vpop.f32.mrb[0].mxu0
        %v1192 = vadd.f32 %v1038, %v1191
        %v1193 = vpop.f32.mrb[0].mxu0
        %1194 = vmatprep.mubr.f32.mxu0 0.0
        %1195 = vmatmul.mubr.f32.gmra.mrb[0].mxu0 %v891
        %v1196 = vpop.f32.mrb[0].mxu0
        %v1197 = vadd.f32 %v1043, %v1196
        %v1198 = vpop.f32.mrb[0].mxu0
        %1199 = vmatprep.mubr.f32.mxu0 0.0
        %1200 = vmatmul.mubr.f32.gmra.mrb[0].mxu0 %v894
        %v1201 = vpop.f32.mrb[0].mxu0
        %v1202 = vadd.f32 %v1048, %v1201
        %v1203 = vpop.f32.mrb[0].mxu0
        %1204 = vdwg.mxu0
        %s1205 = scalar_lea.vmem %s2, 24
        %v1206 = vld [vmem:[%s1205] sm:$0xf]
        %v1208 = vsel %vm779, %v849, 0
        %v1211 = vsel %vm779, %v850, 0
        %v1214 = vsel %vm902, %v1206, 0
        %1216 = vmatprep.subr.mxu0 0.0
        %1217 = vmatpush1.msra.mxu0 %v1214
        %1218 = vmatprep.subr.mxu0 0.0
        %1219 = vmatpush1.msra.mxu0 0.0
        %1220 = vmatprep.subr.mxu0 0.0
        %1221 = vmatpush1.msra.mxu0 0.0
        %1222 = vmatprep.subr.mxu0 0.0
        %1223 = vmatpush1.msra.mxu0 0.0
        %1224 = vmatprep.subr.mxu0 0.0
        %1225 = vmatpush1.msra.mxu0 0.0
        %1226 = vmatprep.subr.mxu0 0.0
        %1227 = vmatpush1.msra.mxu0 0.0
        %1228 = vmatprep.subr.mxu0 0.0
        %1229 = vmatpush1.msra.mxu0 0.0
        %1230 = vmatprep.subr.mxu0 0.0
        %1231 = vmatpush1.msra.mxu0 0.0
        %1232 = vmatprep.subr.mxu0 0.0
        %1233 = vmatpush1.msra.mxu0 0.0
        %1234 = vmatprep.subr.mxu0 0.0
        %1235 = vmatpush1.msra.mxu0 0.0
        %1236 = vmatprep.subr.mxu0 0.0
        %1237 = vmatpush1.msra.mxu0 0.0
        %1238 = vmatprep.subr.mxu0 0.0
        %1239 = vmatpush1.msra.mxu0 0.0
        %1240 = vmatprep.subr.mxu0 0.0
        %1241 = vmatpush1.msra.mxu0 0.0
        %1242 = vmatprep.subr.mxu0 0.0
        %1243 = vmatpush1.msra.mxu0 0.0
        %1244 = vmatprep.subr.mxu0 0.0
        %1245 = vmatpush1.msra.mxu0 0.0
        %1246 = vmatprep.subr.mxu0 0.0
        %1247 = vmatpush1.msra.mxu0 0.0
        %1248 = vmatprep.subr.mxu0 0.0
        %1249 = vmatpush1.msra.mxu0 0.0
        %1250 = vmatprep.subr.mxu0 0.0
        %1251 = vmatpush1.msra.mxu0 0.0
        %1252 = vmatprep.subr.mxu0 0.0
        %1253 = vmatpush1.msra.mxu0 0.0
        %1254 = vmatprep.subr.mxu0 0.0
        %1255 = vmatpush1.msra.mxu0 0.0
        %1256 = vmatprep.subr.mxu0 0.0
        %1257 = vmatpush1.msra.mxu0 0.0
        %1258 = vmatprep.subr.mxu0 0.0
        %1259 = vmatpush1.msra.mxu0 0.0
        %1260 = vmatprep.subr.mxu0 0.0
        %1261 = vmatpush1.msra.mxu0 0.0
        %1262 = vmatprep.subr.mxu0 0.0
        %1263 = vmatpush1.msra.mxu0 0.0
        %1264 = vmatprep.subr.mxu0 0.0
        %1265 = vmatpush1.msra.mxu0 0.0
        %1266 = vmatprep.subr.mxu0 0.0
        %1267 = vmatpush1.msra.mxu0 0.0
        %1268 = vmatprep.subr.mxu0 0.0
        %1269 = vmatpush1.msra.mxu0 0.0
        %1270 = vmatprep.subr.mxu0 0.0
        %1271 = vmatpush1.msra.mxu0 0.0
        %1272 = vmatprep.subr.mxu0 0.0
        %1273 = vmatpush1.msra.mxu0 0.0
        %1274 = vmatprep.subr.mxu0 0.0
        %1275 = vmatpush1.msra.mxu0 0.0
        %1276 = vmatprep.subr.mxu0 0.0
        %1277 = vmatpush1.msra.mxu0 0.0
        %1278 = vmatprep.subr.mxu0 0.0
        %1279 = vmatpush1.msra.mxu0 0.0
        %1280 = vmatprep.mubr.f32.mxu0 0.0
        %1281 = vmatmul.mubr.f32.gmra.mrb[0].mxu0 %v861
        %v1282 = vpop.f32.mrb[0].mxu0
        %v1283 = vadd.f32 0.0, %v1282
        %v1284 = vpop.f32.mrb[0].mxu0
        %1285 = vmatprep.mubr.f32.mxu0 0.0
        %1286 = vmatmul.mubr.f32.gmra.mrb[0].mxu0 %v864
        %v1287 = vpop.f32.mrb[0].mxu0
        %v1288 = vadd.f32 0.0, %v1287
        %v1289 = vpop.f32.mrb[0].mxu0
        %1290 = vmatprep.mubr.f32.mxu0 0.0
        %1291 = vmatmul.mubr.f32.gmra.mrb[0].mxu0 %v867
        %v1292 = vpop.f32.mrb[0].mxu0
        %v1293 = vadd.f32 0.0, %v1292
        %v1294 = vpop.f32.mrb[0].mxu0
        %1295 = vmatprep.mubr.f32.mxu0 0.0
        %1296 = vmatmul.mubr.f32.gmra.mrb[0].mxu0 %v870
        %v1297 = vpop.f32.mrb[0].mxu0
        %v1298 = vadd.f32 0.0, %v1297
        %v1299 = vpop.f32.mrb[0].mxu0
        %1300 = vmatprep.mubr.f32.mxu0 0.0
        %1301 = vmatmul.mubr.f32.gmra.mrb[0].mxu0 %v873
        %v1302 = vpop.f32.mrb[0].mxu0
        %v1303 = vadd.f32 0.0, %v1302
        %v1304 = vpop.f32.mrb[0].mxu0
        %1305 = vmatprep.mubr.f32.mxu0 0.0
        %1306 = vmatmul.mubr.f32.gmra.mrb[0].mxu0 %v876
        %v1307 = vpop.f32.mrb[0].mxu0
        %v1308 = vadd.f32 0.0, %v1307
        %v1309 = vpop.f32.mrb[0].mxu0
        %1310 = vmatprep.mubr.f32.mxu0 0.0
        %1311 = vmatmul.mubr.f32.gmra.mrb[0].mxu0 %v879
        %v1312 = vpop.f32.mrb[0].mxu0
        %v1313 = vadd.f32 0.0, %v1312
        %v1314 = vpop.f32.mrb[0].mxu0
        %1315 = vmatprep.mubr.f32.mxu0 0.0
        %1316 = vmatmul.mubr.f32.gmra.mrb[0].mxu0 %v882
        %v1317 = vpop.f32.mrb[0].mxu0
        %v1318 = vadd.f32 0.0, %v1317
        %v1319 = vpop.f32.mrb[0].mxu0
        %1320 = vmatprep.mubr.f32.mxu0 0.0
        %1321 = vmatmul.mubr.f32.gmra.mrb[0].mxu0 %v885
        %v1322 = vpop.f32.mrb[0].mxu0
        %v1323 = vadd.f32 0.0, %v1322
        %v1324 = vpop.f32.mrb[0].mxu0
        %1325 = vmatprep.mubr.f32.mxu0 0.0
        %1326 = vmatmul.mubr.f32.gmra.mrb[0].mxu0 %v888
        %v1327 = vpop.f32.mrb[0].mxu0
        %v1328 = vadd.f32 0.0, %v1327
        %v1329 = vpop.f32.mrb[0].mxu0
        %1330 = vmatprep.mubr.f32.mxu0 0.0
        %1331 = vmatmul.mubr.f32.gmra.mrb[0].mxu0 %v891
        %v1332 = vpop.f32.mrb[0].mxu0
        %v1333 = vadd.f32 0.0, %v1332
        %v1334 = vpop.f32.mrb[0].mxu0
        %1335 = vmatprep.mubr.f32.mxu0 0.0
        %1336 = vmatmul.mubr.f32.gmra.mrb[0].mxu0 %v894
        %v1337 = vpop.f32.mrb[0].mxu0
        %v1338 = vadd.f32 0.0, %v1337
        %v1339 = vpop.f32.mrb[0].mxu0
        %1340 = vmatprep.mubr.f32.mxu0 0.0
        %1341 = vmatmul.mubr.f32.gmra.mrb[0].mxu0 %v897
        %v1342 = vpop.f32.mrb[0].mxu0
        %v1343 = vadd.f32 0.0, %v1342
        %v1344 = vpop.f32.mrb[0].mxu0
        %1345 = vmatprep.mubr.f32.mxu0 0.0
        %1346 = vmatmul.mubr.f32.gmra.mrb[0].mxu0 %v900
        %v1347 = vpop.f32.mrb[0].mxu0
        %v1348 = vadd.f32 0.0, %v1347
        %v1349 = vpop.f32.mrb[0].mxu0
        %1350 = vmatprep.mubr.f32.mxu0 0.0
        %1351 = vmatmul.mubr.f32.gmra.mrb[0].mxu0 %v1208
        %v1352 = vpop.f32.mrb[0].mxu0
        %v1353 = vadd.f32 0.0, %v1352
        %v1354 = vpop.f32.mrb[0].mxu0
        %1355 = vmatprep.mubr.f32.mxu0 0.0
        %1356 = vmatmul.mubr.f32.gmra.mrb[0].mxu0 %v1211
        %v1357 = vpop.f32.mrb[0].mxu0
        %v1358 = vadd.f32 0.0, %v1357
        %v1359 = vpop.f32.mrb[0].mxu0
        %1360 = vdwg.mxu0
        %v1361 = vadd.f32 %v1127, %v1283
        %v1362 = vadd.f32 %v1132, %v1288
        %v1363 = vadd.f32 %v1137, %v1293
        %v1364 = vadd.f32 %v1142, %v1298
        %v1365 = vadd.f32 %v1147, %v1303
        %v1366 = vadd.f32 %v1152, %v1308
        %v1367 = vadd.f32 %v1157, %v1313
        %v1368 = vadd.f32 %v1162, %v1318
        %v1369 = vadd.f32 %v1167, %v1323
        %v1370 = vadd.f32 %v1172, %v1328
        %v1371 = vadd.f32 %v1177, %v1333
        %v1372 = vadd.f32 %v1182, %v1338
        %v1373 = vadd.f32 %v1187, %v1343
        %v1374 = vadd.f32 %v1192, %v1348
        %v1375 = vadd.f32 %v1197, %v1353
        %v1376 = vadd.f32 %v1202, %v1358
        %v1377 = vld [vmem:[#allocation2 + $0x1] sm:$0xff]
        %v1378 = vld [vmem:[#allocation2 + $0x9] sm:$0xff]
        %v1379 = vld [vmem:[#allocation2 + $0x19] sm:$0xff]
        %v1380 = vld [vmem:[#allocation2 + $0x21] sm:$0xff]
        %v1381 = vld [vmem:[#allocation2 + $0x31] sm:$0xff]
        %v1382 = vld [vmem:[#allocation2 + $0x39] sm:$0xff]
        %v1383 = vld [vmem:[#allocation2 + $0x49] sm:$0xff]
        %v1384 = vld [vmem:[#allocation2 + $0x51] sm:$0xff]
        %v1385 = vld [vmem:[#allocation2 + $0x61] sm:$0xff]
        %v1386 = vld [vmem:[#allocation2 + $0x69] sm:$0xff]
        %v1387 = vld [vmem:[#allocation2 + $0x79] sm:$0xff]
        %v1388 = vld [vmem:[#allocation2 + $0x81] sm:$0xff]
        %v1389 = vld [vmem:[#allocation2 + $0x91] sm:$0xff]
        %v1390 = vld [vmem:[#allocation2 + $0x99] sm:$0xff]
        %v1391 = vld [vmem:[#allocation2 + $0xa9] sm:$0xff]
        %v1392 = vld [vmem:[#allocation2 + $0xb1] sm:$0xff]
        %v1393 = vld [vmem:[#allocation2 + $0xc1] sm:$0xff]
        %v1394 = vld [vmem:[#allocation2 + $0xc9] sm:$0xff]
        %v1395 = vld [vmem:[#allocation2 + $0xd9] sm:$0xff]
        %v1396 = vld [vmem:[#allocation2 + $0xe1] sm:$0xff]
        %s1397 = scalar_lea.vmem %s2, 4
        %v1398 = vld [vmem:[%s1397] sm:$0xf]
        %v1400 = vsel %vm779, %v1377, 0
        %v1403 = vsel %vm779, %v1378, 0
        %v1406 = vsel %vm779, %v1379, 0
        %v1409 = vsel %vm779, %v1380, 0
        %v1412 = vsel %vm779, %v1381, 0
        %v1415 = vsel %vm779, %v1382, 0
        %v1418 = vsel %vm779, %v1383, 0
        %v1421 = vsel %vm779, %v1384, 0
        %v1424 = vsel %vm779, %v1385, 0
        %v1427 = vsel %vm779, %v1386, 0
        %v1430 = vsel %vm779, %v1387, 0
        %v1433 = vsel %vm779, %v1388, 0
        %v1436 = vsel %vm779, %v1389, 0
        %v1439 = vsel %vm779, %v1390, 0
        %v1442 = vsel %vm779, %v1391, 0
        %v1445 = vsel %vm779, %v1392, 0
        %v1448 = vsel %vm902, %v1398, 0
        %1450 = vmatprep.subr.mxu0 0.0
        %1451 = vmatpush1.msra.mxu0 %v1448
        %1452 = vmatprep.subr.mxu0 0.0
        %1453 = vmatpush1.msra.mxu0 0.0
        %1454 = vmatprep.subr.mxu0 0.0
        %1455 = vmatpush1.msra.mxu0 0.0
        %1456 = vmatprep.subr.mxu0 0.0
        %1457 = vmatpush1.msra.mxu0 0.0
        %1458 = vmatprep.subr.mxu0 0.0
        %1459 = vmatpush1.msra.mxu0 0.0
        %1460 = vmatprep.subr.mxu0 0.0
        %1461 = vmatpush1.msra.mxu0 0.0
        %1462 = vmatprep.subr.mxu0 0.0
        %1463 = vmatpush1.msra.mxu0 0.0
        %1464 = vmatprep.subr.mxu0 0.0
        %1465 = vmatpush1.msra.mxu0 0.0
        %1466 = vmatprep.subr.mxu0 0.0
        %1467 = vmatpush1.msra.mxu0 0.0
        %1468 = vmatprep.subr.mxu0 0.0
        %1469 = vmatpush1.msra.mxu0 0.0
        %1470 = vmatprep.subr.mxu0 0.0
        %1471 = vmatpush1.msra.mxu0 0.0
        %1472 = vmatprep.subr.mxu0 0.0
        %1473 = vmatpush1.msra.mxu0 0.0
        %1474 = vmatprep.subr.mxu0 0.0
        %1475 = vmatpush1.msra.mxu0 0.0
        %1476 = vmatprep.subr.mxu0 0.0
        %1477 = vmatpush1.msra.mxu0 0.0
        %1478 = vmatprep.subr.mxu0 0.0
        %1479 = vmatpush1.msra.mxu0 0.0
        %1480 = vmatprep.subr.mxu0 0.0
        %1481 = vmatpush1.msra.mxu0 0.0
        %1482 = vmatprep.subr.mxu0 0.0
        %1483 = vmatpush1.msra.mxu0 0.0
        %1484 = vmatprep.subr.mxu0 0.0
        %1485 = vmatpush1.msra.mxu0 0.0
        %1486 = vmatprep.subr.mxu0 0.0
        %1487 = vmatpush1.msra.mxu0 0.0
        %1488 = vmatprep.subr.mxu0 0.0
        %1489 = vmatpush1.msra.mxu0 0.0
        %1490 = vmatprep.subr.mxu0 0.0
        %1491 = vmatpush1.msra.mxu0 0.0
        %1492 = vmatprep.subr.mxu0 0.0
        %1493 = vmatpush1.msra.mxu0 0.0
        %1494 = vmatprep.subr.mxu0 0.0
        %1495 = vmatpush1.msra.mxu0 0.0
        %1496 = vmatprep.subr.mxu0 0.0
        %1497 = vmatpush1.msra.mxu0 0.0
        %1498 = vmatprep.subr.mxu0 0.0
        %1499 = vmatpush1.msra.mxu0 0.0
        %1500 = vmatprep.subr.mxu0 0.0
        %1501 = vmatpush1.msra.mxu0 0.0
        %1502 = vmatprep.subr.mxu0 0.0
        %1503 = vmatpush1.msra.mxu0 0.0
        %1504 = vmatprep.subr.mxu0 0.0
        %1505 = vmatpush1.msra.mxu0 0.0
        %1506 = vmatprep.subr.mxu0 0.0
        %1507 = vmatpush1.msra.mxu0 0.0
        %1508 = vmatprep.subr.mxu0 0.0
        %1509 = vmatpush1.msra.mxu0 0.0
        %1510 = vmatprep.subr.mxu0 0.0
        %1511 = vmatpush1.msra.mxu0 0.0
        %1512 = vmatprep.subr.mxu0 0.0
        %1513 = vmatpush1.msra.mxu0 0.0
        %1514 = vmatprep.mubr.f32.mxu0 0.0
        %1515 = vmatmul.mubr.f32.gmra.mrb[0].mxu0 %v1400
        %v1516 = vpop.f32.mrb[0].mxu0
        %v1517 = vadd.f32 0.0, %v1516
        %v1518 = vpop.f32.mrb[0].mxu0
        %1519 = vmatprep.mubr.f32.mxu0 0.0
        %1520 = vmatmul.mubr.f32.gmra.mrb[0].mxu0 %v1403
        %v1521 = vpop.f32.mrb[0].mxu0
        %v1522 = vadd.f32 0.0, %v1521
        %v1523 = vpop.f32.mrb[0].mxu0
        %1524 = vmatprep.mubr.f32.mxu0 0.0
        %1525 = vmatmul.mubr.f32.gmra.mrb[0].mxu0 %v1406
        %v1526 = vpop.f32.mrb[0].mxu0
        %v1527 = vadd.f32 0.0, %v1526
        %v1528 = vpop.f32.mrb[0].mxu0
        %1529 = vmatprep.mubr.f32.mxu0 0.0
        %1530 = vmatmul.mubr.f32.gmra.mrb[0].mxu0 %v1409
        %v1531 = vpop.f32.mrb[0].mxu0
        %v1532 = vadd.f32 0.0, %v1531
        %v1533 = vpop.f32.mrb[0].mxu0
        %1534 = vmatprep.mubr.f32.mxu0 0.0
        %1535 = vmatmul.mubr.f32.gmra.mrb[0].mxu0 %v1412
        %v1536 = vpop.f32.mrb[0].mxu0
        %v1537 = vadd.f32 0.0, %v1536
        %v1538 = vpop.f32.mrb[0].mxu0
        %1539 = vmatprep.mubr.f32.mxu0 0.0
        %1540 = vmatmul.mubr.f32.gmra.mrb[0].mxu0 %v1415
        %v1541 = vpop.f32.mrb[0].mxu0
        %v1542 = vadd.f32 0.0, %v1541
        %v1543 = vpop.f32.mrb[0].mxu0
        %1544 = vmatprep.mubr.f32.mxu0 0.0
        %1545 = vmatmul.mubr.f32.gmra.mrb[0].mxu0 %v1418
        %v1546 = vpop.f32.mrb[0].mxu0
        %v1547 = vadd.f32 0.0, %v1546
        %v1548 = vpop.f32.mrb[0].mxu0
        %1549 = vmatprep.mubr.f32.mxu0 0.0
        %1550 = vmatmul.mubr.f32.gmra.mrb[0].mxu0 %v1421
        %v1551 = vpop.f32.mrb[0].mxu0
        %v1552 = vadd.f32 0.0, %v1551
        %v1553 = vpop.f32.mrb[0].mxu0
        %1554 = vmatprep.mubr.f32.mxu0 0.0
        %1555 = vmatmul.mubr.f32.gmra.mrb[0].mxu0 %v1424
        %v1556 = vpop.f32.mrb[0].mxu0
        %v1557 = vadd.f32 0.0, %v1556
        %v1558 = vpop.f32.mrb[0].mxu0
        %1559 = vmatprep.mubr.f32.mxu0 0.0
        %1560 = vmatmul.mubr.f32.gmra.mrb[0].mxu0 %v1427
        %v1561 = vpop.f32.mrb[0].mxu0
        %v1562 = vadd.f32 0.0, %v1561
        %v1563 = vpop.f32.mrb[0].mxu0
        %1564 = vmatprep.mubr.f32.mxu0 0.0
        %1565 = vmatmul.mubr.f32.gmra.mrb[0].mxu0 %v1430
        %v1566 = vpop.f32.mrb[0].mxu0
        %v1567 = vadd.f32 0.0, %v1566
        %v1568 = vpop.f32.mrb[0].mxu0
        %1569 = vmatprep.mubr.f32.mxu0 0.0
        %1570 = vmatmul.mubr.f32.gmra.mrb[0].mxu0 %v1433
        %v1571 = vpop.f32.mrb[0].mxu0
        %v1572 = vadd.f32 0.0, %v1571
        %v1573 = vpop.f32.mrb[0].mxu0
        %1574 = vmatprep.mubr.f32.mxu0 0.0
        %1575 = vmatmul.mubr.f32.gmra.mrb[0].mxu0 %v1436
        %v1576 = vpop.f32.mrb[0].mxu0
        %v1577 = vadd.f32 0.0, %v1576
        %v1578 = vpop.f32.mrb[0].mxu0
        %1579 = vmatprep.mubr.f32.mxu0 0.0
        %1580 = vmatmul.mubr.f32.gmra.mrb[0].mxu0 %v1439
        %v1581 = vpop.f32.mrb[0].mxu0
        %v1582 = vadd.f32 0.0, %v1581
        %v1583 = vpop.f32.mrb[0].mxu0
        %1584 = vmatprep.mubr.f32.mxu0 0.0
        %1585 = vmatmul.mubr.f32.gmra.mrb[0].mxu0 %v1442
        %v1586 = vpop.f32.mrb[0].mxu0
        %v1587 = vadd.f32 0.0, %v1586
        %v1588 = vpop.f32.mrb[0].mxu0
        %1589 = vmatprep.mubr.f32.mxu0 0.0
        %1590 = vmatmul.mubr.f32.gmra.mrb[0].mxu0 %v1445
        %v1591 = vpop.f32.mrb[0].mxu0
        %v1592 = vadd.f32 0.0, %v1591
        %v1593 = vpop.f32.mrb[0].mxu0
        %1594 = vdwg.mxu0
        %v1595 = vadd.f32 %v1361, %v1517
        %v1596 = vadd.f32 %v1362, %v1522
        %v1597 = vadd.f32 %v1363, %v1527
        %v1598 = vadd.f32 %v1364, %v1532
        %v1599 = vadd.f32 %v1365, %v1537
        %v1600 = vadd.f32 %v1366, %v1542
        %v1601 = vadd.f32 %v1367, %v1547
        %v1602 = vadd.f32 %v1368, %v1552
        %v1603 = vadd.f32 %v1369, %v1557
        %v1604 = vadd.f32 %v1370, %v1562
        %v1605 = vadd.f32 %v1371, %v1567
        %v1606 = vadd.f32 %v1372, %v1572
        %v1607 = vadd.f32 %v1373, %v1577
        %v1608 = vadd.f32 %v1374, %v1582
        %v1609 = vadd.f32 %v1375, %v1587
        %v1610 = vadd.f32 %v1376, %v1592
        %s1611 = scalar_lea.vmem %s2, 16
        %v1612 = vld [vmem:[%s1611] sm:$0xf]
        %v1614 = vsel %vm779, %v1393, 0
        %v1617 = vsel %vm779, %v1394, 0
        %v1620 = vsel %vm902, %v1612, 0
        %1622 = vmatprep.subr.mxu0 0.0
        %1623 = vmatpush1.msra.mxu0 %v1620
        %1624 = vmatprep.subr.mxu0 0.0
        %1625 = vmatpush1.msra.mxu0 0.0
        %1626 = vmatprep.subr.mxu0 0.0
        %1627 = vmatpush1.msra.mxu0 0.0
        %1628 = vmatprep.subr.mxu0 0.0
        %1629 = vmatpush1.msra.mxu0 0.0
        %1630 = vmatprep.subr.mxu0 0.0
        %1631 = vmatpush1.msra.mxu0 0.0
        %1632 = vmatprep.subr.mxu0 0.0
        %1633 = vmatpush1.msra.mxu0 0.0
        %1634 = vmatprep.subr.mxu0 0.0
        %1635 = vmatpush1.msra.mxu0 0.0
        %1636 = vmatprep.subr.mxu0 0.0
        %1637 = vmatpush1.msra.mxu0 0.0
        %1638 = vmatprep.subr.mxu0 0.0
        %1639 = vmatpush1.msra.mxu0 0.0
        %1640 = vmatprep.subr.mxu0 0.0
        %1641 = vmatpush1.msra.mxu0 0.0
        %1642 = vmatprep.subr.mxu0 0.0
        %1643 = vmatpush1.msra.mxu0 0.0
        %1644 = vmatprep.subr.mxu0 0.0
        %1645 = vmatpush1.msra.mxu0 0.0
        %1646 = vmatprep.subr.mxu0 0.0
        %1647 = vmatpush1.msra.mxu0 0.0
        %1648 = vmatprep.subr.mxu0 0.0
        %1649 = vmatpush1.msra.mxu0 0.0
        %1650 = vmatprep.subr.mxu0 0.0
        %1651 = vmatpush1.msra.mxu0 0.0
        %1652 = vmatprep.subr.mxu0 0.0
        %1653 = vmatpush1.msra.mxu0 0.0
        %1654 = vmatprep.subr.mxu0 0.0
        %1655 = vmatpush1.msra.mxu0 0.0
        %1656 = vmatprep.subr.mxu0 0.0
        %1657 = vmatpush1.msra.mxu0 0.0
        %1658 = vmatprep.subr.mxu0 0.0
        %1659 = vmatpush1.msra.mxu0 0.0
        %1660 = vmatprep.subr.mxu0 0.0
        %1661 = vmatpush1.msra.mxu0 0.0
        %1662 = vmatprep.subr.mxu0 0.0
        %1663 = vmatpush1.msra.mxu0 0.0
        %1664 = vmatprep.subr.mxu0 0.0
        %1665 = vmatpush1.msra.mxu0 0.0
        %1666 = vmatprep.subr.mxu0 0.0
        %1667 = vmatpush1.msra.mxu0 0.0
        %1668 = vmatprep.subr.mxu0 0.0
        %1669 = vmatpush1.msra.mxu0 0.0
        %1670 = vmatprep.subr.mxu0 0.0
        %1671 = vmatpush1.msra.mxu0 0.0
        %1672 = vmatprep.subr.mxu0 0.0
        %1673 = vmatpush1.msra.mxu0 0.0
        %1674 = vmatprep.subr.mxu0 0.0
        %1675 = vmatpush1.msra.mxu0 0.0
        %1676 = vmatprep.subr.mxu0 0.0
        %1677 = vmatpush1.msra.mxu0 0.0
        %1678 = vmatprep.subr.mxu0 0.0
        %1679 = vmatpush1.msra.mxu0 0.0
        %1680 = vmatprep.subr.mxu0 0.0
        %1681 = vmatpush1.msra.mxu0 0.0
        %1682 = vmatprep.subr.mxu0 0.0
        %1683 = vmatpush1.msra.mxu0 0.0
        %1684 = vmatprep.subr.mxu0 0.0
        %1685 = vmatpush1.msra.mxu0 0.0
        %1686 = vmatprep.mubr.f32.mxu0 0.0
        %1687 = vmatmul.mubr.f32.gmra.mrb[0].mxu0 %v1406
        %v1688 = vpop.f32.mrb[0].mxu0
        %v1689 = vadd.f32 0.0, %v1688
        %v1690 = vpop.f32.mrb[0].mxu0
        %1691 = vmatprep.mubr.f32.mxu0 0.0
        %1692 = vmatmul.mubr.f32.gmra.mrb[0].mxu0 %v1409
        %v1693 = vpop.f32.mrb[0].mxu0
        %v1694 = vadd.f32 0.0, %v1693
        %v1695 = vpop.f32.mrb[0].mxu0
        %1696 = vmatprep.mubr.f32.mxu0 0.0
        %1697 = vmatmul.mubr.f32.gmra.mrb[0].mxu0 %v1412
        %v1698 = vpop.f32.mrb[0].mxu0
        %v1699 = vadd.f32 0.0, %v1698
        %v1700 = vpop.f32.mrb[0].mxu0
        %1701 = vmatprep.mubr.f32.mxu0 0.0
        %1702 = vmatmul.mubr.f32.gmra.mrb[0].mxu0 %v1415
        %v1703 = vpop.f32.mrb[0].mxu0
        %v1704 = vadd.f32 0.0, %v1703
        %v1705 = vpop.f32.mrb[0].mxu0
        %1706 = vmatprep.mubr.f32.mxu0 0.0
        %1707 = vmatmul.mubr.f32.gmra.mrb[0].mxu0 %v1418
        %v1708 = vpop.f32.mrb[0].mxu0
        %v1709 = vadd.f32 0.0, %v1708
        %v1710 = vpop.f32.mrb[0].mxu0
        %1711 = vmatprep.mubr.f32.mxu0 0.0
        %1712 = vmatmul.mubr.f32.gmra.mrb[0].mxu0 %v1421
        %v1713 = vpop.f32.mrb[0].mxu0
        %v1714 = vadd.f32 0.0, %v1713
        %v1715 = vpop.f32.mrb[0].mxu0
        %1716 = vmatprep.mubr.f32.mxu0 0.0
        %1717 = vmatmul.mubr.f32.gmra.mrb[0].mxu0 %v1424
        %v1718 = vpop.f32.mrb[0].mxu0
        %v1719 = vadd.f32 0.0, %v1718
        %v1720 = vpop.f32.mrb[0].mxu0
        %1721 = vmatprep.mubr.f32.mxu0 0.0
        %1722 = vmatmul.mubr.f32.gmra.mrb[0].mxu0 %v1427
        %v1723 = vpop.f32.mrb[0].mxu0
        %v1724 = vadd.f32 0.0, %v1723
        %v1725 = vpop.f32.mrb[0].mxu0
        %1726 = vmatprep.mubr.f32.mxu0 0.0
        %1727 = vmatmul.mubr.f32.gmra.mrb[0].mxu0 %v1430
        %v1728 = vpop.f32.mrb[0].mxu0
        %v1729 = vadd.f32 0.0, %v1728
        %v1730 = vpop.f32.mrb[0].mxu0
        %1731 = vmatprep.mubr.f32.mxu0 0.0
        %1732 = vmatmul.mubr.f32.gmra.mrb[0].mxu0 %v1433
        %v1733 = vpop.f32.mrb[0].mxu0
        %v1734 = vadd.f32 0.0, %v1733
        %v1735 = vpop.f32.mrb[0].mxu0
        %1736 = vmatprep.mubr.f32.mxu0 0.0
        %1737 = vmatmul.mubr.f32.gmra.mrb[0].mxu0 %v1436
        %v1738 = vpop.f32.mrb[0].mxu0
        %v1739 = vadd.f32 0.0, %v1738
        %v1740 = vpop.f32.mrb[0].mxu0
        %1741 = vmatprep.mubr.f32.mxu0 0.0
        %1742 = vmatmul.mubr.f32.gmra.mrb[0].mxu0 %v1439
        %v1743 = vpop.f32.mrb[0].mxu0
        %v1744 = vadd.f32 0.0, %v1743
        %v1745 = vpop.f32.mrb[0].mxu0
        %1746 = vmatprep.mubr.f32.mxu0 0.0
        %1747 = vmatmul.mubr.f32.gmra.mrb[0].mxu0 %v1442
        %v1748 = vpop.f32.mrb[0].mxu0
        %v1749 = vadd.f32 0.0, %v1748
        %v1750 = vpop.f32.mrb[0].mxu0
        %1751 = vmatprep.mubr.f32.mxu0 0.0
        %1752 = vmatmul.mubr.f32.gmra.mrb[0].mxu0 %v1445
        %v1753 = vpop.f32.mrb[0].mxu0
        %v1754 = vadd.f32 0.0, %v1753
        %v1755 = vpop.f32.mrb[0].mxu0
        %1756 = vmatprep.mubr.f32.mxu0 0.0
        %1757 = vmatmul.mubr.f32.gmra.mrb[0].mxu0 %v1614
        %v1758 = vpop.f32.mrb[0].mxu0
        %v1759 = vadd.f32 0.0, %v1758
        %v1760 = vpop.f32.mrb[0].mxu0
        %1761 = vmatprep.mubr.f32.mxu0 0.0
        %1762 = vmatmul.mubr.f32.gmra.mrb[0].mxu0 %v1617
        %v1763 = vpop.f32.mrb[0].mxu0
        %v1764 = vadd.f32 0.0, %v1763
        %v1765 = vpop.f32.mrb[0].mxu0
        %1766 = vdwg.mxu0
        %v1767 = vadd.f32 %v1595, %v1689
        %v1768 = vadd.f32 %v1596, %v1694
        %v1769 = vadd.f32 %v1597, %v1699
        %v1770 = vadd.f32 %v1598, %v1704
        %v1771 = vadd.f32 %v1599, %v1709
        %v1772 = vadd.f32 %v1600, %v1714
        %v1773 = vadd.f32 %v1601, %v1719
        %v1774 = vadd.f32 %v1602, %v1724
        %v1775 = vadd.f32 %v1603, %v1729
        %v1776 = vadd.f32 %v1604, %v1734
        %v1777 = vadd.f32 %v1605, %v1739
        %v1778 = vadd.f32 %v1606, %v1744
        %v1779 = vadd.f32 %v1607, %v1749
        %v1780 = vadd.f32 %v1608, %v1754
        %v1781 = vadd.f32 %v1609, %v1759
        %v1782 = vadd.f32 %v1610, %v1764
        %s1783 = scalar_lea.vmem %s2, 28
        %v1784 = vld [vmem:[%s1783] sm:$0xf]
        %v1786 = vsel %vm779, %v1395, 0
        %v1789 = vsel %vm779, %v1396, 0
        %v1792 = vsel %vm902, %v1784, 0
        %1794 = vmatprep.subr.mxu0 0.0
        %1795 = vmatpush1.msra.mxu0 %v1792
        %1796 = vmatprep.subr.mxu0 0.0
        %1797 = vmatpush1.msra.mxu0 0.0
        %1798 = vmatprep.subr.mxu0 0.0
        %1799 = vmatpush1.msra.mxu0 0.0
        %1800 = vmatprep.subr.mxu0 0.0
        %1801 = vmatpush1.msra.mxu0 0.0
        %1802 = vmatprep.subr.mxu0 0.0
        %1803 = vmatpush1.msra.mxu0 0.0
        %1804 = vmatprep.subr.mxu0 0.0
        %1805 = vmatpush1.msra.mxu0 0.0
        %1806 = vmatprep.subr.mxu0 0.0
        %1807 = vmatpush1.msra.mxu0 0.0
        %1808 = vmatprep.subr.mxu0 0.0
        %1809 = vmatpush1.msra.mxu0 0.0
        %1810 = vmatprep.subr.mxu0 0.0
        %1811 = vmatpush1.msra.mxu0 0.0
        %1812 = vmatprep.subr.mxu0 0.0
        %1813 = vmatpush1.msra.mxu0 0.0
        %1814 = vmatprep.subr.mxu0 0.0
        %1815 = vmatpush1.msra.mxu0 0.0
        %1816 = vmatprep.subr.mxu0 0.0
        %1817 = vmatpush1.msra.mxu0 0.0
        %1818 = vmatprep.subr.mxu0 0.0
        %1819 = vmatpush1.msra.mxu0 0.0
        %1820 = vmatprep.subr.mxu0 0.0
        %1821 = vmatpush1.msra.mxu0 0.0
        %1822 = vmatprep.subr.mxu0 0.0
        %1823 = vmatpush1.msra.mxu0 0.0
        %1824 = vmatprep.subr.mxu0 0.0
        %1825 = vmatpush1.msra.mxu0 0.0
        %1826 = vmatprep.subr.mxu0 0.0
        %1827 = vmatpush1.msra.mxu0 0.0
        %1828 = vmatprep.subr.mxu0 0.0
        %1829 = vmatpush1.msra.mxu0 0.0
        %1830 = vmatprep.subr.mxu0 0.0
        %1831 = vmatpush1.msra.mxu0 0.0
        %1832 = vmatprep.subr.mxu0 0.0
        %1833 = vmatpush1.msra.mxu0 0.0
        %1834 = vmatprep.subr.mxu0 0.0
        %1835 = vmatpush1.msra.mxu0 0.0
        %1836 = vmatprep.subr.mxu0 0.0
        %1837 = vmatpush1.msra.mxu0 0.0
        %1838 = vmatprep.subr.mxu0 0.0
        %1839 = vmatpush1.msra.mxu0 0.0
        %1840 = vmatprep.subr.mxu0 0.0
        %1841 = vmatpush1.msra.mxu0 0.0
        %1842 = vmatprep.subr.mxu0 0.0
        %1843 = vmatpush1.msra.mxu0 0.0
        %1844 = vmatprep.subr.mxu0 0.0
        %1845 = vmatpush1.msra.mxu0 0.0
        %1846 = vmatprep.subr.mxu0 0.0
        %1847 = vmatpush1.msra.mxu0 0.0
        %1848 = vmatprep.subr.mxu0 0.0
        %1849 = vmatpush1.msra.mxu0 0.0
        %1850 = vmatprep.subr.mxu0 0.0
        %1851 = vmatpush1.msra.mxu0 0.0
        %1852 = vmatprep.subr.mxu0 0.0
        %1853 = vmatpush1.msra.mxu0 0.0
        %1854 = vmatprep.subr.mxu0 0.0
        %1855 = vmatpush1.msra.mxu0 0.0
        %1856 = vmatprep.subr.mxu0 0.0
        %1857 = vmatpush1.msra.mxu0 0.0
        %1858 = vmatprep.mubr.f32.mxu0 0.0
        %1859 = vmatmul.mubr.f32.gmra.mrb[0].mxu0 %v1412
        %v1860 = vpop.f32.mrb[0].mxu0
        %v1861 = vadd.f32 0.0, %v1860
        %v1862 = vpop.f32.mrb[0].mxu0
        %1863 = vmatprep.mubr.f32.mxu0 0.0
        %1864 = vmatmul.mubr.f32.gmra.mrb[0].mxu0 %v1415
        %v1865 = vpop.f32.mrb[0].mxu0
        %v1866 = vadd.f32 0.0, %v1865
        %v1867 = vpop.f32.mrb[0].mxu0
        %1868 = vmatprep.mubr.f32.mxu0 0.0
        %1869 = vmatmul.mubr.f32.gmra.mrb[0].mxu0 %v1418
        %v1870 = vpop.f32.mrb[0].mxu0
        %v1871 = vadd.f32 0.0, %v1870
        %v1872 = vpop.f32.mrb[0].mxu0
        %1873 = vmatprep.mubr.f32.mxu0 0.0
        %1874 = vmatmul.mubr.f32.gmra.mrb[0].mxu0 %v1421
        %v1875 = vpop.f32.mrb[0].mxu0
        %v1876 = vadd.f32 0.0, %v1875
        %v1877 = vpop.f32.mrb[0].mxu0
        %1878 = vmatprep.mubr.f32.mxu0 0.0
        %1879 = vmatmul.mubr.f32.gmra.mrb[0].mxu0 %v1424
        %v1880 = vpop.f32.mrb[0].mxu0
        %v1881 = vadd.f32 0.0, %v1880
        %v1882 = vpop.f32.mrb[0].mxu0
        %1883 = vmatprep.mubr.f32.mxu0 0.0
        %1884 = vmatmul.mubr.f32.gmra.mrb[0].mxu0 %v1427
        %v1885 = vpop.f32.mrb[0].mxu0
        %v1886 = vadd.f32 0.0, %v1885
        %v1887 = vpop.f32.mrb[0].mxu0
        %1888 = vmatprep.mubr.f32.mxu0 0.0
        %1889 = vmatmul.mubr.f32.gmra.mrb[0].mxu0 %v1430
        %v1890 = vpop.f32.mrb[0].mxu0
        %v1891 = vadd.f32 0.0, %v1890
        %v1892 = vpop.f32.mrb[0].mxu0
        %1893 = vmatprep.mubr.f32.mxu0 0.0
        %1894 = vmatmul.mubr.f32.gmra.mrb[0].mxu0 %v1433
        %v1895 = vpop.f32.mrb[0].mxu0
        %v1896 = vadd.f32 0.0, %v1895
        %v1897 = vpop.f32.mrb[0].mxu0
        %1898 = vmatprep.mubr.f32.mxu0 0.0
        %1899 = vmatmul.mubr.f32.gmra.mrb[0].mxu0 %v1436
        %v1900 = vpop.f32.mrb[0].mxu0
        %v1901 = vadd.f32 0.0, %v1900
        %v1902 = vpop.f32.mrb[0].mxu0
        %1903 = vmatprep.mubr.f32.mxu0 0.0
        %1904 = vmatmul.mubr.f32.gmra.mrb[0].mxu0 %v1439
        %v1905 = vpop.f32.mrb[0].mxu0
        %v1906 = vadd.f32 0.0, %v1905
        %v1907 = vpop.f32.mrb[0].mxu0
        %1908 = vmatprep.mubr.f32.mxu0 0.0
        %1909 = vmatmul.mubr.f32.gmra.mrb[0].mxu0 %v1442
        %v1910 = vpop.f32.mrb[0].mxu0
        %v1911 = vadd.f32 0.0, %v1910
        %v1912 = vpop.f32.mrb[0].mxu0
        %1913 = vmatprep.mubr.f32.mxu0 0.0
        %1914 = vmatmul.mubr.f32.gmra.mrb[0].mxu0 %v1445
        %v1915 = vpop.f32.mrb[0].mxu0
        %v1916 = vadd.f32 0.0, %v1915
        %v1917 = vpop.f32.mrb[0].mxu0
        %1918 = vmatprep.mubr.f32.mxu0 0.0
        %1919 = vmatmul.mubr.f32.gmra.mrb[0].mxu0 %v1614
        %v1920 = vpop.f32.mrb[0].mxu0
        %v1921 = vadd.f32 0.0, %v1920
        %v1922 = vpop.f32.mrb[0].mxu0
        %1923 = vmatprep.mubr.f32.mxu0 0.0
        %1924 = vmatmul.mubr.f32.gmra.mrb[0].mxu0 %v1617
        %v1925 = vpop.f32.mrb[0].mxu0
        %v1926 = vadd.f32 0.0, %v1925
        %v1927 = vpop.f32.mrb[0].mxu0
        %1928 = vmatprep.mubr.f32.mxu0 0.0
        %1929 = vmatmul.mubr.f32.gmra.mrb[0].mxu0 %v1786
        %v1930 = vpop.f32.mrb[0].mxu0
        %v1931 = vadd.f32 0.0, %v1930
        %v1932 = vpop.f32.mrb[0].mxu0
        %1933 = vmatprep.mubr.f32.mxu0 0.0
        %1934 = vmatmul.mubr.f32.gmra.mrb[0].mxu0 %v1789
        %v1935 = vpop.f32.mrb[0].mxu0
        %v1936 = vadd.f32 0.0, %v1935
        %v1937 = vpop.f32.mrb[0].mxu0
        %1938 = vdwg.mxu0
        %v1939 = vadd.f32 %v1767, %v1861
        %v1940 = vadd.f32 %v1768, %v1866
        %v1941 = vadd.f32 %v1769, %v1871
        %v1942 = vadd.f32 %v1770, %v1876
        %v1943 = vadd.f32 %v1771, %v1881
        %v1944 = vadd.f32 %v1772, %v1886
        %v1945 = vadd.f32 %v1773, %v1891
        %v1946 = vadd.f32 %v1774, %v1896
        %v1947 = vadd.f32 %v1775, %v1901
        %v1948 = vadd.f32 %v1776, %v1906
        %v1949 = vadd.f32 %v1777, %v1911
        %v1950 = vadd.f32 %v1778, %v1916
        %v1951 = vadd.f32 %v1779, %v1921
        %v1952 = vadd.f32 %v1780, %v1926
        %v1953 = vadd.f32 %v1781, %v1931
        %v1954 = vadd.f32 %v1782, %v1936
        %v1955 = vld [vmem:[#allocation2 + $0x2] sm:$0xff]
        %v1956 = vld [vmem:[#allocation2 + $0xa] sm:$0xff]
        %v1957 = vld [vmem:[#allocation2 + $0x1a] sm:$0xff]
        %v1958 = vld [vmem:[#allocation2 + $0x22] sm:$0xff]
        %v1959 = vld [vmem:[#allocation2 + $0x32] sm:$0xff]
        %v1960 = vld [vmem:[#allocation2 + $0x3a] sm:$0xff]
        %v1961 = vld [vmem:[#allocation2 + $0x4a] sm:$0xff]
        %v1962 = vld [vmem:[#allocation2 + $0x52] sm:$0xff]
        %v1963 = vld [vmem:[#allocation2 + $0x62] sm:$0xff]
        %v1964 = vld [vmem:[#allocation2 + $0x6a] sm:$0xff]
        %v1965 = vld [vmem:[#allocation2 + $0x7a] sm:$0xff]
        %v1966 = vld [vmem:[#allocation2 + $0x82] sm:$0xff]
        %v1967 = vld [vmem:[#allocation2 + $0x92] sm:$0xff]
        %v1968 = vld [vmem:[#allocation2 + $0x9a] sm:$0xff]
        %v1969 = vld [vmem:[#allocation2 + $0xaa] sm:$0xff]
        %v1970 = vld [vmem:[#allocation2 + $0xb2] sm:$0xff]
        %v1971 = vld [vmem:[#allocation2 + $0xc2] sm:$0xff]
        %v1972 = vld [vmem:[#allocation2 + $0xca] sm:$0xff]
        %v1973 = vld [vmem:[#allocation2 + $0xda] sm:$0xff]
        %v1974 = vld [vmem:[#allocation2 + $0xe2] sm:$0xff]
        %s1975 = scalar_lea.vmem %s2, 8
        %v1976 = vld [vmem:[%s1975] sm:$0xf]
        %v1978 = vsel %vm779, %v1955, 0
        %v1981 = vsel %vm779, %v1956, 0
        %v1984 = vsel %vm779, %v1957, 0
        %v1987 = vsel %vm779, %v1958, 0
        %v1990 = vsel %vm779, %v1959, 0
        %v1993 = vsel %vm779, %v1960, 0
        %v1996 = vsel %vm779, %v1961, 0
        %v1999 = vsel %vm779, %v1962, 0
        %v2002 = vsel %vm779, %v1963, 0
        %v2005 = vsel %vm779, %v1964, 0
        %v2008 = vsel %vm779, %v1965, 0
        %v2011 = vsel %vm779, %v1966, 0
        %v2014 = vsel %vm779, %v1967, 0
        %v2017 = vsel %vm779, %v1968, 0
        %v2020 = vsel %vm779, %v1969, 0
        %v2023 = vsel %vm779, %v1970, 0
        %v2026 = vsel %vm902, %v1976, 0
        %2028 = vmatprep.subr.mxu0 0.0
        %2029 = vmatpush1.msra.mxu0 %v2026
        %2030 = vmatprep.subr.mxu0 0.0
        %2031 = vmatpush1.msra.mxu0 0.0
        %2032 = vmatprep.subr.mxu0 0.0
        %2033 = vmatpush1.msra.mxu0 0.0
        %2034 = vmatprep.subr.mxu0 0.0
        %2035 = vmatpush1.msra.mxu0 0.0
        %2036 = vmatprep.subr.mxu0 0.0
        %2037 = vmatpush1.msra.mxu0 0.0
        %2038 = vmatprep.subr.mxu0 0.0
        %2039 = vmatpush1.msra.mxu0 0.0
        %2040 = vmatprep.subr.mxu0 0.0
        %2041 = vmatpush1.msra.mxu0 0.0
        %2042 = vmatprep.subr.mxu0 0.0
        %2043 = vmatpush1.msra.mxu0 0.0
        %2044 = vmatprep.subr.mxu0 0.0
        %2045 = vmatpush1.msra.mxu0 0.0
        %2046 = vmatprep.subr.mxu0 0.0
        %2047 = vmatpush1.msra.mxu0 0.0
        %2048 = vmatprep.subr.mxu0 0.0
        %2049 = vmatpush1.msra.mxu0 0.0
        %2050 = vmatprep.subr.mxu0 0.0
        %2051 = vmatpush1.msra.mxu0 0.0
        %2052 = vmatprep.subr.mxu0 0.0
        %2053 = vmatpush1.msra.mxu0 0.0
        %2054 = vmatprep.subr.mxu0 0.0
        %2055 = vmatpush1.msra.mxu0 0.0
        %2056 = vmatprep.subr.mxu0 0.0
        %2057 = vmatpush1.msra.mxu0 0.0
        %2058 = vmatprep.subr.mxu0 0.0
        %2059 = vmatpush1.msra.mxu0 0.0
        %2060 = vmatprep.subr.mxu0 0.0
        %2061 = vmatpush1.msra.mxu0 0.0
        %2062 = vmatprep.subr.mxu0 0.0
        %2063 = vmatpush1.msra.mxu0 0.0
        %2064 = vmatprep.subr.mxu0 0.0
        %2065 = vmatpush1.msra.mxu0 0.0
        %2066 = vmatprep.subr.mxu0 0.0
        %2067 = vmatpush1.msra.mxu0 0.0
        %2068 = vmatprep.subr.mxu0 0.0
        %2069 = vmatpush1.msra.mxu0 0.0
        %2070 = vmatprep.subr.mxu0 0.0
        %2071 = vmatpush1.msra.mxu0 0.0
        %2072 = vmatprep.subr.mxu0 0.0
        %2073 = vmatpush1.msra.mxu0 0.0
        %2074 = vmatprep.subr.mxu0 0.0
        %2075 = vmatpush1.msra.mxu0 0.0
        %2076 = vmatprep.subr.mxu0 0.0
        %2077 = vmatpush1.msra.mxu0 0.0
        %2078 = vmatprep.subr.mxu0 0.0
        %2079 = vmatpush1.msra.mxu0 0.0
        %2080 = vmatprep.subr.mxu0 0.0
        %2081 = vmatpush1.msra.mxu0 0.0
        %2082 = vmatprep.subr.mxu0 0.0
        %2083 = vmatpush1.msra.mxu0 0.0
        %2084 = vmatprep.subr.mxu0 0.0
        %2085 = vmatpush1.msra.mxu0 0.0
        %2086 = vmatprep.subr.mxu0 0.0
        %2087 = vmatpush1.msra.mxu0 0.0
        %2088 = vmatprep.subr.mxu0 0.0
        %2089 = vmatpush1.msra.mxu0 0.0
        %2090 = vmatprep.subr.mxu0 0.0
        %2091 = vmatpush1.msra.mxu0 0.0
        %2092 = vmatprep.mubr.f32.mxu0 0.0
        %2093 = vmatmul.mubr.f32.gmra.mrb[0].mxu0 %v1978
        %v2094 = vpop.f32.mrb[0].mxu0
        %v2095 = vadd.f32 0.0, %v2094
        %v2096 = vpop.f32.mrb[0].mxu0
        %2097 = vmatprep.mubr.f32.mxu0 0.0
        %2098 = vmatmul.mubr.f32.gmra.mrb[0].mxu0 %v1981
        %v2099 = vpop.f32.mrb[0].mxu0
        %v2100 = vadd.f32 0.0, %v2099
        %v2101 = vpop.f32.mrb[0].mxu0
        %2102 = vmatprep.mubr.f32.mxu0 0.0
        %2103 = vmatmul.mubr.f32.gmra.mrb[0].mxu0 %v1984
        %v2104 = vpop.f32.mrb[0].mxu0
        %v2105 = vadd.f32 0.0, %v2104
        %v2106 = vpop.f32.mrb[0].mxu0
        %2107 = vmatprep.mubr.f32.mxu0 0.0
        %2108 = vmatmul.mubr.f32.gmra.mrb[0].mxu0 %v1987
        %v2109 = vpop.f32.mrb[0].mxu0
        %v2110 = vadd.f32 0.0, %v2109
        %v2111 = vpop.f32.mrb[0].mxu0
        %2112 = vmatprep.mubr.f32.mxu0 0.0
        %2113 = vmatmul.mubr.f32.gmra.mrb[0].mxu0 %v1990
        %v2114 = vpop.f32.mrb[0].mxu0
        %v2115 = vadd.f32 0.0, %v2114
        %v2116 = vpop.f32.mrb[0].mxu0
        %2117 = vmatprep.mubr.f32.mxu0 0.0
        %2118 = vmatmul.mubr.f32.gmra.mrb[0].mxu0 %v1993
        %v2119 = vpop.f32.mrb[0].mxu0
        %v2120 = vadd.f32 0.0, %v2119
        %v2121 = vpop.f32.mrb[0].mxu0
        %2122 = vmatprep.mubr.f32.mxu0 0.0
        %2123 = vmatmul.mubr.f32.gmra.mrb[0].mxu0 %v1996
        %v2124 = vpop.f32.mrb[0].mxu0
        %v2125 = vadd.f32 0.0, %v2124
        %v2126 = vpop.f32.mrb[0].mxu0
        %2127 = vmatprep.mubr.f32.mxu0 0.0
        %2128 = vmatmul.mubr.f32.gmra.mrb[0].mxu0 %v1999
        %v2129 = vpop.f32.mrb[0].mxu0
        %v2130 = vadd.f32 0.0, %v2129
        %v2131 = vpop.f32.mrb[0].mxu0
        %2132 = vmatprep.mubr.f32.mxu0 0.0
        %2133 = vmatmul.mubr.f32.gmra.mrb[0].mxu0 %v2002
        %v2134 = vpop.f32.mrb[0].mxu0
        %v2135 = vadd.f32 0.0, %v2134
        %v2136 = vpop.f32.mrb[0].mxu0
        %2137 = vmatprep.mubr.f32.mxu0 0.0
        %2138 = vmatmul.mubr.f32.gmra.mrb[0].mxu0 %v2005
        %v2139 = vpop.f32.mrb[0].mxu0
        %v2140 = vadd.f32 0.0, %v2139
        %v2141 = vpop.f32.mrb[0].mxu0
        %2142 = vmatprep.mubr.f32.mxu0 0.0
        %2143 = vmatmul.mubr.f32.gmra.mrb[0].mxu0 %v2008
        %v2144 = vpop.f32.mrb[0].mxu0
        %v2145 = vadd.f32 0.0, %v2144
        %v2146 = vpop.f32.mrb[0].mxu0
        %2147 = vmatprep.mubr.f32.mxu0 0.0
        %2148 = vmatmul.mubr.f32.gmra.mrb[0].mxu0 %v2011
        %v2149 = vpop.f32.mrb[0].mxu0
        %v2150 = vadd.f32 0.0, %v2149
        %v2151 = vpop.f32.mrb[0].mxu0
        %2152 = vmatprep.mubr.f32.mxu0 0.0
        %2153 = vmatmul.mubr.f32.gmra.mrb[0].mxu0 %v2014
        %v2154 = vpop.f32.mrb[0].mxu0
        %v2155 = vadd.f32 0.0, %v2154
        %v2156 = vpop.f32.mrb[0].mxu0
        %2157 = vmatprep.mubr.f32.mxu0 0.0
        %2158 = vmatmul.mubr.f32.gmra.mrb[0].mxu0 %v2017
        %v2159 = vpop.f32.mrb[0].mxu0
        %v2160 = vadd.f32 0.0, %v2159
        %v2161 = vpop.f32.mrb[0].mxu0
        %2162 = vmatprep.mubr.f32.mxu0 0.0
        %2163 = vmatmul.mubr.f32.gmra.mrb[0].mxu0 %v2020
        %v2164 = vpop.f32.mrb[0].mxu0
        %v2165 = vadd.f32 0.0, %v2164
        %v2166 = vpop.f32.mrb[0].mxu0
        %2167 = vmatprep.mubr.f32.mxu0 0.0
        %2168 = vmatmul.mubr.f32.gmra.mrb[0].mxu0 %v2023
        %v2169 = vpop.f32.mrb[0].mxu0
        %v2170 = vadd.f32 0.0, %v2169
        %v2171 = vpop.f32.mrb[0].mxu0
        %2172 = vdwg.mxu0
        %v2173 = vadd.f32 %v1939, %v2095
        %v2174 = vadd.f32 %v1940, %v2100
        %v2175 = vadd.f32 %v1941, %v2105
        %v2176 = vadd.f32 %v1942, %v2110
        %v2177 = vadd.f32 %v1943, %v2115
        %v2178 = vadd.f32 %v1944, %v2120
        %v2179 = vadd.f32 %v1945, %v2125
        %v2180 = vadd.f32 %v1946, %v2130
        %v2181 = vadd.f32 %v1947, %v2135
        %v2182 = vadd.f32 %v1948, %v2140
        %v2183 = vadd.f32 %v1949, %v2145
        %v2184 = vadd.f32 %v1950, %v2150
        %v2185 = vadd.f32 %v1951, %v2155
        %v2186 = vadd.f32 %v1952, %v2160
        %v2187 = vadd.f32 %v1953, %v2165
        %v2188 = vadd.f32 %v1954, %v2170
        %s2189 = scalar_lea.vmem %s2, 20
        %v2190 = vld [vmem:[%s2189] sm:$0xf]
        %v2192 = vsel %vm779, %v1971, 0
        %v2195 = vsel %vm779, %v1972, 0
        %v2198 = vsel %vm902, %v2190, 0
        %2200 = vmatprep.subr.mxu0 0.0
        %2201 = vmatpush1.msra.mxu0 %v2198
        %2202 = vmatprep.subr.mxu0 0.0
        %2203 = vmatpush1.msra.mxu0 0.0
        %2204 = vmatprep.subr.mxu0 0.0
        %2205 = vmatpush1.msra.mxu0 0.0
        %2206 = vmatprep.subr.mxu0 0.0
        %2207 = vmatpush1.msra.mxu0 0.0
        %2208 = vmatprep.subr.mxu0 0.0
        %2209 = vmatpush1.msra.mxu0 0.0
        %2210 = vmatprep.subr.mxu0 0.0
        %2211 = vmatpush1.msra.mxu0 0.0
        %2212 = vmatprep.subr.mxu0 0.0
        %2213 = vmatpush1.msra.mxu0 0.0
        %2214 = vmatprep.subr.mxu0 0.0
        %2215 = vmatpush1.msra.mxu0 0.0
        %2216 = vmatprep.subr.mxu0 0.0
        %2217 = vmatpush1.msra.mxu0 0.0
        %2218 = vmatprep.subr.mxu0 0.0
        %2219 = vmatpush1.msra.mxu0 0.0
        %2220 = vmatprep.subr.mxu0 0.0
        %2221 = vmatpush1.msra.mxu0 0.0
        %2222 = vmatprep.subr.mxu0 0.0
        %2223 = vmatpush1.msra.mxu0 0.0
        %2224 = vmatprep.subr.mxu0 0.0
        %2225 = vmatpush1.msra.mxu0 0.0
        %2226 = vmatprep.subr.mxu0 0.0
        %2227 = vmatpush1.msra.mxu0 0.0
        %2228 = vmatprep.subr.mxu0 0.0
        %2229 = vmatpush1.msra.mxu0 0.0
        %2230 = vmatprep.subr.mxu0 0.0
        %2231 = vmatpush1.msra.mxu0 0.0
        %2232 = vmatprep.subr.mxu0 0.0
        %2233 = vmatpush1.msra.mxu0 0.0
        %2234 = vmatprep.subr.mxu0 0.0
        %2235 = vmatpush1.msra.mxu0 0.0
        %2236 = vmatprep.subr.mxu0 0.0
        %2237 = vmatpush1.msra.mxu0 0.0
        %2238 = vmatprep.subr.mxu0 0.0
        %2239 = vmatpush1.msra.mxu0 0.0
        %2240 = vmatprep.subr.mxu0 0.0
        %2241 = vmatpush1.msra.mxu0 0.0
        %2242 = vmatprep.subr.mxu0 0.0
        %2243 = vmatpush1.msra.mxu0 0.0
        %2244 = vmatprep.subr.mxu0 0.0
        %2245 = vmatpush1.msra.mxu0 0.0
        %2246 = vmatprep.subr.mxu0 0.0
        %2247 = vmatpush1.msra.mxu0 0.0
        %2248 = vmatprep.subr.mxu0 0.0
        %2249 = vmatpush1.msra.mxu0 0.0
        %2250 = vmatprep.subr.mxu0 0.0
        %2251 = vmatpush1.msra.mxu0 0.0
        %2252 = vmatprep.subr.mxu0 0.0
        %2253 = vmatpush1.msra.mxu0 0.0
        %2254 = vmatprep.subr.mxu0 0.0
        %2255 = vmatpush1.msra.mxu0 0.0
        %2256 = vmatprep.subr.mxu0 0.0
        %2257 = vmatpush1.msra.mxu0 0.0
        %2258 = vmatprep.subr.mxu0 0.0
        %2259 = vmatpush1.msra.mxu0 0.0
        %2260 = vmatprep.subr.mxu0 0.0
        %2261 = vmatpush1.msra.mxu0 0.0
        %2262 = vmatprep.subr.mxu0 0.0
        %2263 = vmatpush1.msra.mxu0 0.0
        %2264 = vmatprep.mubr.f32.mxu0 0.0
        %2265 = vmatmul.mubr.f32.gmra.mrb[0].mxu0 %v1984
        %v2266 = vpop.f32.mrb[0].mxu0
        %v2267 = vadd.f32 0.0, %v2266
        %v2268 = vpop.f32.mrb[0].mxu0
        %2269 = vmatprep.mubr.f32.mxu0 0.0
        %2270 = vmatmul.mubr.f32.gmra.mrb[0].mxu0 %v1987
        %v2271 = vpop.f32.mrb[0].mxu0
        %v2272 = vadd.f32 0.0, %v2271
        %v2273 = vpop.f32.mrb[0].mxu0
        %2274 = vmatprep.mubr.f32.mxu0 0.0
        %2275 = vmatmul.mubr.f32.gmra.mrb[0].mxu0 %v1990
        %v2276 = vpop.f32.mrb[0].mxu0
        %v2277 = vadd.f32 0.0, %v2276
        %v2278 = vpop.f32.mrb[0].mxu0
        %2279 = vmatprep.mubr.f32.mxu0 0.0
        %2280 = vmatmul.mubr.f32.gmra.mrb[0].mxu0 %v1993
        %v2281 = vpop.f32.mrb[0].mxu0
        %v2282 = vadd.f32 0.0, %v2281
        %v2283 = vpop.f32.mrb[0].mxu0
        %2284 = vmatprep.mubr.f32.mxu0 0.0
        %2285 = vmatmul.mubr.f32.gmra.mrb[0].mxu0 %v1996
        %v2286 = vpop.f32.mrb[0].mxu0
        %v2287 = vadd.f32 0.0, %v2286
        %v2288 = vpop.f32.mrb[0].mxu0
        %2289 = vmatprep.mubr.f32.mxu0 0.0
        %2290 = vmatmul.mubr.f32.gmra.mrb[0].mxu0 %v1999
        %v2291 = vpop.f32.mrb[0].mxu0
        %v2292 = vadd.f32 0.0, %v2291
        %v2293 = vpop.f32.mrb[0].mxu0
        %2294 = vmatprep.mubr.f32.mxu0 0.0
        %2295 = vmatmul.mubr.f32.gmra.mrb[0].mxu0 %v2002
        %v2296 = vpop.f32.mrb[0].mxu0
        %v2297 = vadd.f32 0.0, %v2296
        %v2298 = vpop.f32.mrb[0].mxu0
        %2299 = vmatprep.mubr.f32.mxu0 0.0
        %2300 = vmatmul.mubr.f32.gmra.mrb[0].mxu0 %v2005
        %v2301 = vpop.f32.mrb[0].mxu0
        %v2302 = vadd.f32 0.0, %v2301
        %v2303 = vpop.f32.mrb[0].mxu0
        %2304 = vmatprep.mubr.f32.mxu0 0.0
        %2305 = vmatmul.mubr.f32.gmra.mrb[0].mxu0 %v2008
        %v2306 = vpop.f32.mrb[0].mxu0
        %v2307 = vadd.f32 0.0, %v2306
        %v2308 = vpop.f32.mrb[0].mxu0
        %2309 = vmatprep.mubr.f32.mxu0 0.0
        %2310 = vmatmul.mubr.f32.gmra.mrb[0].mxu0 %v2011
        %v2311 = vpop.f32.mrb[0].mxu0
        %v2312 = vadd.f32 0.0, %v2311
        %v2313 = vpop.f32.mrb[0].mxu0
        %2314 = vmatprep.mubr.f32.mxu0 0.0
        %2315 = vmatmul.mubr.f32.gmra.mrb[0].mxu0 %v2014
        %v2316 = vpop.f32.mrb[0].mxu0
        %v2317 = vadd.f32 0.0, %v2316
        %v2318 = vpop.f32.mrb[0].mxu0
        %2319 = vmatprep.mubr.f32.mxu0 0.0
        %2320 = vmatmul.mubr.f32.gmra.mrb[0].mxu0 %v2017
        %v2321 = vpop.f32.mrb[0].mxu0
        %v2322 = vadd.f32 0.0, %v2321
        %v2323 = vpop.f32.mrb[0].mxu0
        %2324 = vmatprep.mubr.f32.mxu0 0.0
        %2325 = vmatmul.mubr.f32.gmra.mrb[0].mxu0 %v2020
        %v2326 = vpop.f32.mrb[0].mxu0
        %v2327 = vadd.f32 0.0, %v2326
        %v2328 = vpop.f32.mrb[0].mxu0
        %2329 = vmatprep.mubr.f32.mxu0 0.0
        %2330 = vmatmul.mubr.f32.gmra.mrb[0].mxu0 %v2023
        %v2331 = vpop.f32.mrb[0].mxu0
        %v2332 = vadd.f32 0.0, %v2331
        %v2333 = vpop.f32.mrb[0].mxu0
        %2334 = vmatprep.mubr.f32.mxu0 0.0
        %2335 = vmatmul.mubr.f32.gmra.mrb[0].mxu0 %v2192
        %v2336 = vpop.f32.mrb[0].mxu0
        %v2337 = vadd.f32 0.0, %v2336
        %v2338 = vpop.f32.mrb[0].mxu0
        %2339 = vmatprep.mubr.f32.mxu0 0.0
        %2340 = vmatmul.mubr.f32.gmra.mrb[0].mxu0 %v2195
        %v2341 = vpop.f32.mrb[0].mxu0
        %v2342 = vadd.f32 0.0, %v2341
        %v2343 = vpop.f32.mrb[0].mxu0
        %2344 = vdwg.mxu0
        %v2345 = vadd.f32 %v2173, %v2267
        %v2346 = vadd.f32 %v2174, %v2272
        %v2347 = vadd.f32 %v2175, %v2277
        %v2348 = vadd.f32 %v2176, %v2282
        %v2349 = vadd.f32 %v2177, %v2287
        %v2350 = vadd.f32 %v2178, %v2292
        %v2351 = vadd.f32 %v2179, %v2297
        %v2352 = vadd.f32 %v2180, %v2302
        %v2353 = vadd.f32 %v2181, %v2307
        %v2354 = vadd.f32 %v2182, %v2312
        %v2355 = vadd.f32 %v2183, %v2317
        %v2356 = vadd.f32 %v2184, %v2322
        %v2357 = vadd.f32 %v2185, %v2327
        %v2358 = vadd.f32 %v2186, %v2332
        %v2359 = vadd.f32 %v2187, %v2337
        %v2360 = vadd.f32 %v2188, %v2342
        %s2361 = scalar_lea.vmem %s2, 32
        %v2362 = vld [vmem:[%s2361] sm:$0xf]
        %v2364 = vsel %vm779, %v1973, 0
        %v2367 = vsel %vm779, %v1974, 0
        %v2370 = vsel %vm902, %v2362, 0
        %2372 = vmatprep.subr.mxu0 0.0
        %2373 = vmatpush1.msra.mxu0 %v2370
        %2374 = vmatprep.subr.mxu0 0.0
        %2375 = vmatpush1.msra.mxu0 0.0
        %2376 = vmatprep.subr.mxu0 0.0
        %2377 = vmatpush1.msra.mxu0 0.0
        %2378 = vmatprep.subr.mxu0 0.0
        %2379 = vmatpush1.msra.mxu0 0.0
        %2380 = vmatprep.subr.mxu0 0.0
        %2381 = vmatpush1.msra.mxu0 0.0
        %2382 = vmatprep.subr.mxu0 0.0
        %2383 = vmatpush1.msra.mxu0 0.0
        %2384 = vmatprep.subr.mxu0 0.0
        %2385 = vmatpush1.msra.mxu0 0.0
        %2386 = vmatprep.subr.mxu0 0.0
        %2387 = vmatpush1.msra.mxu0 0.0
        %2388 = vmatprep.subr.mxu0 0.0
        %2389 = vmatpush1.msra.mxu0 0.0
        %2390 = vmatprep.subr.mxu0 0.0
        %2391 = vmatpush1.msra.mxu0 0.0
        %2392 = vmatprep.subr.mxu0 0.0
        %2393 = vmatpush1.msra.mxu0 0.0
        %2394 = vmatprep.subr.mxu0 0.0
        %2395 = vmatpush1.msra.mxu0 0.0
        %2396 = vmatprep.subr.mxu0 0.0
        %2397 = vmatpush1.msra.mxu0 0.0
        %2398 = vmatprep.subr.mxu0 0.0
        %2399 = vmatpush1.msra.mxu0 0.0
        %2400 = vmatprep.subr.mxu0 0.0
        %2401 = vmatpush1.msra.mxu0 0.0
        %2402 = vmatprep.subr.mxu0 0.0
        %2403 = vmatpush1.msra.mxu0 0.0
        %2404 = vmatprep.subr.mxu0 0.0
        %2405 = vmatpush1.msra.mxu0 0.0
        %2406 = vmatprep.subr.mxu0 0.0
        %2407 = vmatpush1.msra.mxu0 0.0
        %2408 = vmatprep.subr.mxu0 0.0
        %2409 = vmatpush1.msra.mxu0 0.0
        %2410 = vmatprep.subr.mxu0 0.0
        %2411 = vmatpush1.msra.mxu0 0.0
        %2412 = vmatprep.subr.mxu0 0.0
        %2413 = vmatpush1.msra.mxu0 0.0
        %2414 = vmatprep.subr.mxu0 0.0
        %2415 = vmatpush1.msra.mxu0 0.0
        %2416 = vmatprep.subr.mxu0 0.0
        %2417 = vmatpush1.msra.mxu0 0.0
        %2418 = vmatprep.subr.mxu0 0.0
        %2419 = vmatpush1.msra.mxu0 0.0
        %2420 = vmatprep.subr.mxu0 0.0
        %2421 = vmatpush1.msra.mxu0 0.0
        %2422 = vmatprep.subr.mxu0 0.0
        %2423 = vmatpush1.msra.mxu0 0.0
        %2424 = vmatprep.subr.mxu0 0.0
        %2425 = vmatpush1.msra.mxu0 0.0
        %2426 = vmatprep.subr.mxu0 0.0
        %2427 = vmatpush1.msra.mxu0 0.0
        %2428 = vmatprep.subr.mxu0 0.0
        %2429 = vmatpush1.msra.mxu0 0.0
        %2430 = vmatprep.subr.mxu0 0.0
        %2431 = vmatpush1.msra.mxu0 0.0
        %2432 = vmatprep.subr.mxu0 0.0
        %2433 = vmatpush1.msra.mxu0 0.0
        %2434 = vmatprep.subr.mxu0 0.0
        %2435 = vmatpush1.msra.mxu0 0.0
        %2436 = vmatprep.mubr.f32.mxu0 0.0
        %2437 = vmatmul.mubr.f32.gmra.mrb[0].mxu0 %v1990
        %v2438 = vpop.f32.mrb[0].mxu0
        %v2439 = vadd.f32 0.0, %v2438
        %v2440 = vpop.f32.mrb[0].mxu0
        %2441 = vmatprep.mubr.f32.mxu0 0.0
        %2442 = vmatmul.mubr.f32.gmra.mrb[0].mxu0 %v1993
        %v2443 = vpop.f32.mrb[0].mxu0
        %v2444 = vadd.f32 0.0, %v2443
        %v2445 = vpop.f32.mrb[0].mxu0
        %2446 = vmatprep.mubr.f32.mxu0 0.0
        %2447 = vmatmul.mubr.f32.gmra.mrb[0].mxu0 %v1996
        %v2448 = vpop.f32.mrb[0].mxu0
        %v2449 = vadd.f32 0.0, %v2448
        %v2450 = vpop.f32.mrb[0].mxu0
        %2451 = vmatprep.mubr.f32.mxu0 0.0
        %2452 = vmatmul.mubr.f32.gmra.mrb[0].mxu0 %v1999
        %v2453 = vpop.f32.mrb[0].mxu0
        %v2454 = vadd.f32 0.0, %v2453
        %v2455 = vpop.f32.mrb[0].mxu0
        %2456 = vmatprep.mubr.f32.mxu0 0.0
        %2457 = vmatmul.mubr.f32.gmra.mrb[0].mxu0 %v2002
        %v2458 = vpop.f32.mrb[0].mxu0
        %v2459 = vadd.f32 0.0, %v2458
        %v2460 = vpop.f32.mrb[0].mxu0
        %2461 = vmatprep.mubr.f32.mxu0 0.0
        %2462 = vmatmul.mubr.f32.gmra.mrb[0].mxu0 %v2005
        %v2463 = vpop.f32.mrb[0].mxu0
        %v2464 = vadd.f32 0.0, %v2463
        %v2465 = vpop.f32.mrb[0].mxu0
        %2466 = vmatprep.mubr.f32.mxu0 0.0
        %2467 = vmatmul.mubr.f32.gmra.mrb[0].mxu0 %v2008
        %v2468 = vpop.f32.mrb[0].mxu0
        %v2469 = vadd.f32 0.0, %v2468
        %v2470 = vpop.f32.mrb[0].mxu0
        %2471 = vmatprep.mubr.f32.mxu0 0.0
        %2472 = vmatmul.mubr.f32.gmra.mrb[0].mxu0 %v2011
        %v2473 = vpop.f32.mrb[0].mxu0
        %v2474 = vadd.f32 0.0, %v2473
        %v2475 = vpop.f32.mrb[0].mxu0
        %2476 = vmatprep.mubr.f32.mxu0 0.0
        %2477 = vmatmul.mubr.f32.gmra.mrb[0].mxu0 %v2014
        %v2478 = vpop.f32.mrb[0].mxu0
        %v2479 = vadd.f32 0.0, %v2478
        %v2480 = vpop.f32.mrb[0].mxu0
        %2481 = vmatprep.mubr.f32.mxu0 0.0
        %2482 = vmatmul.mubr.f32.gmra.mrb[0].mxu0 %v2017
        %v2483 = vpop.f32.mrb[0].mxu0
        %v2484 = vadd.f32 0.0, %v2483
        %v2485 = vpop.f32.mrb[0].mxu0
        %2486 = vmatprep.mubr.f32.mxu0 0.0
        %2487 = vmatmul.mubr.f32.gmra.mrb[0].mxu0 %v2020
        %v2488 = vpop.f32.mrb[0].mxu0
        %v2489 = vadd.f32 0.0, %v2488
        %v2490 = vpop.f32.mrb[0].mxu0
        %2491 = vmatprep.mubr.f32.mxu0 0.0
        %2492 = vmatmul.mubr.f32.gmra.mrb[0].mxu0 %v2023
        %v2493 = vpop.f32.mrb[0].mxu0
        %v2494 = vadd.f32 0.0, %v2493
        %v2495 = vpop.f32.mrb[0].mxu0
        %2496 = vmatprep.mubr.f32.mxu0 0.0
        %2497 = vmatmul.mubr.f32.gmra.mrb[0].mxu0 %v2192
        %v2498 = vpop.f32.mrb[0].mxu0
        %v2499 = vadd.f32 0.0, %v2498
        %v2500 = vpop.f32.mrb[0].mxu0
        %2501 = vmatprep.mubr.f32.mxu0 0.0
        %2502 = vmatmul.mubr.f32.gmra.mrb[0].mxu0 %v2195
        %v2503 = vpop.f32.mrb[0].mxu0
        %v2504 = vadd.f32 0.0, %v2503
        %v2505 = vpop.f32.mrb[0].mxu0
        %2506 = vmatprep.mubr.f32.mxu0 0.0
        %2507 = vmatmul.mubr.f32.gmra.mrb[0].mxu0 %v2364
        %v2508 = vpop.f32.mrb[0].mxu0
        %v2509 = vadd.f32 0.0, %v2508
        %v2510 = vpop.f32.mrb[0].mxu0
        %2511 = vmatprep.mubr.f32.mxu0 0.0
        %2512 = vmatmul.mubr.f32.gmra.mrb[0].mxu0 %v2367
        %v2513 = vpop.f32.mrb[0].mxu0
        %v2514 = vadd.f32 0.0, %v2513
        %v2515 = vpop.f32.mrb[0].mxu0
        %2516 = vdwg.mxu0
        %v2517 = vadd.f32 %v2345, %v2439
        %v2518 = vadd.f32 %v2346, %v2444
        %v2519 = vadd.f32 %v2347, %v2449
        %v2520 = vadd.f32 %v2348, %v2454
        %v2521 = vadd.f32 %v2349, %v2459
        %v2522 = vadd.f32 %v2350, %v2464
        %v2523 = vadd.f32 %v2351, %v2469
        %v2524 = vadd.f32 %v2352, %v2474
        %v2525 = vadd.f32 %v2353, %v2479
        %v2526 = vadd.f32 %v2354, %v2484
        %v2527 = vadd.f32 %v2355, %v2489
        %v2528 = vadd.f32 %v2356, %v2494
        %v2529 = vadd.f32 %v2357, %v2499
        %v2530 = vadd.f32 %v2358, %v2504
        %v2531 = vadd.f32 %v2359, %v2509
        %v2532 = vadd.f32 %v2360, %v2514
        %v2533 = vld [vmem:[%s6] sm:$0x1]
        %v2535 = vlaneseq
        %v2536 = vshrl.u32 %v2535, 7
        %v2537 = vsub.s32 0, %v2536
        %v2538 = vrot.slane %v2533, %v2537
        %v2540 = vmul.f32 %v2517, %v2538
        %v2541 = vmul.f32 %v2518, %v2538
        %v2542 = vmul.f32 %v2519, %v2538
        %v2543 = vmul.f32 %v2520, %v2538
        %v2544 = vmul.f32 %v2521, %v2538
        %v2545 = vmul.f32 %v2522, %v2538
        %v2546 = vmul.f32 %v2523, %v2538
        %v2547 = vmul.f32 %v2524, %v2538
        %v2548 = vmul.f32 %v2525, %v2538
        %v2549 = vmul.f32 %v2526, %v2538
        %v2550 = vmul.f32 %v2527, %v2538
        %v2551 = vmul.f32 %v2528, %v2538
        %v2552 = vmul.f32 %v2529, %v2538
        %v2553 = vmul.f32 %v2530, %v2538
        %v2554 = vmul.f32 %v2531, %v2538
        %v2555 = vmul.f32 %v2532, %v2538
        %v2556 = vld [vmem:[%s7] sm:$0x1]
        %v2558 = vlaneseq
        %v2559 = vshrl.u32 %v2558, 7
        %v2560 = vsub.s32 0, %v2559
        %v2561 = vrot.slane %v2556, %v2560
        %v2563 = vadd.f32 %v2540, %v2561
        %v2564 = vadd.f32 %v2541, %v2561
        %v2565 = vadd.f32 %v2542, %v2561
        %v2566 = vadd.f32 %v2543, %v2561
        %v2567 = vadd.f32 %v2544, %v2561
        %v2568 = vadd.f32 %v2545, %v2561
        %v2569 = vadd.f32 %v2546, %v2561
        %v2570 = vadd.f32 %v2547, %v2561
        %v2571 = vadd.f32 %v2548, %v2561
        %v2572 = vadd.f32 %v2549, %v2561
        %v2573 = vadd.f32 %v2550, %v2561
        %v2574 = vadd.f32 %v2551, %v2561
        %v2575 = vadd.f32 %v2552, %v2561
        %v2576 = vadd.f32 %v2553, %v2561
        %v2577 = vadd.f32 %v2554, %v2561
        %v2578 = vadd.f32 %v2555, %v2561
        %v2579 = vmax.f32 %v2563, 0.0
        %v2580 = vmax.f32 %v2564, 0.0
        %v2581 = vmax.f32 %v2565, 0.0
        %v2582 = vmax.f32 %v2566, 0.0
        %v2583 = vmax.f32 %v2567, 0.0
        %v2584 = vmax.f32 %v2568, 0.0
        %v2585 = vmax.f32 %v2569, 0.0
        %v2586 = vmax.f32 %v2570, 0.0
        %v2587 = vmax.f32 %v2571, 0.0
        %v2588 = vmax.f32 %v2572, 0.0
        %v2589 = vmax.f32 %v2573, 0.0
        %v2590 = vmax.f32 %v2574, 0.0
        %v2591 = vmax.f32 %v2575, 0.0
        %v2592 = vmax.f32 %v2576, 0.0
        %v2593 = vmax.f32 %v2577, 0.0
        %v2594 = vmax.f32 %v2578, 0.0
        %v2595 = vld [vmem:[%s3] sm:$0xf]
        %v2597 = vsel %vm779, %v2579, 0
        %v2600 = vsel %vm779, %v2580, 0
        %v2603 = vsel %vm779, %v2581, 0
        %v2606 = vsel %vm779, %v2582, 0
        %v2609 = vsel %vm779, %v2583, 0
        %v2612 = vsel %vm779, %v2584, 0
        %v2615 = vsel %vm779, %v2585, 0
        %v2618 = vsel %vm779, %v2586, 0
        %v2621 = vsel %vm779, %v2587, 0
        %v2624 = vsel %vm779, %v2588, 0
        %v2627 = vsel %vm779, %v2589, 0
        %v2630 = vsel %vm779, %v2590, 0
        %v2633 = vsel %vm779, %v2591, 0
        %v2636 = vsel %vm779, %v2592, 0
        %v2639 = vsel %vm779, %v2593, 0
        %v2642 = vsel %vm779, %v2594, 0
        %v2645 = vsel %vm902, %v2595, 0
        %2647 = vmatprep.subr.mxu0 0.0
        %2648 = vmatpush1.msra.mxu0 %v2645
        %2649 = vmatprep.subr.mxu0 0.0
        %2650 = vmatpush1.msra.mxu0 0.0
        %2651 = vmatprep.subr.mxu0 0.0
        %2652 = vmatpush1.msra.mxu0 0.0
        %2653 = vmatprep.subr.mxu0 0.0
        %2654 = vmatpush1.msra.mxu0 0.0
        %2655 = vmatprep.subr.mxu0 0.0
        %2656 = vmatpush1.msra.mxu0 0.0
        %2657 = vmatprep.subr.mxu0 0.0
        %2658 = vmatpush1.msra.mxu0 0.0
        %2659 = vmatprep.subr.mxu0 0.0
        %2660 = vmatpush1.msra.mxu0 0.0
        %2661 = vmatprep.subr.mxu0 0.0
        %2662 = vmatpush1.msra.mxu0 0.0
        %2663 = vmatprep.subr.mxu0 0.0
        %2664 = vmatpush1.msra.mxu0 0.0
        %2665 = vmatprep.subr.mxu0 0.0
        %2666 = vmatpush1.msra.mxu0 0.0
        %2667 = vmatprep.subr.mxu0 0.0
        %2668 = vmatpush1.msra.mxu0 0.0
        %2669 = vmatprep.subr.mxu0 0.0
        %2670 = vmatpush1.msra.mxu0 0.0
        %2671 = vmatprep.subr.mxu0 0.0
        %2672 = vmatpush1.msra.mxu0 0.0
        %2673 = vmatprep.subr.mxu0 0.0
        %2674 = vmatpush1.msra.mxu0 0.0
        %2675 = vmatprep.subr.mxu0 0.0
        %2676 = vmatpush1.msra.mxu0 0.0
        %2677 = vmatprep.subr.mxu0 0.0
        %2678 = vmatpush1.msra.mxu0 0.0
        %2679 = vmatprep.subr.mxu0 0.0
        %2680 = vmatpush1.msra.mxu0 0.0
        %2681 = vmatprep.subr.mxu0 0.0
        %2682 = vmatpush1.msra.mxu0 0.0
        %2683 = vmatprep.subr.mxu0 0.0
        %2684 = vmatpush1.msra.mxu0 0.0
        %2685 = vmatprep.subr.mxu0 0.0
        %2686 = vmatpush1.msra.mxu0 0.0
        %2687 = vmatprep.subr.mxu0 0.0
        %2688 = vmatpush1.msra.mxu0 0.0
        %2689 = vmatprep.subr.mxu0 0.0
        %2690 = vmatpush1.msra.mxu0 0.0
        %2691 = vmatprep.subr.mxu0 0.0
        %2692 = vmatpush1.msra.mxu0 0.0
        %2693 = vmatprep.subr.mxu0 0.0
        %2694 = vmatpush1.msra.mxu0 0.0
        %2695 = vmatprep.subr.mxu0 0.0
        %2696 = vmatpush1.msra.mxu0 0.0
        %2697 = vmatprep.subr.mxu0 0.0
        %2698 = vmatpush1.msra.mxu0 0.0
        %2699 = vmatprep.subr.mxu0 0.0
        %2700 = vmatpush1.msra.mxu0 0.0
        %2701 = vmatprep.subr.mxu0 0.0
        %2702 = vmatpush1.msra.mxu0 0.0
        %2703 = vmatprep.subr.mxu0 0.0
        %2704 = vmatpush1.msra.mxu0 0.0
        %2705 = vmatprep.subr.mxu0 0.0
        %2706 = vmatpush1.msra.mxu0 0.0
        %2707 = vmatprep.subr.mxu0 0.0
        %2708 = vmatpush1.msra.mxu0 0.0
        %2709 = vmatprep.subr.mxu0 0.0
        %2710 = vmatpush1.msra.mxu0 0.0
        %2711 = vmatprep.mubr.f32.mxu0 0.0
        %2712 = vmatmul.mubr.f32.gmra.mrb[0].mxu0 %v2597
        %v2713 = vpop.f32.mrb[0].mxu0
        %v2714 = vadd.f32 0.0, %v2713
        %v2715 = vpop.f32.mrb[0].mxu0
        %2716 = vmatprep.mubr.f32.mxu0 0.0
        %2717 = vmatmul.mubr.f32.gmra.mrb[0].mxu0 %v2600
        %v2718 = vpop.f32.mrb[0].mxu0
        %v2719 = vadd.f32 0.0, %v2718
        %v2720 = vpop.f32.mrb[0].mxu0
        %2721 = vmatprep.mubr.f32.mxu0 0.0
        %2722 = vmatmul.mubr.f32.gmra.mrb[0].mxu0 %v2603
        %v2723 = vpop.f32.mrb[0].mxu0
        %v2724 = vadd.f32 0.0, %v2723
        %v2725 = vpop.f32.mrb[0].mxu0
        %2726 = vmatprep.mubr.f32.mxu0 0.0
        %2727 = vmatmul.mubr.f32.gmra.mrb[0].mxu0 %v2606
        %v2728 = vpop.f32.mrb[0].mxu0
        %v2729 = vadd.f32 0.0, %v2728
        %v2730 = vpop.f32.mrb[0].mxu0
        %2731 = vmatprep.mubr.f32.mxu0 0.0
        %2732 = vmatmul.mubr.f32.gmra.mrb[0].mxu0 %v2609
        %v2733 = vpop.f32.mrb[0].mxu0
        %v2734 = vadd.f32 0.0, %v2733
        %v2735 = vpop.f32.mrb[0].mxu0
        %2736 = vmatprep.mubr.f32.mxu0 0.0
        %2737 = vmatmul.mubr.f32.gmra.mrb[0].mxu0 %v2612
        %v2738 = vpop.f32.mrb[0].mxu0
        %v2739 = vadd.f32 0.0, %v2738
        %v2740 = vpop.f32.mrb[0].mxu0
        %2741 = vmatprep.mubr.f32.mxu0 0.0
        %2742 = vmatmul.mubr.f32.gmra.mrb[0].mxu0 %v2615
        %v2743 = vpop.f32.mrb[0].mxu0
        %v2744 = vadd.f32 0.0, %v2743
        %v2745 = vpop.f32.mrb[0].mxu0
        %2746 = vmatprep.mubr.f32.mxu0 0.0
        %2747 = vmatmul.mubr.f32.gmra.mrb[0].mxu0 %v2618
        %v2748 = vpop.f32.mrb[0].mxu0
        %v2749 = vadd.f32 0.0, %v2748
        %v2750 = vpop.f32.mrb[0].mxu0
        %2751 = vmatprep.mubr.f32.mxu0 0.0
        %2752 = vmatmul.mubr.f32.gmra.mrb[0].mxu0 %v2621
        %v2753 = vpop.f32.mrb[0].mxu0
        %v2754 = vadd.f32 0.0, %v2753
        %v2755 = vpop.f32.mrb[0].mxu0
        %2756 = vmatprep.mubr.f32.mxu0 0.0
        %2757 = vmatmul.mubr.f32.gmra.mrb[0].mxu0 %v2624
        %v2758 = vpop.f32.mrb[0].mxu0
        %v2759 = vadd.f32 0.0, %v2758
        %v2760 = vpop.f32.mrb[0].mxu0
        %2761 = vmatprep.mubr.f32.mxu0 0.0
        %2762 = vmatmul.mubr.f32.gmra.mrb[0].mxu0 %v2627
        %v2763 = vpop.f32.mrb[0].mxu0
        %v2764 = vadd.f32 0.0, %v2763
        %v2765 = vpop.f32.mrb[0].mxu0
        %2766 = vmatprep.mubr.f32.mxu0 0.0
        %2767 = vmatmul.mubr.f32.gmra.mrb[0].mxu0 %v2630
        %v2768 = vpop.f32.mrb[0].mxu0
        %v2769 = vadd.f32 0.0, %v2768
        %v2770 = vpop.f32.mrb[0].mxu0
        %2771 = vmatprep.mubr.f32.mxu0 0.0
        %2772 = vmatmul.mubr.f32.gmra.mrb[0].mxu0 %v2633
        %v2773 = vpop.f32.mrb[0].mxu0
        %v2774 = vadd.f32 0.0, %v2773
        %v2775 = vpop.f32.mrb[0].mxu0
        %2776 = vmatprep.mubr.f32.mxu0 0.0
        %2777 = vmatmul.mubr.f32.gmra.mrb[0].mxu0 %v2636
        %v2778 = vpop.f32.mrb[0].mxu0
        %v2779 = vadd.f32 0.0, %v2778
        %v2780 = vpop.f32.mrb[0].mxu0
        %2781 = vmatprep.mubr.f32.mxu0 0.0
        %2782 = vmatmul.mubr.f32.gmra.mrb[0].mxu0 %v2639
        %v2783 = vpop.f32.mrb[0].mxu0
        %v2784 = vadd.f32 0.0, %v2783
        %v2785 = vpop.f32.mrb[0].mxu0
        %2786 = vmatprep.mubr.f32.mxu0 0.0
        %2787 = vmatmul.mubr.f32.gmra.mrb[0].mxu0 %v2642
        %v2788 = vpop.f32.mrb[0].mxu0
        %v2789 = vadd.f32 0.0, %v2788
        %v2790 = vpop.f32.mrb[0].mxu0
        %2791 = vdwg.mxu0
        %s2792 = sadd.s32 %s373, 1
        %s2793 = smul.u32 %s2792, 16
        %s2794 = scalar_lea.vmem %s371, %s2793
        %v2795 = vld [vmem:[%s2794] sm:$0xff]
        %v2796 = vld [vmem:[%s2794 + $0x8] sm:$0xff]
        %v2797 = vld [vmem:[%s2794 + $0x10] sm:$0xff]
        %v2798 = vld [vmem:[%s2794 + $0x18] sm:$0xff]
        %v2799 = vld [vmem:[%s2794 + $0x20] sm:$0xff]
        %v2800 = vld [vmem:[%s2794 + $0x28] sm:$0xff]
        %v2801 = vld [vmem:[%s2794 + $0x30] sm:$0xff]
        %v2802 = vld [vmem:[%s2794 + $0x38] sm:$0xff]
        %v2803 = vld [vmem:[%s2794 + $0x40] sm:$0xff]
        %v2804 = vld [vmem:[%s2794 + $0x48] sm:$0xff]
        %v2805 = vld [vmem:[%s2794 + $0x50] sm:$0xff]
        %v2806 = vld [vmem:[%s2794 + $0x58] sm:$0xff]
        %v2807 = vld [vmem:[%s2794 + $0x60] sm:$0xff]
        %v2808 = vld [vmem:[%s2794 + $0x68] sm:$0xff]
        %v2809 = vld [vmem:[%s2794 + $0x70] sm:$0xff]
        %v2810 = vld [vmem:[%s2794 + $0x78] sm:$0xff]
        %v2811 = vld [vmem:[%s8] sm:$0x1]
        %v2813 = vlaneseq
        %v2814 = vshrl.u32 %v2813, 7
        %v2815 = vsub.s32 0, %v2814
        %v2816 = vrot.slane %v2811, %v2815
        %v2818 = vmul.f32 %v2714, %v2816
        %v2819 = vmul.f32 %v2719, %v2816
        %v2820 = vmul.f32 %v2724, %v2816
        %v2821 = vmul.f32 %v2729, %v2816
        %v2822 = vmul.f32 %v2734, %v2816
        %v2823 = vmul.f32 %v2739, %v2816
        %v2824 = vmul.f32 %v2744, %v2816
        %v2825 = vmul.f32 %v2749, %v2816
        %v2826 = vmul.f32 %v2754, %v2816
        %v2827 = vmul.f32 %v2759, %v2816
        %v2828 = vmul.f32 %v2764, %v2816
        %v2829 = vmul.f32 %v2769, %v2816
        %v2830 = vmul.f32 %v2774, %v2816
        %v2831 = vmul.f32 %v2779, %v2816
        %v2832 = vmul.f32 %v2784, %v2816
        %v2833 = vmul.f32 %v2789, %v2816
        %v2834 = vld [vmem:[%s9] sm:$0x1]
        %v2836 = vlaneseq
        %v2837 = vshrl.u32 %v2836, 7
        %v2838 = vsub.s32 0, %v2837
        %v2839 = vrot.slane %v2834, %v2838
        %v2841 = vadd.f32 %v2818, %v2839
        %v2842 = vadd.f32 %v2819, %v2839
        %v2843 = vadd.f32 %v2820, %v2839
        %v2844 = vadd.f32 %v2821, %v2839
        %v2845 = vadd.f32 %v2822, %v2839
        %v2846 = vadd.f32 %v2823, %v2839
        %v2847 = vadd.f32 %v2824, %v2839
        %v2848 = vadd.f32 %v2825, %v2839
        %v2849 = vadd.f32 %v2826, %v2839
        %v2850 = vadd.f32 %v2827, %v2839
        %v2851 = vadd.f32 %v2828, %v2839
        %v2852 = vadd.f32 %v2829, %v2839
        %v2853 = vadd.f32 %v2830, %v2839
        %v2854 = vadd.f32 %v2831, %v2839
        %v2855 = vadd.f32 %v2832, %v2839
        %v2856 = vadd.f32 %v2833, %v2839
        %v2857 = vadd.f32 %v2841, %v2795
        %v2858 = vadd.f32 %v2842, %v2796
        %v2859 = vadd.f32 %v2843, %v2797
        %v2860 = vadd.f32 %v2844, %v2798
        %v2861 = vadd.f32 %v2845, %v2799
        %v2862 = vadd.f32 %v2846, %v2800
        %v2863 = vadd.f32 %v2847, %v2801
        %v2864 = vadd.f32 %v2848, %v2802
        %v2865 = vadd.f32 %v2849, %v2803
        %v2866 = vadd.f32 %v2850, %v2804
        %v2867 = vadd.f32 %v2851, %v2805
        %v2868 = vadd.f32 %v2852, %v2806
        %v2869 = vadd.f32 %v2853, %v2807
        %v2870 = vadd.f32 %v2854, %v2808
        %v2871 = vadd.f32 %v2855, %v2809
        %v2872 = vadd.f32 %v2856, %v2810
        %v2873 = vmax.f32 %v2857, 0.0
        %v2874 = vmax.f32 %v2858, 0.0
        %v2875 = vmax.f32 %v2859, 0.0
        %v2876 = vmax.f32 %v2860, 0.0
        %v2877 = vmax.f32 %v2861, 0.0
        %v2878 = vmax.f32 %v2862, 0.0
        %v2879 = vmax.f32 %v2863, 0.0
        %v2880 = vmax.f32 %v2864, 0.0
        %v2881 = vmax.f32 %v2865, 0.0
        %v2882 = vmax.f32 %v2866, 0.0
        %v2883 = vmax.f32 %v2867, 0.0
        %v2884 = vmax.f32 %v2868, 0.0
        %v2885 = vmax.f32 %v2869, 0.0
        %v2886 = vmax.f32 %v2870, 0.0
        %v2887 = vmax.f32 %v2871, 0.0
        %v2888 = vmax.f32 %v2872, 0.0
        %2889 = vst.msk [vmem:[%s366] sm:$0xff] %vm398, %v2873
        %2890 = vst.msk [vmem:[%s366 + $0x8] sm:$0xff] %vm398, %v2874
        %2891 = vst.msk [vmem:[%s366 + $0x10] sm:$0xff] %vm398, %v2875
        %2892 = vst.msk [vmem:[%s366 + $0x18] sm:$0xff] %vm398, %v2876
        %2893 = vst.msk [vmem:[%s366 + $0x20] sm:$0xff] %vm398, %v2877
        %2894 = vst.msk [vmem:[%s366 + $0x28] sm:$0xff] %vm398, %v2878
        %2895 = vst.msk [vmem:[%s366 + $0x30] sm:$0xff] %vm398, %v2879
        %2896 = vst.msk [vmem:[%s366 + $0x38] sm:$0xff] %vm398, %v2880
        %2897 = vst.msk [vmem:[%s366 + $0x40] sm:$0xff] %vm398, %v2881
        %2898 = vst.msk [vmem:[%s366 + $0x48] sm:$0xff] %vm398, %v2882
        %2899 = vst.msk [vmem:[%s366 + $0x50] sm:$0xff] %vm398, %v2883
        %2900 = vst.msk [vmem:[%s366 + $0x58] sm:$0xff] %vm398, %v2884
        %2901 = vst.msk [vmem:[%s366 + $0x60] sm:$0xff] %vm398, %v2885
        %2902 = vst.msk [vmem:[%s366 + $0x68] sm:$0xff] %vm398, %v2886
        %2903 = vst.msk [vmem:[%s366 + $0x70] sm:$0xff] %vm398, %v2887
        %2904 = vst.msk [vmem:[%s366 + $0x78] sm:$0xff] %vm398, %v2888
        %s2905 = sand.u32 %s261, 1
        %s2906 = scalar_lea.sflag [#allocation4], %s2905
        %s2907 = sand.u32 %s261, 1
        %s2908 = smul.addr %s2907, 128
        %s2909 = scalar_lea.vmem [#allocation3], %s2908
        // Predicated region
        $region61: #{tpu_custom_call.1} parent=59 // pred_check
          %p2910 = pneg %p271
        $region62: #{tpu_custom_call.1} parent=59 // pred_check_branch
          %2912 = sbr.rel (%p2910) target = $region64
        $region63: #{tpu_custom_call.1} parent=59 // pred_region
          %s2913 = smul.u32 8, %s29
          %s2915 = ssub.s32 2048, 2048
          %2916 = vsyncadd %s2906, %s2915
          %s2917 = smul.addr %s2913, 2
          %s2918 = smul.addr %s28, 32
          %s2919 = sadd.s32 %s2917, %s2918
          %s2920 = smul.addr %s2919, 128
          %s2921 = scalar_lea.hbm %s10, %s2920
          %s2922 = sshll.u32 %s2909, 4
          %s2923 = int_to_ptr.vmem [resolvable:$true] %s2922
          %2928 = dma.vmem_to_hbm [thread:$0]  %s2923, 2048, %s2921, %s2906, 128, 128, 8
        $region64: #{tpu_custom_call.1} parent=59 // pred_fallthru
          _
      $region60: #{tpu_custom_call.1} parent=5 // pred_fallthru
        _
      %p2929 = scmp.le.s32.totalorder 2, %s19
      // Predicated region
      $region65: #{tpu_custom_call.1} parent=5 // pred_check
        %p2930 = pneg %p2929
      $region66: #{tpu_custom_call.1} parent=5 // pred_check_branch
        %2932 = sbr.rel (%p2930) target = $region68
      $region67: #{tpu_custom_call.1} parent=5 // pred_region
        %s2933 = ssub.s32 %s19, 2
        // Predicated region
        $region69: #{tpu_custom_call.1} parent=67 // pred_check
          %p2934 = pneg %p277
        $region70: #{tpu_custom_call.1} parent=67 // pred_check_branch
          %2936 = sbr.rel (%p2934) target = $region72
        $region71: #{tpu_custom_call.1} parent=67 // pred_region
          %s2937 = sand.u32 %s262, 1
          %s2938 = scalar_lea.sflag [#allocation4], %s2937
          %s2939 = sand.u32 %s262, 1
          %s2940 = smul.addr %s2939, 128
          %s2941 = scalar_lea.vmem [#allocation3], %s2940
          %2942 = dma.done %s2938, 2048
        $region72: #{tpu_custom_call.1} parent=67 // pred_fallthru
          _
      $region68: #{tpu_custom_call.1} parent=5 // pred_fallthru
        _
    $region6: #{tpu_custom_call.1} parent=1 // loop_footer
      %s23 = sadd.s32 1, %s19
    $region7: #{tpu_custom_call.1} parent=1 // loop_footer_branch
      %18 = sbr.rel target = $region3
    $region8: #{tpu_custom_call.1} parent=1 // loop_exit
      _
    %2943 = vsyncpa [#allocation4], 1
    %s2944 = scalar_lea.sflag [#allocation4], 1
    %2945 = vsyncpa %s2944, 1

</llo_original>
